<compile_context>
chip_gen: v5e
topology: v5e:2x2
jax: 0.10.0
libtpu: 0.0.40
codegen_flags: <defaults>
</compile_context>

<pallas_src>
import functools

import numpy as np
import jax
import jax.numpy as jnp
from jax.experimental import pallas as pl
from jax.experimental.pallas import tpu as pltpu


# storage dtype for activations and GEMM weights (LN params / biases stay f32)
ACT_DTYPE = jnp.bfloat16


# --------------------------------------------------------------------------
# TPU-size helpers (safe fallbacks if the query is unavailable)
# --------------------------------------------------------------------------
def _tpu_vmem_capacity():
    try:
        return int(pltpu.get_tpu_info().vmem_capacity_bytes)
    except Exception:
        return 64 * 1024 * 1024


def _vmem_limit_bytes():
    cap = _tpu_vmem_capacity()
    # 64 MiB scoped limit on 128-MiB parts (v5e/v6e), 32 MiB on v7x.
    return min(64 * 1024 * 1024, max(cap // 2, 16 * 1024 * 1024))


def _target_rows():
    # bigger tiles on 128-MiB-VMEM parts, moderate on v7x (64 MiB).
    return 2048 if _tpu_vmem_capacity() >= 100 * 1024 * 1024 else 1024


# --------------------------------------------------------------------------
# in-kernel helpers
# --------------------------------------------------------------------------
def _layernorm(x, gamma, beta, eps=1e-5):
    mu = jnp.mean(x, axis=-1, keepdims=True)
    xc = x - mu
    var = jnp.mean(xc * xc, axis=-1, keepdims=True)
    return xc * jax.lax.rsqrt(var + eps) * gamma + beta


# --------------------------------------------------------------------------
# Pallas kernel: one full SwinTransformerBlock on a tile of wb windows.
#   LN1 -> qkv -> windowed MHSA (+rel-pos bias, +shift mask) -> proj -> +res
#   LN2 -> MLP (Linear, GELU, Linear) -> +res
# x block is token-major (wb*M, C); bias is (nh, M, M); mask (*, M, M).
# --------------------------------------------------------------------------
def swin_block_kernel(x_ref, bias_ref,
                      g1_ref, b1_ref, wqkv_ref, bqkv_ref,
                      wproj_ref, bproj_ref,
                      g2_ref, b2_ref, w1_ref, bb1_ref, w2_ref, bb2_ref,
                      *rest, num_heads, M, C, mask_rep):
    if mask_rep == 0:                       # non-shifted block: no mask input
        (o_ref,) = rest
        mask = None
    else:
        mask_ref, o_ref = rest
        mask = mask_ref[...].astype(jnp.float32)       # (wb or nW, M, M)

    rows = x_ref.shape[0]                   # wb * M (static)
    wb = rows // M
    hd = C // num_heads
    scale = float(hd) ** -0.5
    mm_dt = wqkv_ref.dtype                  # matmul-operand dtype (bf16)

    x2 = x_ref[...].astype(jnp.float32)     # (wb*M, C) token-major, f32 residual

    # --- LayerNorm 1 ---
    y = _layernorm(x2, g1_ref[...], b1_ref[...])

    # --- qkv projection: one (wb*M, C) x (C, 3C) GEMM, f32 accumulation ---
    qkv = jnp.dot(y.astype(mm_dt), wqkv_ref[...],
                  preferred_element_type=jnp.float32) + bqkv_ref[...]
    qkv = qkv.reshape(wb, M, 3 * C)         # leading split only (free)

    bias = bias_ref[...].astype(jnp.float32)            # (nh, M, M)

    # --- attention: heads are contiguous lane slices (channel order (T,h,d));
    #     each head runs as ONE window-batched einsum -- no transposes at all.
    heads_out = []
    for h in range(num_heads):
        qh = qkv[:, :, 0 * C + h * hd:0 * C + (h + 1) * hd] * scale
        kh = qkv[:, :, 1 * C + h * hd:1 * C + (h + 1) * hd]
        vh = qkv[:, :, 2 * C + h * hd:2 * C + (h + 1) * hd]

        s = jnp.einsum('bqd,bkd->bqk', qh.astype(mm_dt), kh.astype(mm_dt),
                       preferred_element_type=jnp.float32)    # (wb, M, M)
        s = s + bias[h][None]                                 # rel-pos bias
        if mask is not None:
            if mask_rep == 1:             # block lies inside one image
                s = s + mask
            else:                         # block covers mask_rep full images
                s = (s.reshape(mask_rep, -1, M, M) + mask[None]
                     ).reshape(wb, M, M)  # broadcasting add, no tile

        # softmax: explicit max/exp/sum, reciprocal on the EUP
        smax = jnp.max(s, axis=-1, keepdims=True)
        e = jnp.exp(s - smax)
        den = jnp.sum(e, axis=-1, keepdims=True)
        p = e * pl.reciprocal(den, approx=True)

        oh = jnp.einsum('bqk,bkd->bqd', p.astype(mm_dt), vh.astype(mm_dt),
                        preferred_element_type=jnp.float32)   # (wb, M, hd)
        heads_out.append(oh)

    attn = heads_out[0] if num_heads == 1 else jnp.concatenate(heads_out, -1)
    attn = attn.reshape(wb * M, C)          # leading merge only (free)

    # --- output projection + residual ---
    z = jnp.dot(attn.astype(mm_dt), wproj_ref[...],
                preferred_element_type=jnp.float32) + bproj_ref[...]
    x1 = x2 + z

    # --- LayerNorm 2 + MLP + residual ---
    y2 = _layernorm(x1, g2_ref[...], b2_ref[...])
    h1 = jnp.dot(y2.astype(mm_dt), w1_ref[...],
                 preferred_element_type=jnp.float32) + bb1_ref[...]
    # tanh GELU runs on the EUP (nn.GELU default is exact erf; tiny divergence)
    h1 = jax.nn.gelu(h1, approximate=True)
    mo = jnp.dot(h1.astype(mm_dt), w2_ref[...],
                 preferred_element_type=jnp.float32) + bb2_ref[...]

    o_ref[...] = (x1 + mo).astype(o_ref.dtype)


def _choose_wb(Bn, nW, M, target_rows, min_grid=2):
    """Windows-per-block: a divisor of nW or a multiple of nW dividing Bn.
    Rows per block (wb*M) must satisfy the sublane rule; prefer the biggest
    tile with wb*M <= target_rows while keeping >= min_grid grid steps
    (v7x dual TensorCore / pipelining) whenever Bn allows it."""
    B = Bn // nW
    cands = sorted({d for d in range(1, nW + 1) if nW % d == 0}
                   | {nW * d for d in range(1, B + 1) if B % d == 0})
    cands = [c for c in cands if (c * M) % 8 == 0 or c == Bn]
    fit = [c for c in cands if c * M <= target_rows] or [min(cands)]
    good = [c for c in fit if Bn // c >= min_grid]
    return max(good) if good else max(fit)


def run_swin_windows(xw, rel_bias, p, *, num_heads, M, C, mask=None, nW=None):
    """xw: (Bn*M, C) token-major windows (window-major row order).
    rel_bias: (nh, M, M).  mask: (nW, M, M) for shifted blocks, else None."""
    rows = xw.shape[0]
    Bn = rows // M
    hidden = p['w1'].shape[1]
    wb = _choose_wb(Bn, nW, M, target_rows=_target_rows())
    assert Bn % wb == 0

    row = lambda i: (i, 0)
    full2 = lambda i: (0, 0)
    full3 = lambda i: (0, 0, 0)

    in_specs = [
        pl.BlockSpec((wb * M, C), row),              # x (token-major)
        pl.BlockSpec((num_heads, M, M), full3),      # relative position bias
        pl.BlockSpec((1, C), full2),                 # LN1 gamma
        pl.BlockSpec((1, C), full2),                 # LN1 beta
        pl.BlockSpec((C, 3 * C), full2),             # W_qkv
        pl.BlockSpec((1, 3 * C), full2),             # b_qkv
        pl.BlockSpec((C, C), full2),                 # W_proj
        pl.BlockSpec((1, C), full2),                 # b_proj
        pl.BlockSpec((1, C), full2),                 # LN2 gamma
        pl.BlockSpec((1, C), full2),                 # LN2 beta
        pl.BlockSpec((C, hidden), full2),            # MLP W1
        pl.BlockSpec((1, hidden), full2),            # MLP b1
        pl.BlockSpec((hidden, C), full2),            # MLP W2
        pl.BlockSpec((1, C), full2),                 # MLP b2
    ]
    args = [xw, rel_bias,
            p['g1'], p['b1'], p['wqkv'], p['bqkv'], p['wproj'], p['bproj'],
            p['g2'], p['b2'], p['w1'], p['bb1'], p['w2'], p['bb2']]

    if mask is None:
        mask_rep = 0
    elif wb <= nW:                 # each block maps to one contiguous mask slice
        nb = nW // wb
        in_specs.append(pl.BlockSpec((wb, M, M),
                                     lambda i, nb=nb: (i % nb, 0, 0)))
        args.append(mask)
        mask_rep = 1
    else:                          # block covers wb//nW full images
        in_specs.append(pl.BlockSpec((nW, M, M), full3))
        args.append(mask)
        mask_rep = wb // nW

    kernel = functools.partial(swin_block_kernel, num_heads=num_heads,
                               M=M, C=C, mask_rep=mask_rep)
    return pl.pallas_call(
        kernel,
        out_shape=jax.ShapeDtypeStruct((rows, C), xw.dtype),
        grid_spec=pltpu.PrefetchScalarGridSpec(
            num_scalar_prefetch=0,
            grid=(Bn // wb,),
            in_specs=in_specs,
            out_specs=pl.BlockSpec((wb * M, C), row),
        ),
        compiler_params=pltpu.CompilerParams(
            dimension_semantics=("parallel",),
            vmem_limit_bytes=_vmem_limit_bytes()),
    )(*args)


# --------------------------------------------------------------------------
# Pallas kernel: PatchExpanding  (bias-free Linear dim -> 2*dim, then
# LayerNorm(dim//2) on each of the 4 (P1,P2) channel chunks; the spatial
# rearrange is glue outside and commutes with the LN).
# --------------------------------------------------------------------------
def patch_expand_kernel(x_ref, we_ref, g_ref, b_ref, o_ref, *, out_chunk):
    x = x_ref[...]
    y = jnp.dot(x.astype(we_ref.dtype), we_ref[...],
                preferred_element_type=jnp.float32)     # (tn, 2*dim) f32
    C = out_chunk
    g = g_ref[...]
    b = b_ref[...]
    for j in range(4):                                  # per (P1,P2) chunk LN
        c = y[:, j * C:(j + 1) * C]
        mu = jnp.mean(c, axis=-1, keepdims=True)
        cc = c - mu
        var = jnp.mean(cc * cc, axis=-1, keepdims=True)
        o_ref[:, j * C:(j + 1) * C] = (
            cc * jax.lax.rsqrt(var + 1e-5) * g + b).astype(o_ref.dtype)


def run_patch_expand(xt, p):
    N, dim = xt.shape
    C = dim // 2
    # row tile: multiple of 8, aim for >=2 grid steps, capped by VMEM budget
    tn = min(_target_rows(), -(-N // 2))
    tn = max(8, -(-tn // 8) * 8)
    Np = -(-N // tn) * tn
    if Np != N:                              # pad rows instead of blowing VMEM
        xt = jnp.pad(xt, ((0, Np - N), (0, 0)))
    kernel = functools.partial(patch_expand_kernel, out_chunk=C)
    out = pl.pallas_call(
        kernel,
        out_shape=jax.ShapeDtypeStruct((Np, 2 * dim), xt.dtype),
        grid_spec=pltpu.PrefetchScalarGridSpec(
            num_scalar_prefetch=0,
            grid=(Np // tn,),
            in_specs=[
                pl.BlockSpec((tn, dim), lambda i: (i, 0)),
                pl.BlockSpec((dim, 2 * dim), lambda i: (0, 0)),
                pl.BlockSpec((1, C), lambda i: (0, 0)),
                pl.BlockSpec((1, C), lambda i: (0, 0)),
            ],
            out_specs=pl.BlockSpec((tn, 2 * dim), lambda i: (i, 0)),
        ),
        compiler_params=pltpu.CompilerParams(
            dimension_semantics=("parallel",),
            vmem_limit_bytes=_vmem_limit_bytes()),
    )(xt, p['we'], p['g'], p['b'])
    return out[:N] if Np != N else out


# --------------------------------------------------------------------------
# JAX glue: window (un)partition, cached shift mask / relative position index
# --------------------------------------------------------------------------
def window_partition(x, ws):
    B, H, W, C = x.shape
    x = x.reshape(B, H // ws, ws, W // ws, ws, C)
    x = x.transpose(0, 1, 3, 2, 4, 5)
    return x.reshape(B * (H // ws) * (W // ws), ws * ws, C)


def window_unpartition(xw, ws, B, H, W):
    C = xw.shape[-1]
    x = xw.reshape(B, H // ws, W // ws, ws, ws, C)
    x = x.transpose(0, 1, 3, 2, 4, 5)
    return x.reshape(B, H, W, C)


@functools.lru_cache(maxsize=None)
def make_shift_mask(H, W, ws, ss):
    img_mask = np.zeros((H, W), np.float32)
    slices = (slice(0, -ws), slice(-ws, -ss), slice(-ss, None))
    cnt = 0
    for h in slices:
        for w in slices:
            img_mask[h, w] = cnt
            cnt += 1
    mw = img_mask.reshape(H // ws, ws, W // ws, ws).transpose(0, 2, 1, 3)
    mw = mw.reshape(-1, ws * ws)
    am = mw[:, None, :] - mw[:, :, None]
    return np.where(am != 0, -100.0, 0.0).astype(np.float32)   # (nW, M, M)


@functools.lru_cache(maxsize=None)
def relative_position_index(ws):
    coords = np.stack(np.meshgrid(np.arange(ws), np.arange(ws), indexing='ij'))
    cf = coords.reshape(2, -1)
    rel = cf[:, :, None] - cf[:, None, :]
    rel = rel.transpose(1, 2, 0).astype(np.int32)
    rel[..., 0] += ws - 1
    rel[..., 1] += ws - 1
    rel[..., 0] *= 2 * ws - 1
    return rel.sum(-1).reshape(-1)                              # (M*M,)


def swin_block_forward(x, p, ws, num_heads, shift):
    B, H, W, C = x.shape
    pad_h = (ws - H % ws) % ws
    pad_w = (ws - W % ws) % ws
    padded = pad_h > 0 or pad_w > 0
    if padded:   # matches F.pad(..., (0,0, padw,0, padh,0)): pad top/left
        x = jnp.pad(x, ((0, 0), (pad_h, 0), (pad_w, 0), (0, 0)))
    _, Hp, Wp, _ = x.shape
    M = ws * ws
    nW = (Hp // ws) * (Wp // ws)

    ss = ws // 2 if shift else 0
    if ss > 0:
        x_in = jnp.roll(x, (-ss, -ss), axis=(1, 2))
        mask = jnp.asarray(make_shift_mask(Hp, Wp, ws, ss))      # (nW, M, M)
    else:
        x_in = x
        mask = None

    rpi = relative_position_index(ws)
    rel_bias = p['rpb_table'][rpi].reshape(M, M, num_heads)
    rel_bias = jnp.transpose(rel_bias, (2, 0, 1)).astype(jnp.float32)  # (nh,M,M)

    xw = window_partition(x_in, ws).reshape(B * nW * M, C)       # token-major
    ow = run_swin_windows(xw, rel_bias, p, num_heads=num_heads,
                          M=M, C=C, mask=mask, nW=nW)
    xo = window_unpartition(ow.reshape(B * nW, M, C), ws, B, Hp, Wp)

    if ss > 0:
        xo = jnp.roll(xo, (ss, ss), axis=(1, 2))
    if padded:
        xo = xo[:, -H:, -W:, :]
    return xo


@functools.partial(jax.jit, static_argnames=("window_size", "num_heads", "shifts"))
def basic_block_up_forward(x, block_params, upsample_params, *,
                           window_size, num_heads, shifts):
    x = x.astype(ACT_DTYPE)
    for p, shift in zip(block_params, shifts):
        x = swin_block_forward(x, p, window_size, num_heads, shift)
    # PatchExpanding: Linear + per-chunk LN in Pallas; spatial rearrange as glue.
    B, H, W, C = x.shape
    yt = run_patch_expand(x.reshape(B * H * W, C), upsample_params)
    C2 = C // 2
    y = yt.reshape(B, H, W, 2, 2, C2).transpose(0, 1, 3, 2, 4, 5)
    return y.reshape(B, 2 * H, 2 * W, C2)


# --------------------------------------------------------------------------
# deterministic parameter init (synthetic; shapes follow the module __init__)
# --------------------------------------------------------------------------
def init_params(key, embed_dim, index, depths, num_heads_tuple, window_size,
                mlp_ratio):
    idx = len(depths) - index - 2
    depth = depths[idx]
    dim = embed_dim * 2 ** idx
    nh = num_heads_tuple[idx]
    hidden = int(dim * mlp_ratio)

    def w(k, shape):
        return (0.02 * jax.random.normal(k, shape, jnp.float32)).astype(ACT_DTYPE)

    blocks = []
    shifts = []
    for i in range(depth):
        key, k0, k1, k2, k3, k4 = jax.random.split(key, 6)
        shifts.append(i % 2 == 1)
        blocks.append(dict(
            g1=jnp.ones((1, dim), jnp.float32),
            b1=jnp.zeros((1, dim), jnp.float32),
            wqkv=w(k0, (dim, 3 * dim)),
            bqkv=jnp.zeros((1, 3 * dim), jnp.float32),
            wproj=w(k1, (dim, dim)),
            bproj=jnp.zeros((1, dim), jnp.float32),
            g2=jnp.ones((1, dim), jnp.float32),
            b2=jnp.zeros((1, dim), jnp.float32),
            w1=w(k2, (dim, hidden)),
            bb1=jnp.zeros((1, hidden), jnp.float32),
            w2=w(k3, (hidden, dim)),
            bb2=jnp.zeros((1, dim), jnp.float32),
            rpb_table=0.02 * jax.random.normal(
                k4, ((2 * window_size - 1) ** 2, nh), jnp.float32),
        ))
    key, ku = jax.random.split(key)
    upsample = dict(
        we=w(ku, (dim, 2 * dim)),
        g=jnp.ones((1, dim // 2), jnp.float32),
        b=jnp.zeros((1, dim // 2), jnp.float32),
    )
    return tuple(blocks), upsample, tuple(shifts), dim, nh


if __name__ == "__main__":
    embed_dim = 16
    window_size = 4
    depths = (2, 2, 2, 2)
    num_heads_cfg = (2, 2, 4, 4)
    index = 2          # internal index = len(depths)-index-2 = 0 -> dim=16, heads=2
    B, H, W = 2, 8, 8

    key = jax.random.PRNGKey(0)
    kx, kp = jax.random.split(key)
    blocks, upsample, shifts, dim, nh = init_params(
        kp, embed_dim, index, depths, num_heads_cfg, window_size, mlp_ratio=4.0)
    x = jax.random.normal(kx, (B, H, W, dim), jnp.float32)

    y = basic_block_up_forward(x, blocks, upsample,
                               window_size=window_size, num_heads=nh,
                               shifts=shifts)
    y = jax.block_until_ready(y)
    assert y.shape == (B, 2 * H, 2 * W, dim // 2), y.shape
    assert bool(jnp.all(jnp.isfinite(y.astype(jnp.float32))))
    print("KERNEL_OK")
</pallas_src>

<mosaic_0001>
module attributes {stable_mosaic.version = 11 : i64} {
  func.func @swin_block_kernel(%arg0: i32, %arg1: memref<64x16xbf16, #tpu.memory_space<vmem>>, %arg2: memref<2x16x16xf32, #tpu.memory_space<vmem>>, %arg3: memref<1x16xf32, #tpu.memory_space<vmem>>, %arg4: memref<1x16xf32, #tpu.memory_space<vmem>>, %arg5: memref<16x48xbf16, #tpu.memory_space<vmem>>, %arg6: memref<1x48xf32, #tpu.memory_space<vmem>>, %arg7: memref<16x16xbf16, #tpu.memory_space<vmem>>, %arg8: memref<1x16xf32, #tpu.memory_space<vmem>>, %arg9: memref<1x16xf32, #tpu.memory_space<vmem>>, %arg10: memref<1x16xf32, #tpu.memory_space<vmem>>, %arg11: memref<16x64xbf16, #tpu.memory_space<vmem>>, %arg12: memref<1x64xf32, #tpu.memory_space<vmem>>, %arg13: memref<64x16xbf16, #tpu.memory_space<vmem>>, %arg14: memref<1x16xf32, #tpu.memory_space<vmem>>, %arg15: memref<64x16xbf16, #tpu.memory_space<vmem>>) attributes {dimension_semantics = [#tpu.dimension_semantics<parallel>], iteration_bounds = array<i64: 2>, scalar_prefetch = 0 : i64, scratch_operands = 0 : i64, tpu.core_type = #tpu.core_type<tc>, window_params = [{transform_indices = @transform_0, window_bounds = array<i64: 64, 16>}, {pipeline_mode = #tpu.pipeline_mode<synchronous>, transform_indices = @transform_1, window_bounds = array<i64: 2, 16, 16>}, {pipeline_mode = #tpu.pipeline_mode<synchronous>, transform_indices = @transform_2, window_bounds = array<i64: 1, 16>}, {pipeline_mode = #tpu.pipeline_mode<synchronous>, transform_indices = @transform_3, window_bounds = array<i64: 1, 16>}, {pipeline_mode = #tpu.pipeline_mode<synchronous>, transform_indices = @transform_4, window_bounds = array<i64: 16, 48>}, {pipeline_mode = #tpu.pipeline_mode<synchronous>, transform_indices = @transform_5, window_bounds = array<i64: 1, 48>}, {pipeline_mode = #tpu.pipeline_mode<synchronous>, transform_indices = @transform_6, window_bounds = array<i64: 16, 16>}, {pipeline_mode = #tpu.pipeline_mode<synchronous>, transform_indices = @transform_7, window_bounds = array<i64: 1, 16>}, {pipeline_mode = #tpu.pipeline_mode<synchronous>, transform_indices = @transform_8, window_bounds = array<i64: 1, 16>}, {pipeline_mode = #tpu.pipeline_mode<synchronous>, transform_indices = @transform_9, window_bounds = array<i64: 1, 16>}, {pipeline_mode = #tpu.pipeline_mode<synchronous>, transform_indices = @transform_10, window_bounds = array<i64: 16, 64>}, {pipeline_mode = #tpu.pipeline_mode<synchronous>, transform_indices = @transform_11, window_bounds = array<i64: 1, 64>}, {pipeline_mode = #tpu.pipeline_mode<synchronous>, transform_indices = @transform_12, window_bounds = array<i64: 64, 16>}, {pipeline_mode = #tpu.pipeline_mode<synchronous>, transform_indices = @transform_13, window_bounds = array<i64: 1, 16>}, {transform_indices = @transform_14, window_bounds = array<i64: 64, 16>}]} {
    %c0 = arith.constant 0 : index
    %c0_0 = arith.constant 0 : index
    %0 = vector.load %arg1[%c0, %c0_0] : memref<64x16xbf16, #tpu.memory_space<vmem>>, vector<64x16xbf16>
    %1 = arith.extf %0 : vector<64x16xbf16> to vector<64x16xf32>
    %c0_1 = arith.constant 0 : index
    %c0_2 = arith.constant 0 : index
    %2 = vector.load %arg3[%c0_1, %c0_2] : memref<1x16xf32, #tpu.memory_space<vmem>>, vector<1x16xf32>
    %c0_3 = arith.constant 0 : index
    %c0_4 = arith.constant 0 : index
    %3 = vector.load %arg4[%c0_3, %c0_4] : memref<1x16xf32, #tpu.memory_space<vmem>>, vector<1x16xf32>
    %cst = arith.constant dense<0.000000e+00> : vector<64xf32>
    %4 = vector.multi_reduction <add>, %1, %cst [1] : vector<64x16xf32> to vector<64xf32>
    %5 = vector.shape_cast %4 : vector<64xf32> to vector<64x1xf32>
    %cst_5 = arith.constant 1.600000e+01 : f32
    %6 = vector.broadcast %cst_5 : f32 to vector<64x1xf32>
    %7 = arith.divf %5, %6 : vector<64x1xf32>
    %8 = vector.broadcast %7 : vector<64x1xf32> to vector<64x16xf32>
    %9 = arith.subf %1, %8 : vector<64x16xf32>
    %10 = arith.mulf %9, %9 : vector<64x16xf32>
    %cst_6 = arith.constant dense<0.000000e+00> : vector<64xf32>
    %11 = vector.multi_reduction <add>, %10, %cst_6 [1] : vector<64x16xf32> to vector<64xf32>
    %12 = vector.shape_cast %11 : vector<64xf32> to vector<64x1xf32>
    %cst_7 = arith.constant 1.600000e+01 : f32
    %13 = vector.broadcast %cst_7 : f32 to vector<64x1xf32>
    %14 = arith.divf %12, %13 : vector<64x1xf32>
    %cst_8 = arith.constant 9.99999974E-6 : f32
    %15 = vector.broadcast %cst_8 : f32 to vector<64x1xf32>
    %16 = arith.addf %14, %15 : vector<64x1xf32>
    %17 = math.rsqrt %16 : vector<64x1xf32>
    %18 = vector.broadcast %17 : vector<64x1xf32> to vector<64x16xf32>
    %19 = arith.mulf %9, %18 : vector<64x16xf32>
    %20 = vector.broadcast %2 : vector<1x16xf32> to vector<64x16xf32>
    %21 = arith.mulf %19, %20 : vector<64x16xf32>
    %22 = vector.broadcast %3 : vector<1x16xf32> to vector<64x16xf32>
    %23 = arith.addf %21, %22 : vector<64x16xf32>
    %24 = arith.truncf %23 : vector<64x16xf32> to vector<64x16xbf16>
    %c0_9 = arith.constant 0 : index
    %c0_10 = arith.constant 0 : index
    %25 = vector.load %arg5[%c0_9, %c0_10] : memref<16x48xbf16, #tpu.memory_space<vmem>>, vector<16x48xbf16>
    %cst_11 = arith.constant dense<0.000000e+00> : vector<64x48xf32>
    %26 = tpu.matmul %24, %25, %cst_11 {dimension_numbers = #tpu.dot_dimension_numbers<[1], [0], [0], [1], [0, 0, 1, 1], [], []>} : vector<64x16xbf16>, vector<16x48xbf16>, vector<64x48xf32> -> vector<64x48xf32>
    %c0_12 = arith.constant 0 : index
    %c0_13 = arith.constant 0 : index
    %27 = vector.load %arg6[%c0_12, %c0_13] : memref<1x48xf32, #tpu.memory_space<vmem>>, vector<1x48xf32>
    %28 = vector.broadcast %27 : vector<1x48xf32> to vector<64x48xf32>
    %29 = arith.addf %26, %28 : vector<64x48xf32>
    %30 = vector.shape_cast %29 : vector<64x48xf32> to vector<4x16x48xf32>
    %c0_14 = arith.constant 0 : index
    %c0_15 = arith.constant 0 : index
    %c0_16 = arith.constant 0 : index
    %31 = vector.load %arg2[%c0_14, %c0_15, %c0_16] : memref<2x16x16xf32, #tpu.memory_space<vmem>>, vector<2x16x16xf32>
    %32 = vector.extract_strided_slice %30 {offsets = [0, 0, 0], sizes = [4, 16, 8], strides = [1, 1, 1]} : vector<4x16x48xf32> to vector<4x16x8xf32>
    %cst_17 = arith.constant 0.353553385 : f32
    %33 = vector.broadcast %cst_17 : f32 to vector<4x16x8xf32>
    %34 = arith.mulf %32, %33 : vector<4x16x8xf32>
    %35 = vector.extract_strided_slice %30 {offsets = [0, 0, 16], sizes = [4, 16, 8], strides = [1, 1, 1]} : vector<4x16x48xf32> to vector<4x16x8xf32>
    %36 = vector.extract_strided_slice %30 {offsets = [0, 0, 32], sizes = [4, 16, 8], strides = [1, 1, 1]} : vector<4x16x48xf32> to vector<4x16x8xf32>
    %37 = arith.truncf %34 : vector<4x16x8xf32> to vector<4x16x8xbf16>
    %38 = arith.truncf %35 : vector<4x16x8xf32> to vector<4x16x8xbf16>
    "tpu.trace_start"() <{level = 10 : i32, message = "bqd,bkd->bqk"}> : () -> ()
    %cst_18 = arith.constant dense<0.000000e+00> : vector<4x16x16xf32>
    %39 = tpu.matmul %37, %38, %cst_18 {dimension_numbers = #tpu.dot_dimension_numbers<[2], [2], [1], [1], [0, 0, 0, 1, 1, 1], [0], [0]>} : vector<4x16x8xbf16>, vector<4x16x8xbf16>, vector<4x16x16xf32> -> vector<4x16x16xf32>
    "tpu.trace_stop"() : () -> ()
    %40 = vector.extract_strided_slice %31 {offsets = [0, 0, 0], sizes = [1, 16, 16], strides = [1, 1, 1]} : vector<2x16x16xf32> to vector<1x16x16xf32>
    %41 = vector.shape_cast %40 : vector<1x16x16xf32> to vector<16x16xf32>
    %42 = vector.shape_cast %41 : vector<16x16xf32> to vector<1x16x16xf32>
    %43 = vector.broadcast %42 : vector<1x16x16xf32> to vector<4x16x16xf32>
    %44 = arith.addf %39, %43 : vector<4x16x16xf32>
    %cst_19 = arith.constant dense<0xFF800000> : vector<4x16xf32>
    %45 = vector.multi_reduction <maximumf>, %44, %cst_19 [2] : vector<4x16x16xf32> to vector<4x16xf32>
    %46 = vector.shape_cast %45 : vector<4x16xf32> to vector<4x16x1xf32>
    %47 = vector.broadcast %46 : vector<4x16x1xf32> to vector<4x16x16xf32>
    %48 = arith.subf %44, %47 : vector<4x16x16xf32>
    %49 = math.exp %48 : vector<4x16x16xf32>
    %cst_20 = arith.constant dense<0.000000e+00> : vector<4x16xf32>
    %50 = vector.multi_reduction <add>, %49, %cst_20 [2] : vector<4x16x16xf32> to vector<4x16xf32>
    %51 = vector.shape_cast %50 : vector<4x16xf32> to vector<4x16x1xf32>
    %52 = tpu.reciprocal %51 {approx = true} : vector<4x16x1xf32> -> vector<4x16x1xf32>
    %53 = vector.broadcast %52 : vector<4x16x1xf32> to vector<4x16x16xf32>
    %54 = arith.mulf %49, %53 : vector<4x16x16xf32>
    %55 = arith.truncf %54 : vector<4x16x16xf32> to vector<4x16x16xbf16>
    %56 = arith.truncf %36 : vector<4x16x8xf32> to vector<4x16x8xbf16>
    "tpu.trace_start"() <{level = 10 : i32, message = "bqk,bkd->bqd"}> : () -> ()
    %cst_21 = arith.constant dense<0.000000e+00> : vector<4x16x8xf32>
    %57 = tpu.matmul %55, %56, %cst_21 {dimension_numbers = #tpu.dot_dimension_numbers<[2], [1], [1], [2], [0, 0, 0, 1, 1, 2], [0], [0]>} : vector<4x16x16xbf16>, vector<4x16x8xbf16>, vector<4x16x8xf32> -> vector<4x16x8xf32>
    "tpu.trace_stop"() : () -> ()
    %58 = vector.extract_strided_slice %30 {offsets = [0, 0, 8], sizes = [4, 16, 8], strides = [1, 1, 1]} : vector<4x16x48xf32> to vector<4x16x8xf32>
    %cst_22 = arith.constant 0.353553385 : f32
    %59 = vector.broadcast %cst_22 : f32 to vector<4x16x8xf32>
    %60 = arith.mulf %58, %59 : vector<4x16x8xf32>
    %61 = vector.extract_strided_slice %30 {offsets = [0, 0, 24], sizes = [4, 16, 8], strides = [1, 1, 1]} : vector<4x16x48xf32> to vector<4x16x8xf32>
    %62 = vector.extract_strided_slice %30 {offsets = [0, 0, 40], sizes = [4, 16, 8], strides = [1, 1, 1]} : vector<4x16x48xf32> to vector<4x16x8xf32>
    %63 = arith.truncf %60 : vector<4x16x8xf32> to vector<4x16x8xbf16>
    %64 = arith.truncf %61 : vector<4x16x8xf32> to vector<4x16x8xbf16>
    "tpu.trace_start"() <{level = 10 : i32, message = "bqd,bkd->bqk"}> : () -> ()
    %cst_23 = arith.constant dense<0.000000e+00> : vector<4x16x16xf32>
    %65 = tpu.matmul %63, %64, %cst_23 {dimension_numbers = #tpu.dot_dimension_numbers<[2], [2], [1], [1], [0, 0, 0, 1, 1, 1], [0], [0]>} : vector<4x16x8xbf16>, vector<4x16x8xbf16>, vector<4x16x16xf32> -> vector<4x16x16xf32>
    "tpu.trace_stop"() : () -> ()
    %66 = vector.extract_strided_slice %31 {offsets = [1, 0, 0], sizes = [1, 16, 16], strides = [1, 1, 1]} : vector<2x16x16xf32> to vector<1x16x16xf32>
    %67 = vector.shape_cast %66 : vector<1x16x16xf32> to vector<16x16xf32>
    %68 = vector.shape_cast %67 : vector<16x16xf32> to vector<1x16x16xf32>
    %69 = vector.broadcast %68 : vector<1x16x16xf32> to vector<4x16x16xf32>
    %70 = arith.addf %65, %69 : vector<4x16x16xf32>
    %cst_24 = arith.constant dense<0xFF800000> : vector<4x16xf32>
    %71 = vector.multi_reduction <maximumf>, %70, %cst_24 [2] : vector<4x16x16xf32> to vector<4x16xf32>
    %72 = vector.shape_cast %71 : vector<4x16xf32> to vector<4x16x1xf32>
    %73 = vector.broadcast %72 : vector<4x16x1xf32> to vector<4x16x16xf32>
    %74 = arith.subf %70, %73 : vector<4x16x16xf32>
    %75 = math.exp %74 : vector<4x16x16xf32>
    %cst_25 = arith.constant dense<0.000000e+00> : vector<4x16xf32>
    %76 = vector.multi_reduction <add>, %75, %cst_25 [2] : vector<4x16x16xf32> to vector<4x16xf32>
    %77 = vector.shape_cast %76 : vector<4x16xf32> to vector<4x16x1xf32>
    %78 = tpu.reciprocal %77 {approx = true} : vector<4x16x1xf32> -> vector<4x16x1xf32>
    %79 = vector.broadcast %78 : vector<4x16x1xf32> to vector<4x16x16xf32>
    %80 = arith.mulf %75, %79 : vector<4x16x16xf32>
    %81 = arith.truncf %80 : vector<4x16x16xf32> to vector<4x16x16xbf16>
    %82 = arith.truncf %62 : vector<4x16x8xf32> to vector<4x16x8xbf16>
    "tpu.trace_start"() <{level = 10 : i32, message = "bqk,bkd->bqd"}> : () -> ()
    %cst_26 = arith.constant dense<0.000000e+00> : vector<4x16x8xf32>
    %83 = tpu.matmul %81, %82, %cst_26 {dimension_numbers = #tpu.dot_dimension_numbers<[2], [1], [1], [2], [0, 0, 0, 1, 1, 2], [0], [0]>} : vector<4x16x16xbf16>, vector<4x16x8xbf16>, vector<4x16x8xf32> -> vector<4x16x8xf32>
    "tpu.trace_stop"() : () -> ()
    %84 = tpu.concatenate %57, %83 in 2 : vector<4x16x8xf32>, vector<4x16x8xf32> -> vector<4x16x16xf32>
    %85 = vector.shape_cast %84 : vector<4x16x16xf32> to vector<64x16xf32>
    %86 = arith.truncf %85 : vector<64x16xf32> to vector<64x16xbf16>
    %c0_27 = arith.constant 0 : index
    %c0_28 = arith.constant 0 : index
    %87 = vector.load %arg7[%c0_27, %c0_28] : memref<16x16xbf16, #tpu.memory_space<vmem>>, vector<16x16xbf16>
    %cst_29 = arith.constant dense<0.000000e+00> : vector<64x16xf32>
    %88 = tpu.matmul %86, %87, %cst_29 {dimension_numbers = #tpu.dot_dimension_numbers<[1], [0], [0], [1], [0, 0, 1, 1], [], []>} : vector<64x16xbf16>, vector<16x16xbf16>, vector<64x16xf32> -> vector<64x16xf32>
    %c0_30 = arith.constant 0 : index
    %c0_31 = arith.constant 0 : index
    %89 = vector.load %arg8[%c0_30, %c0_31] : memref<1x16xf32, #tpu.memory_space<vmem>>, vector<1x16xf32>
    %90 = vector.broadcast %89 : vector<1x16xf32> to vector<64x16xf32>
    %91 = arith.addf %88, %90 : vector<64x16xf32>
    %92 = arith.addf %1, %91 : vector<64x16xf32>
    %c0_32 = arith.constant 0 : index
    %c0_33 = arith.constant 0 : index
    %93 = vector.load %arg9[%c0_32, %c0_33] : memref<1x16xf32, #tpu.memory_space<vmem>>, vector<1x16xf32>
    %c0_34 = arith.constant 0 : index
    %c0_35 = arith.constant 0 : index
    %94 = vector.load %arg10[%c0_34, %c0_35] : memref<1x16xf32, #tpu.memory_space<vmem>>, vector<1x16xf32>
    %cst_36 = arith.constant dense<0.000000e+00> : vector<64xf32>
    %95 = vector.multi_reduction <add>, %92, %cst_36 [1] : vector<64x16xf32> to vector<64xf32>
    %96 = vector.shape_cast %95 : vector<64xf32> to vector<64x1xf32>
    %cst_37 = arith.constant 1.600000e+01 : f32
    %97 = vector.broadcast %cst_37 : f32 to vector<64x1xf32>
    %98 = arith.divf %96, %97 : vector<64x1xf32>
    %99 = vector.broadcast %98 : vector<64x1xf32> to vector<64x16xf32>
    %100 = arith.subf %92, %99 : vector<64x16xf32>
    %101 = arith.mulf %100, %100 : vector<64x16xf32>
    %cst_38 = arith.constant dense<0.000000e+00> : vector<64xf32>
    %102 = vector.multi_reduction <add>, %101, %cst_38 [1] : vector<64x16xf32> to vector<64xf32>
    %103 = vector.shape_cast %102 : vector<64xf32> to vector<64x1xf32>
    %cst_39 = arith.constant 1.600000e+01 : f32
    %104 = vector.broadcast %cst_39 : f32 to vector<64x1xf32>
    %105 = arith.divf %103, %104 : vector<64x1xf32>
    %cst_40 = arith.constant 9.99999974E-6 : f32
    %106 = vector.broadcast %cst_40 : f32 to vector<64x1xf32>
    %107 = arith.addf %105, %106 : vector<64x1xf32>
    %108 = math.rsqrt %107 : vector<64x1xf32>
    %109 = vector.broadcast %108 : vector<64x1xf32> to vector<64x16xf32>
    %110 = arith.mulf %100, %109 : vector<64x16xf32>
    %111 = vector.broadcast %93 : vector<1x16xf32> to vector<64x16xf32>
    %112 = arith.mulf %110, %111 : vector<64x16xf32>
    %113 = vector.broadcast %94 : vector<1x16xf32> to vector<64x16xf32>
    %114 = arith.addf %112, %113 : vector<64x16xf32>
    %115 = arith.truncf %114 : vector<64x16xf32> to vector<64x16xbf16>
    %c0_41 = arith.constant 0 : index
    %c0_42 = arith.constant 0 : index
    %116 = vector.load %arg11[%c0_41, %c0_42] : memref<16x64xbf16, #tpu.memory_space<vmem>>, vector<16x64xbf16>
    %cst_43 = arith.constant dense<0.000000e+00> : vector<64x64xf32>
    %117 = tpu.matmul %115, %116, %cst_43 {dimension_numbers = #tpu.dot_dimension_numbers<[1], [0], [0], [1], [0, 0, 1, 1], [], []>} : vector<64x16xbf16>, vector<16x64xbf16>, vector<64x64xf32> -> vector<64x64xf32>
    %c0_44 = arith.constant 0 : index
    %c0_45 = arith.constant 0 : index
    %118 = vector.load %arg12[%c0_44, %c0_45] : memref<1x64xf32, #tpu.memory_space<vmem>>, vector<1x64xf32>
    %119 = vector.broadcast %118 : vector<1x64xf32> to vector<64x64xf32>
    %120 = arith.addf %117, %119 : vector<64x64xf32>
    %121 = arith.mulf %120, %120 : vector<64x64xf32>
    %122 = arith.mulf %120, %121 : vector<64x64xf32>
    %cst_46 = arith.constant 4.471500e-02 : f32
    %123 = vector.broadcast %cst_46 : f32 to vector<64x64xf32>
    %124 = arith.mulf %123, %122 : vector<64x64xf32>
    %125 = arith.addf %120, %124 : vector<64x64xf32>
    %cst_47 = arith.constant 0.797884583 : f32
    %126 = vector.broadcast %cst_47 : f32 to vector<64x64xf32>
    %127 = arith.mulf %126, %125 : vector<64x64xf32>
    %128 = math.tanh %127 : vector<64x64xf32>
    %cst_48 = arith.constant 1.000000e+00 : f32
    %129 = vector.broadcast %cst_48 : f32 to vector<64x64xf32>
    %130 = arith.addf %129, %128 : vector<64x64xf32>
    %cst_49 = arith.constant 5.000000e-01 : f32
    %131 = vector.broadcast %cst_49 : f32 to vector<64x64xf32>
    %132 = arith.mulf %131, %130 : vector<64x64xf32>
    %133 = arith.mulf %120, %132 : vector<64x64xf32>
    %134 = arith.truncf %133 : vector<64x64xf32> to vector<64x64xbf16>
    %c0_50 = arith.constant 0 : index
    %c0_51 = arith.constant 0 : index
    %135 = vector.load %arg13[%c0_50, %c0_51] : memref<64x16xbf16, #tpu.memory_space<vmem>>, vector<64x16xbf16>
    %cst_52 = arith.constant dense<0.000000e+00> : vector<64x16xf32>
    %136 = tpu.matmul %134, %135, %cst_52 {dimension_numbers = #tpu.dot_dimension_numbers<[1], [0], [0], [1], [0, 0, 1, 1], [], []>} : vector<64x64xbf16>, vector<64x16xbf16>, vector<64x16xf32> -> vector<64x16xf32>
    %c0_53 = arith.constant 0 : index
    %c0_54 = arith.constant 0 : index
    %137 = vector.load %arg14[%c0_53, %c0_54] : memref<1x16xf32, #tpu.memory_space<vmem>>, vector<1x16xf32>
    %138 = vector.broadcast %137 : vector<1x16xf32> to vector<64x16xf32>
    %139 = arith.addf %136, %138 : vector<64x16xf32>
    %140 = arith.addf %92, %139 : vector<64x16xf32>
    %141 = arith.truncf %140 : vector<64x16xf32> to vector<64x16xbf16>
    %c0_55 = arith.constant 0 : index
    %c0_56 = arith.constant 0 : index
    %142 = vector.load %arg15[%c0_55, %c0_56] : memref<64x16xbf16, #tpu.memory_space<vmem>>, vector<64x16xbf16>
    tpu.vector_store %arg15[%c0_55, %c0_56], %141 {strides = array<i32>} : memref<64x16xbf16, #tpu.memory_space<vmem>>, vector<64x16xbf16>,
    return
  }
  func.func @transform_0(%arg0: i32) -> (i32, i32) {
    %c0_i32 = arith.constant 0 : i32
    %c0_i32_0 = arith.constant 0 : i32
    return %arg0, %c0_i32 : i32, i32
  }
  func.func @transform_1(%arg0: i32) -> (i32, i32, i32) {
    %c0_i32 = arith.constant 0 : i32
    %c0_i32_0 = arith.constant 0 : i32
    %c0_i32_1 = arith.constant 0 : i32
    %c0_i32_2 = arith.constant 0 : i32
    return %c0_i32, %c0_i32_0, %c0_i32_1 : i32, i32, i32
  }
  func.func @transform_2(%arg0: i32) -> (i32, i32) {
    %c0_i32 = arith.constant 0 : i32
    %c0_i32_0 = arith.constant 0 : i32
    %c0_i32_1 = arith.constant 0 : i32
    return %c0_i32, %c0_i32_0 : i32, i32
  }
  func.func @transform_3(%arg0: i32) -> (i32, i32) {
    %c0_i32 = arith.constant 0 : i32
    %c0_i32_0 = arith.constant 0 : i32
    %c0_i32_1 = arith.constant 0 : i32
    return %c0_i32, %c0_i32_0 : i32, i32
  }
  func.func @transform_4(%arg0: i32) -> (i32, i32) {
    %c0_i32 = arith.constant 0 : i32
    %c0_i32_0 = arith.constant 0 : i32
    %c0_i32_1 = arith.constant 0 : i32
    return %c0_i32, %c0_i32_0 : i32, i32
  }
  func.func @transform_5(%arg0: i32) -> (i32, i32) {
    %c0_i32 = arith.constant 0 : i32
    %c0_i32_0 = arith.constant 0 : i32
    %c0_i32_1 = arith.constant 0 : i32
    return %c0_i32, %c0_i32_0 : i32, i32
  }
  func.func @transform_6(%arg0: i32) -> (i32, i32) {
    %c0_i32 = arith.constant 0 : i32
    %c0_i32_0 = arith.constant 0 : i32
    %c0_i32_1 = arith.constant 0 : i32
    return %c0_i32, %c0_i32_0 : i32, i32
  }
  func.func @transform_7(%arg0: i32) -> (i32, i32) {
    %c0_i32 = arith.constant 0 : i32
    %c0_i32_0 = arith.constant 0 : i32
    %c0_i32_1 = arith.constant 0 : i32
    return %c0_i32, %c0_i32_0 : i32, i32
  }
  func.func @transform_8(%arg0: i32) -> (i32, i32) {
    %c0_i32 = arith.constant 0 : i32
    %c0_i32_0 = arith.constant 0 : i32
    %c0_i32_1 = arith.constant 0 : i32
    return %c0_i32, %c0_i32_0 : i32, i32
  }
  func.func @transform_9(%arg0: i32) -> (i32, i32) {
    %c0_i32 = arith.constant 0 : i32
    %c0_i32_0 = arith.constant 0 : i32
    %c0_i32_1 = arith.constant 0 : i32
    return %c0_i32, %c0_i32_0 : i32, i32
  }
  func.func @transform_10(%arg0: i32) -> (i32, i32) {
    %c0_i32 = arith.constant 0 : i32
    %c0_i32_0 = arith.constant 0 : i32
    %c0_i32_1 = arith.constant 0 : i32
    return %c0_i32, %c0_i32_0 : i32, i32
  }
  func.func @transform_11(%arg0: i32) -> (i32, i32) {
    %c0_i32 = arith.constant 0 : i32
    %c0_i32_0 = arith.constant 0 : i32
    %c0_i32_1 = arith.constant 0 : i32
    return %c0_i32, %c0_i32_0 : i32, i32
  }
  func.func @transform_12(%arg0: i32) -> (i32, i32) {
    %c0_i32 = arith.constant 0 : i32
    %c0_i32_0 = arith.constant 0 : i32
    %c0_i32_1 = arith.constant 0 : i32
    return %c0_i32, %c0_i32_0 : i32, i32
  }
  func.func @transform_13(%arg0: i32) -> (i32, i32) {
    %c0_i32 = arith.constant 0 : i32
    %c0_i32_0 = arith.constant 0 : i32
    %c0_i32_1 = arith.constant 0 : i32
    return %c0_i32, %c0_i32_0 : i32, i32
  }
  func.func @transform_14(%arg0: i32) -> (i32, i32) {
    %c0_i32 = arith.constant 0 : i32
    %c0_i32_0 = arith.constant 0 : i32
    return %arg0, %c0_i32 : i32, i32
  }
}

module attributes {stable_mosaic.version = 11 : i64} {
  func.func @swin_block_kernel(%arg0: i32, %arg1: memref<64x16xbf16, #tpu.memory_space<vmem>>, %arg2: memref<2x16x16xf32, #tpu.memory_space<vmem>>, %arg3: memref<1x16xf32, #tpu.memory_space<vmem>>, %arg4: memref<1x16xf32, #tpu.memory_space<vmem>>, %arg5: memref<16x48xbf16, #tpu.memory_space<vmem>>, %arg6: memref<1x48xf32, #tpu.memory_space<vmem>>, %arg7: memref<16x16xbf16, #tpu.memory_space<vmem>>, %arg8: memref<1x16xf32, #tpu.memory_space<vmem>>, %arg9: memref<1x16xf32, #tpu.memory_space<vmem>>, %arg10: memref<1x16xf32, #tpu.memory_space<vmem>>, %arg11: memref<16x64xbf16, #tpu.memory_space<vmem>>, %arg12: memref<1x64xf32, #tpu.memory_space<vmem>>, %arg13: memref<64x16xbf16, #tpu.memory_space<vmem>>, %arg14: memref<1x16xf32, #tpu.memory_space<vmem>>, %arg15: memref<4x16x16xf32, #tpu.memory_space<vmem>>, %arg16: memref<64x16xbf16, #tpu.memory_space<vmem>>) attributes {dimension_semantics = [#tpu.dimension_semantics<parallel>], iteration_bounds = array<i64: 2>, scalar_prefetch = 0 : i64, scratch_operands = 0 : i64, tpu.core_type = #tpu.core_type<tc>, window_params = [{transform_indices = @transform_0, window_bounds = array<i64: 64, 16>}, {pipeline_mode = #tpu.pipeline_mode<synchronous>, transform_indices = @transform_1, window_bounds = array<i64: 2, 16, 16>}, {pipeline_mode = #tpu.pipeline_mode<synchronous>, transform_indices = @transform_2, window_bounds = array<i64: 1, 16>}, {pipeline_mode = #tpu.pipeline_mode<synchronous>, transform_indices = @transform_3, window_bounds = array<i64: 1, 16>}, {pipeline_mode = #tpu.pipeline_mode<synchronous>, transform_indices = @transform_4, window_bounds = array<i64: 16, 48>}, {pipeline_mode = #tpu.pipeline_mode<synchronous>, transform_indices = @transform_5, window_bounds = array<i64: 1, 48>}, {pipeline_mode = #tpu.pipeline_mode<synchronous>, transform_indices = @transform_6, window_bounds = array<i64: 16, 16>}, {pipeline_mode = #tpu.pipeline_mode<synchronous>, transform_indices = @transform_7, window_bounds = array<i64: 1, 16>}, {pipeline_mode = #tpu.pipeline_mode<synchronous>, transform_indices = @transform_8, window_bounds = array<i64: 1, 16>}, {pipeline_mode = #tpu.pipeline_mode<synchronous>, transform_indices = @transform_9, window_bounds = array<i64: 1, 16>}, {pipeline_mode = #tpu.pipeline_mode<synchronous>, transform_indices = @transform_10, window_bounds = array<i64: 16, 64>}, {pipeline_mode = #tpu.pipeline_mode<synchronous>, transform_indices = @transform_11, window_bounds = array<i64: 1, 64>}, {pipeline_mode = #tpu.pipeline_mode<synchronous>, transform_indices = @transform_12, window_bounds = array<i64: 64, 16>}, {pipeline_mode = #tpu.pipeline_mode<synchronous>, transform_indices = @transform_13, window_bounds = array<i64: 1, 16>}, {transform_indices = @transform_14, window_bounds = array<i64: 4, 16, 16>}, {transform_indices = @transform_15, window_bounds = array<i64: 64, 16>}]} {
    %c0 = arith.constant 0 : index
    %c0_0 = arith.constant 0 : index
    %c0_1 = arith.constant 0 : index
    %0 = vector.load %arg15[%c0, %c0_0, %c0_1] : memref<4x16x16xf32, #tpu.memory_space<vmem>>, vector<4x16x16xf32>
    %c0_2 = arith.constant 0 : index
    %c0_3 = arith.constant 0 : index
    %1 = vector.load %arg1[%c0_2, %c0_3] : memref<64x16xbf16, #tpu.memory_space<vmem>>, vector<64x16xbf16>
    %2 = arith.extf %1 : vector<64x16xbf16> to vector<64x16xf32>
    %c0_4 = arith.constant 0 : index
    %c0_5 = arith.constant 0 : index
    %3 = vector.load %arg3[%c0_4, %c0_5] : memref<1x16xf32, #tpu.memory_space<vmem>>, vector<1x16xf32>
    %c0_6 = arith.constant 0 : index
    %c0_7 = arith.constant 0 : index
    %4 = vector.load %arg4[%c0_6, %c0_7] : memref<1x16xf32, #tpu.memory_space<vmem>>, vector<1x16xf32>
    %cst = arith.constant dense<0.000000e+00> : vector<64xf32>
    %5 = vector.multi_reduction <add>, %2, %cst [1] : vector<64x16xf32> to vector<64xf32>
    %6 = vector.shape_cast %5 : vector<64xf32> to vector<64x1xf32>
    %cst_8 = arith.constant 1.600000e+01 : f32
    %7 = vector.broadcast %cst_8 : f32 to vector<64x1xf32>
    %8 = arith.divf %6, %7 : vector<64x1xf32>
    %9 = vector.broadcast %8 : vector<64x1xf32> to vector<64x16xf32>
    %10 = arith.subf %2, %9 : vector<64x16xf32>
    %11 = arith.mulf %10, %10 : vector<64x16xf32>
    %cst_9 = arith.constant dense<0.000000e+00> : vector<64xf32>
    %12 = vector.multi_reduction <add>, %11, %cst_9 [1] : vector<64x16xf32> to vector<64xf32>
    %13 = vector.shape_cast %12 : vector<64xf32> to vector<64x1xf32>
    %cst_10 = arith.constant 1.600000e+01 : f32
    %14 = vector.broadcast %cst_10 : f32 to vector<64x1xf32>
    %15 = arith.divf %13, %14 : vector<64x1xf32>
    %cst_11 = arith.constant 9.99999974E-6 : f32
    %16 = vector.broadcast %cst_11 : f32 to vector<64x1xf32>
    %17 = arith.addf %15, %16 : vector<64x1xf32>
    %18 = math.rsqrt %17 : vector<64x1xf32>
    %19 = vector.broadcast %18 : vector<64x1xf32> to vector<64x16xf32>
    %20 = arith.mulf %10, %19 : vector<64x16xf32>
    %21 = vector.broadcast %3 : vector<1x16xf32> to vector<64x16xf32>
    %22 = arith.mulf %20, %21 : vector<64x16xf32>
    %23 = vector.broadcast %4 : vector<1x16xf32> to vector<64x16xf32>
    %24 = arith.addf %22, %23 : vector<64x16xf32>
    %25 = arith.truncf %24 : vector<64x16xf32> to vector<64x16xbf16>
    %c0_12 = arith.constant 0 : index
    %c0_13 = arith.constant 0 : index
    %26 = vector.load %arg5[%c0_12, %c0_13] : memref<16x48xbf16, #tpu.memory_space<vmem>>, vector<16x48xbf16>
    %cst_14 = arith.constant dense<0.000000e+00> : vector<64x48xf32>
    %27 = tpu.matmul %25, %26, %cst_14 {dimension_numbers = #tpu.dot_dimension_numbers<[1], [0], [0], [1], [0, 0, 1, 1], [], []>} : vector<64x16xbf16>, vector<16x48xbf16>, vector<64x48xf32> -> vector<64x48xf32>
    %c0_15 = arith.constant 0 : index
    %c0_16 = arith.constant 0 : index
    %28 = vector.load %arg6[%c0_15, %c0_16] : memref<1x48xf32, #tpu.memory_space<vmem>>, vector<1x48xf32>
    %29 = vector.broadcast %28 : vector<1x48xf32> to vector<64x48xf32>
    %30 = arith.addf %27, %29 : vector<64x48xf32>
    %31 = vector.shape_cast %30 : vector<64x48xf32> to vector<4x16x48xf32>
    %c0_17 = arith.constant 0 : index
    %c0_18 = arith.constant 0 : index
    %c0_19 = arith.constant 0 : index
    %32 = vector.load %arg2[%c0_17, %c0_18, %c0_19] : memref<2x16x16xf32, #tpu.memory_space<vmem>>, vector<2x16x16xf32>
    %33 = vector.extract_strided_slice %31 {offsets = [0, 0, 0], sizes = [4, 16, 8], strides = [1, 1, 1]} : vector<4x16x48xf32> to vector<4x16x8xf32>
    %cst_20 = arith.constant 0.353553385 : f32
    %34 = vector.broadcast %cst_20 : f32 to vector<4x16x8xf32>
    %35 = arith.mulf %33, %34 : vector<4x16x8xf32>
    %36 = vector.extract_strided_slice %31 {offsets = [0, 0, 16], sizes = [4, 16, 8], strides = [1, 1, 1]} : vector<4x16x48xf32> to vector<4x16x8xf32>
    %37 = vector.extract_strided_slice %31 {offsets = [0, 0, 32], sizes = [4, 16, 8], strides = [1, 1, 1]} : vector<4x16x48xf32> to vector<4x16x8xf32>
    %38 = arith.truncf %35 : vector<4x16x8xf32> to vector<4x16x8xbf16>
    %39 = arith.truncf %36 : vector<4x16x8xf32> to vector<4x16x8xbf16>
    "tpu.trace_start"() <{level = 10 : i32, message = "bqd,bkd->bqk"}> : () -> ()
    %cst_21 = arith.constant dense<0.000000e+00> : vector<4x16x16xf32>
    %40 = tpu.matmul %38, %39, %cst_21 {dimension_numbers = #tpu.dot_dimension_numbers<[2], [2], [1], [1], [0, 0, 0, 1, 1, 1], [0], [0]>} : vector<4x16x8xbf16>, vector<4x16x8xbf16>, vector<4x16x16xf32> -> vector<4x16x16xf32>
    "tpu.trace_stop"() : () -> ()
    %41 = vector.extract_strided_slice %32 {offsets = [0, 0, 0], sizes = [1, 16, 16], strides = [1, 1, 1]} : vector<2x16x16xf32> to vector<1x16x16xf32>
    %42 = vector.shape_cast %41 : vector<1x16x16xf32> to vector<16x16xf32>
    %43 = vector.shape_cast %42 : vector<16x16xf32> to vector<1x16x16xf32>
    %44 = vector.broadcast %43 : vector<1x16x16xf32> to vector<4x16x16xf32>
    %45 = arith.addf %40, %44 : vector<4x16x16xf32>
    %46 = arith.addf %45, %0 : vector<4x16x16xf32>
    %cst_22 = arith.constant dense<0xFF800000> : vector<4x16xf32>
    %47 = vector.multi_reduction <maximumf>, %46, %cst_22 [2] : vector<4x16x16xf32> to vector<4x16xf32>
    %48 = vector.shape_cast %47 : vector<4x16xf32> to vector<4x16x1xf32>
    %49 = vector.broadcast %48 : vector<4x16x1xf32> to vector<4x16x16xf32>
    %50 = arith.subf %46, %49 : vector<4x16x16xf32>
    %51 = math.exp %50 : vector<4x16x16xf32>
    %cst_23 = arith.constant dense<0.000000e+00> : vector<4x16xf32>
    %52 = vector.multi_reduction <add>, %51, %cst_23 [2] : vector<4x16x16xf32> to vector<4x16xf32>
    %53 = vector.shape_cast %52 : vector<4x16xf32> to vector<4x16x1xf32>
    %54 = tpu.reciprocal %53 {approx = true} : vector<4x16x1xf32> -> vector<4x16x1xf32>
    %55 = vector.broadcast %54 : vector<4x16x1xf32> to vector<4x16x16xf32>
    %56 = arith.mulf %51, %55 : vector<4x16x16xf32>
    %57 = arith.truncf %56 : vector<4x16x16xf32> to vector<4x16x16xbf16>
    %58 = arith.truncf %37 : vector<4x16x8xf32> to vector<4x16x8xbf16>
    "tpu.trace_start"() <{level = 10 : i32, message = "bqk,bkd->bqd"}> : () -> ()
    %cst_24 = arith.constant dense<0.000000e+00> : vector<4x16x8xf32>
    %59 = tpu.matmul %57, %58, %cst_24 {dimension_numbers = #tpu.dot_dimension_numbers<[2], [1], [1], [2], [0, 0, 0, 1, 1, 2], [0], [0]>} : vector<4x16x16xbf16>, vector<4x16x8xbf16>, vector<4x16x8xf32> -> vector<4x16x8xf32>
    "tpu.trace_stop"() : () -> ()
    %60 = vector.extract_strided_slice %31 {offsets = [0, 0, 8], sizes = [4, 16, 8], strides = [1, 1, 1]} : vector<4x16x48xf32> to vector<4x16x8xf32>
    %cst_25 = arith.constant 0.353553385 : f32
    %61 = vector.broadcast %cst_25 : f32 to vector<4x16x8xf32>
    %62 = arith.mulf %60, %61 : vector<4x16x8xf32>
    %63 = vector.extract_strided_slice %31 {offsets = [0, 0, 24], sizes = [4, 16, 8], strides = [1, 1, 1]} : vector<4x16x48xf32> to vector<4x16x8xf32>
    %64 = vector.extract_strided_slice %31 {offsets = [0, 0, 40], sizes = [4, 16, 8], strides = [1, 1, 1]} : vector<4x16x48xf32> to vector<4x16x8xf32>
    %65 = arith.truncf %62 : vector<4x16x8xf32> to vector<4x16x8xbf16>
    %66 = arith.truncf %63 : vector<4x16x8xf32> to vector<4x16x8xbf16>
    "tpu.trace_start"() <{level = 10 : i32, message = "bqd,bkd->bqk"}> : () -> ()
    %cst_26 = arith.constant dense<0.000000e+00> : vector<4x16x16xf32>
    %67 = tpu.matmul %65, %66, %cst_26 {dimension_numbers = #tpu.dot_dimension_numbers<[2], [2], [1], [1], [0, 0, 0, 1, 1, 1], [0], [0]>} : vector<4x16x8xbf16>, vector<4x16x8xbf16>, vector<4x16x16xf32> -> vector<4x16x16xf32>
    "tpu.trace_stop"() : () -> ()
    %68 = vector.extract_strided_slice %32 {offsets = [1, 0, 0], sizes = [1, 16, 16], strides = [1, 1, 1]} : vector<2x16x16xf32> to vector<1x16x16xf32>
    %69 = vector.shape_cast %68 : vector<1x16x16xf32> to vector<16x16xf32>
    %70 = vector.shape_cast %69 : vector<16x16xf32> to vector<1x16x16xf32>
    %71 = vector.broadcast %70 : vector<1x16x16xf32> to vector<4x16x16xf32>
    %72 = arith.addf %67, %71 : vector<4x16x16xf32>
    %73 = arith.addf %72, %0 : vector<4x16x16xf32>
    %cst_27 = arith.constant dense<0xFF800000> : vector<4x16xf32>
    %74 = vector.multi_reduction <maximumf>, %73, %cst_27 [2] : vector<4x16x16xf32> to vector<4x16xf32>
    %75 = vector.shape_cast %74 : vector<4x16xf32> to vector<4x16x1xf32>
    %76 = vector.broadcast %75 : vector<4x16x1xf32> to vector<4x16x16xf32>
    %77 = arith.subf %73, %76 : vector<4x16x16xf32>
    %78 = math.exp %77 : vector<4x16x16xf32>
    %cst_28 = arith.constant dense<0.000000e+00> : vector<4x16xf32>
    %79 = vector.multi_reduction <add>, %78, %cst_28 [2] : vector<4x16x16xf32> to vector<4x16xf32>
    %80 = vector.shape_cast %79 : vector<4x16xf32> to vector<4x16x1xf32>
    %81 = tpu.reciprocal %80 {approx = true} : vector<4x16x1xf32> -> vector<4x16x1xf32>
    %82 = vector.broadcast %81 : vector<4x16x1xf32> to vector<4x16x16xf32>
    %83 = arith.mulf %78, %82 : vector<4x16x16xf32>
    %84 = arith.truncf %83 : vector<4x16x16xf32> to vector<4x16x16xbf16>
    %85 = arith.truncf %64 : vector<4x16x8xf32> to vector<4x16x8xbf16>
    "tpu.trace_start"() <{level = 10 : i32, message = "bqk,bkd->bqd"}> : () -> ()
    %cst_29 = arith.constant dense<0.000000e+00> : vector<4x16x8xf32>
    %86 = tpu.matmul %84, %85, %cst_29 {dimension_numbers = #tpu.dot_dimension_numbers<[2], [1], [1], [2], [0, 0, 0, 1, 1, 2], [0], [0]>} : vector<4x16x16xbf16>, vector<4x16x8xbf16>, vector<4x16x8xf32> -> vector<4x16x8xf32>
    "tpu.trace_stop"() : () -> ()
    %87 = tpu.concatenate %59, %86 in 2 : vector<4x16x8xf32>, vector<4x16x8xf32> -> vector<4x16x16xf32>
    %88 = vector.shape_cast %87 : vector<4x16x16xf32> to vector<64x16xf32>
    %89 = arith.truncf %88 : vector<64x16xf32> to vector<64x16xbf16>
    %c0_30 = arith.constant 0 : index
    %c0_31 = arith.constant 0 : index
    %90 = vector.load %arg7[%c0_30, %c0_31] : memref<16x16xbf16, #tpu.memory_space<vmem>>, vector<16x16xbf16>
    %cst_32 = arith.constant dense<0.000000e+00> : vector<64x16xf32>
    %91 = tpu.matmul %89, %90, %cst_32 {dimension_numbers = #tpu.dot_dimension_numbers<[1], [0], [0], [1], [0, 0, 1, 1], [], []>} : vector<64x16xbf16>, vector<16x16xbf16>, vector<64x16xf32> -> vector<64x16xf32>
    %c0_33 = arith.constant 0 : index
    %c0_34 = arith.constant 0 : index
    %92 = vector.load %arg8[%c0_33, %c0_34] : memref<1x16xf32, #tpu.memory_space<vmem>>, vector<1x16xf32>
    %93 = vector.broadcast %92 : vector<1x16xf32> to vector<64x16xf32>
    %94 = arith.addf %91, %93 : vector<64x16xf32>
    %95 = arith.addf %2, %94 : vector<64x16xf32>
    %c0_35 = arith.constant 0 : index
    %c0_36 = arith.constant 0 : index
    %96 = vector.load %arg9[%c0_35, %c0_36] : memref<1x16xf32, #tpu.memory_space<vmem>>, vector<1x16xf32>
    %c0_37 = arith.constant 0 : index
    %c0_38 = arith.constant 0 : index
    %97 = vector.load %arg10[%c0_37, %c0_38] : memref<1x16xf32, #tpu.memory_space<vmem>>, vector<1x16xf32>
    %cst_39 = arith.constant dense<0.000000e+00> : vector<64xf32>
    %98 = vector.multi_reduction <add>, %95, %cst_39 [1] : vector<64x16xf32> to vector<64xf32>
    %99 = vector.shape_cast %98 : vector<64xf32> to vector<64x1xf32>
    %cst_40 = arith.constant 1.600000e+01 : f32
    %100 = vector.broadcast %cst_40 : f32 to vector<64x1xf32>
    %101 = arith.divf %99, %100 : vector<64x1xf32>
    %102 = vector.broadcast %101 : vector<64x1xf32> to vector<64x16xf32>
    %103 = arith.subf %95, %102 : vector<64x16xf32>
    %104 = arith.mulf %103, %103 : vector<64x16xf32>
    %cst_41 = arith.constant dense<0.000000e+00> : vector<64xf32>
    %105 = vector.multi_reduction <add>, %104, %cst_41 [1] : vector<64x16xf32> to vector<64xf32>
    %106 = vector.shape_cast %105 : vector<64xf32> to vector<64x1xf32>
    %cst_42 = arith.constant 1.600000e+01 : f32
    %107 = vector.broadcast %cst_42 : f32 to vector<64x1xf32>
    %108 = arith.divf %106, %107 : vector<64x1xf32>
    %cst_43 = arith.constant 9.99999974E-6 : f32
    %109 = vector.broadcast %cst_43 : f32 to vector<64x1xf32>
    %110 = arith.addf %108, %109 : vector<64x1xf32>
    %111 = math.rsqrt %110 : vector<64x1xf32>
    %112 = vector.broadcast %111 : vector<64x1xf32> to vector<64x16xf32>
    %113 = arith.mulf %103, %112 : vector<64x16xf32>
    %114 = vector.broadcast %96 : vector<1x16xf32> to vector<64x16xf32>
    %115 = arith.mulf %113, %114 : vector<64x16xf32>
    %116 = vector.broadcast %97 : vector<1x16xf32> to vector<64x16xf32>
    %117 = arith.addf %115, %116 : vector<64x16xf32>
    %118 = arith.truncf %117 : vector<64x16xf32> to vector<64x16xbf16>
    %c0_44 = arith.constant 0 : index
    %c0_45 = arith.constant 0 : index
    %119 = vector.load %arg11[%c0_44, %c0_45] : memref<16x64xbf16, #tpu.memory_space<vmem>>, vector<16x64xbf16>
    %cst_46 = arith.constant dense<0.000000e+00> : vector<64x64xf32>
    %120 = tpu.matmul %118, %119, %cst_46 {dimension_numbers = #tpu.dot_dimension_numbers<[1], [0], [0], [1], [0, 0, 1, 1], [], []>} : vector<64x16xbf16>, vector<16x64xbf16>, vector<64x64xf32> -> vector<64x64xf32>
    %c0_47 = arith.constant 0 : index
    %c0_48 = arith.constant 0 : index
    %121 = vector.load %arg12[%c0_47, %c0_48] : memref<1x64xf32, #tpu.memory_space<vmem>>, vector<1x64xf32>
    %122 = vector.broadcast %121 : vector<1x64xf32> to vector<64x64xf32>
    %123 = arith.addf %120, %122 : vector<64x64xf32>
    %124 = arith.mulf %123, %123 : vector<64x64xf32>
    %125 = arith.mulf %123, %124 : vector<64x64xf32>
    %cst_49 = arith.constant 4.471500e-02 : f32
    %126 = vector.broadcast %cst_49 : f32 to vector<64x64xf32>
    %127 = arith.mulf %126, %125 : vector<64x64xf32>
    %128 = arith.addf %123, %127 : vector<64x64xf32>
    %cst_50 = arith.constant 0.797884583 : f32
    %129 = vector.broadcast %cst_50 : f32 to vector<64x64xf32>
    %130 = arith.mulf %129, %128 : vector<64x64xf32>
    %131 = math.tanh %130 : vector<64x64xf32>
    %cst_51 = arith.constant 1.000000e+00 : f32
    %132 = vector.broadcast %cst_51 : f32 to vector<64x64xf32>
    %133 = arith.addf %132, %131 : vector<64x64xf32>
    %cst_52 = arith.constant 5.000000e-01 : f32
    %134 = vector.broadcast %cst_52 : f32 to vector<64x64xf32>
    %135 = arith.mulf %134, %133 : vector<64x64xf32>
    %136 = arith.mulf %123, %135 : vector<64x64xf32>
    %137 = arith.truncf %136 : vector<64x64xf32> to vector<64x64xbf16>
    %c0_53 = arith.constant 0 : index
    %c0_54 = arith.constant 0 : index
    %138 = vector.load %arg13[%c0_53, %c0_54] : memref<64x16xbf16, #tpu.memory_space<vmem>>, vector<64x16xbf16>
    %cst_55 = arith.constant dense<0.000000e+00> : vector<64x16xf32>
    %139 = tpu.matmul %137, %138, %cst_55 {dimension_numbers = #tpu.dot_dimension_numbers<[1], [0], [0], [1], [0, 0, 1, 1], [], []>} : vector<64x64xbf16>, vector<64x16xbf16>, vector<64x16xf32> -> vector<64x16xf32>
    %c0_56 = arith.constant 0 : index
    %c0_57 = arith.constant 0 : index
    %140 = vector.load %arg14[%c0_56, %c0_57] : memref<1x16xf32, #tpu.memory_space<vmem>>, vector<1x16xf32>
    %141 = vector.broadcast %140 : vector<1x16xf32> to vector<64x16xf32>
    %142 = arith.addf %139, %141 : vector<64x16xf32>
    %143 = arith.addf %95, %142 : vector<64x16xf32>
    %144 = arith.truncf %143 : vector<64x16xf32> to vector<64x16xbf16>
    %c0_58 = arith.constant 0 : index
    %c0_59 = arith.constant 0 : index
    %145 = vector.load %arg16[%c0_58, %c0_59] : memref<64x16xbf16, #tpu.memory_space<vmem>>, vector<64x16xbf16>
    tpu.vector_store %arg16[%c0_58, %c0_59], %144 {strides = array<i32>} : memref<64x16xbf16, #tpu.memory_space<vmem>>, vector<64x16xbf16>,
    return
  }
  func.func @transform_0(%arg0: i32) -> (i32, i32) {
    %c0_i32 = arith.constant 0 : i32
    %c0_i32_0 = arith.constant 0 : i32
    return %arg0, %c0_i32 : i32, i32
  }
  func.func @transform_1(%arg0: i32) -> (i32, i32, i32) {
    %c0_i32 = arith.constant 0 : i32
    %c0_i32_0 = arith.constant 0 : i32
    %c0_i32_1 = arith.constant 0 : i32
    %c0_i32_2 = arith.constant 0 : i32
    return %c0_i32, %c0_i32_0, %c0_i32_1 : i32, i32, i32
  }
  func.func @transform_2(%arg0: i32) -> (i32, i32) {
    %c0_i32 = arith.constant 0 : i32
    %c0_i32_0 = arith.constant 0 : i32
    %c0_i32_1 = arith.constant 0 : i32
    return %c0_i32, %c0_i32_0 : i32, i32
  }
  func.func @transform_3(%arg0: i32) -> (i32, i32) {
    %c0_i32 = arith.constant 0 : i32
    %c0_i32_0 = arith.constant 0 : i32
    %c0_i32_1 = arith.constant 0 : i32
    return %c0_i32, %c0_i32_0 : i32, i32
  }
  func.func @transform_4(%arg0: i32) -> (i32, i32) {
    %c0_i32 = arith.constant 0 : i32
    %c0_i32_0 = arith.constant 0 : i32
    %c0_i32_1 = arith.constant 0 : i32
    return %c0_i32, %c0_i32_0 : i32, i32
  }
  func.func @transform_5(%arg0: i32) -> (i32, i32) {
    %c0_i32 = arith.constant 0 : i32
    %c0_i32_0 = arith.constant 0 : i32
    %c0_i32_1 = arith.constant 0 : i32
    return %c0_i32, %c0_i32_0 : i32, i32
  }
  func.func @transform_6(%arg0: i32) -> (i32, i32) {
    %c0_i32 = arith.constant 0 : i32
    %c0_i32_0 = arith.constant 0 : i32
    %c0_i32_1 = arith.constant 0 : i32
    return %c0_i32, %c0_i32_0 : i32, i32
  }
  func.func @transform_7(%arg0: i32) -> (i32, i32) {
    %c0_i32 = arith.constant 0 : i32
    %c0_i32_0 = arith.constant 0 : i32
    %c0_i32_1 = arith.constant 0 : i32
    return %c0_i32, %c0_i32_0 : i32, i32
  }
  func.func @transform_8(%arg0: i32) -> (i32, i32) {
    %c0_i32 = arith.constant 0 : i32
    %c0_i32_0 = arith.constant 0 : i32
    %c0_i32_1 = arith.constant 0 : i32
    return %c0_i32, %c0_i32_0 : i32, i32
  }
  func.func @transform_9(%arg0: i32) -> (i32, i32) {
    %c0_i32 = arith.constant 0 : i32
    %c0_i32_0 = arith.constant 0 : i32
    %c0_i32_1 = arith.constant 0 : i32
    return %c0_i32, %c0_i32_0 : i32, i32
  }
  func.func @transform_10(%arg0: i32) -> (i32, i32) {
    %c0_i32 = arith.constant 0 : i32
    %c0_i32_0 = arith.constant 0 : i32
    %c0_i32_1 = arith.constant 0 : i32
    return %c0_i32, %c0_i32_0 : i32, i32
  }
  func.func @transform_11(%arg0: i32) -> (i32, i32) {
    %c0_i32 = arith.constant 0 : i32
    %c0_i32_0 = arith.constant 0 : i32
    %c0_i32_1 = arith.constant 0 : i32
    return %c0_i32, %c0_i32_0 : i32, i32
  }
  func.func @transform_12(%arg0: i32) -> (i32, i32) {
    %c0_i32 = arith.constant 0 : i32
    %c0_i32_0 = arith.constant 0 : i32
    %c0_i32_1 = arith.constant 0 : i32
    return %c0_i32, %c0_i32_0 : i32, i32
  }
  func.func @transform_13(%arg0: i32) -> (i32, i32) {
    %c0_i32 = arith.constant 0 : i32
    %c0_i32_0 = arith.constant 0 : i32
    %c0_i32_1 = arith.constant 0 : i32
    return %c0_i32, %c0_i32_0 : i32, i32
  }
  func.func @transform_14(%arg0: i32) -> (i32, i32, i32) {
    %c1_i32 = arith.constant 1 : i32
    %c0_i32 = arith.constant 0 : i32
    %0 = arith.cmpi eq, %c1_i32, %c0_i32 : i32
    %c1_i32_0 = arith.constant 1 : i32
    %1 = arith.select %0, %c1_i32_0, %c1_i32 : i32
    %2 = arith.remsi %arg0, %1 : i32
    %c0_i32_1 = arith.constant 0 : i32
    %3 = arith.cmpi ne, %2, %c0_i32_1 : i32
    %c0_i32_2 = arith.constant 0 : i32
    %4 = arith.cmpi slt, %2, %c0_i32_2 : i32
    %c0_i32_3 = arith.constant 0 : i32
    %5 = arith.cmpi slt, %1, %c0_i32_3 : i32
    %6 = arith.xori %4, %5 : i1
    %7 = arith.andi %6, %3 : i1
    %8 = arith.addi %2, %1 : i32
    %9 = arith.select %7, %8, %2 : i32
    %c0_i32_4 = arith.constant 0 : i32
    %c0_i32_5 = arith.constant 0 : i32
    %c0_i32_6 = arith.constant 0 : i32
    return %9, %c0_i32_4, %c0_i32_5 : i32, i32, i32
  }
  func.func @transform_15(%arg0: i32) -> (i32, i32) {
    %c0_i32 = arith.constant 0 : i32
    %c0_i32_0 = arith.constant 0 : i32
    return %arg0, %c0_i32 : i32, i32
  }
}

module attributes {stable_mosaic.version = 11 : i64} {
  func.func @patch_expand_kernel(%arg0: i32, %arg1: memref<64x16xbf16, #tpu.memory_space<vmem>>, %arg2: memref<16x32xbf16, #tpu.memory_space<vmem>>, %arg3: memref<1x8xf32, #tpu.memory_space<vmem>>, %arg4: memref<1x8xf32, #tpu.memory_space<vmem>>, %arg5: memref<64x32xbf16, #tpu.memory_space<vmem>>) attributes {dimension_semantics = [#tpu.dimension_semantics<parallel>], iteration_bounds = array<i64: 2>, scalar_prefetch = 0 : i64, scratch_operands = 0 : i64, tpu.core_type = #tpu.core_type<tc>, window_params = [{transform_indices = @transform_0, window_bounds = array<i64: 64, 16>}, {pipeline_mode = #tpu.pipeline_mode<synchronous>, transform_indices = @transform_1, window_bounds = array<i64: 16, 32>}, {pipeline_mode = #tpu.pipeline_mode<synchronous>, transform_indices = @transform_2, window_bounds = array<i64: 1, 8>}, {pipeline_mode = #tpu.pipeline_mode<synchronous>, transform_indices = @transform_3, window_bounds = array<i64: 1, 8>}, {transform_indices = @transform_4, window_bounds = array<i64: 64, 32>}]} {
    %c0 = arith.constant 0 : index
    %c0_0 = arith.constant 0 : index
    %0 = vector.load %arg1[%c0, %c0_0] : memref<64x16xbf16, #tpu.memory_space<vmem>>, vector<64x16xbf16>
    %c0_1 = arith.constant 0 : index
    %c0_2 = arith.constant 0 : index
    %1 = vector.load %arg2[%c0_1, %c0_2] : memref<16x32xbf16, #tpu.memory_space<vmem>>, vector<16x32xbf16>
    %cst = arith.constant dense<0.000000e+00> : vector<64x32xf32>
    %2 = tpu.matmul %0, %1, %cst {dimension_numbers = #tpu.dot_dimension_numbers<[1], [0], [0], [1], [0, 0, 1, 1], [], []>} : vector<64x16xbf16>, vector<16x32xbf16>, vector<64x32xf32> -> vector<64x32xf32>
    %c0_3 = arith.constant 0 : index
    %c0_4 = arith.constant 0 : index
    %3 = vector.load %arg3[%c0_3, %c0_4] : memref<1x8xf32, #tpu.memory_space<vmem>>, vector<1x8xf32>
    %c0_5 = arith.constant 0 : index
    %c0_6 = arith.constant 0 : index
    %4 = vector.load %arg4[%c0_5, %c0_6] : memref<1x8xf32, #tpu.memory_space<vmem>>, vector<1x8xf32>
    %5 = vector.extract_strided_slice %2 {offsets = [0, 0], sizes = [64, 8], strides = [1, 1]} : vector<64x32xf32> to vector<64x8xf32>
    %cst_7 = arith.constant dense<0.000000e+00> : vector<64xf32>
    %6 = vector.multi_reduction <add>, %5, %cst_7 [1] : vector<64x8xf32> to vector<64xf32>
    %7 = vector.shape_cast %6 : vector<64xf32> to vector<64x1xf32>
    %cst_8 = arith.constant 8.000000e+00 : f32
    %8 = vector.broadcast %cst_8 : f32 to vector<64x1xf32>
    %9 = arith.divf %7, %8 : vector<64x1xf32>
    %10 = vector.broadcast %9 : vector<64x1xf32> to vector<64x8xf32>
    %11 = arith.subf %5, %10 : vector<64x8xf32>
    %12 = arith.mulf %11, %11 : vector<64x8xf32>
    %cst_9 = arith.constant dense<0.000000e+00> : vector<64xf32>
    %13 = vector.multi_reduction <add>, %12, %cst_9 [1] : vector<64x8xf32> to vector<64xf32>
    %14 = vector.shape_cast %13 : vector<64xf32> to vector<64x1xf32>
    %cst_10 = arith.constant 8.000000e+00 : f32
    %15 = vector.broadcast %cst_10 : f32 to vector<64x1xf32>
    %16 = arith.divf %14, %15 : vector<64x1xf32>
    %cst_11 = arith.constant 9.99999974E-6 : f32
    %17 = vector.broadcast %cst_11 : f32 to vector<64x1xf32>
    %18 = arith.addf %16, %17 : vector<64x1xf32>
    %19 = math.rsqrt %18 : vector<64x1xf32>
    %20 = vector.broadcast %19 : vector<64x1xf32> to vector<64x8xf32>
    %21 = arith.mulf %11, %20 : vector<64x8xf32>
    %22 = vector.broadcast %3 : vector<1x8xf32> to vector<64x8xf32>
    %23 = arith.mulf %21, %22 : vector<64x8xf32>
    %24 = vector.broadcast %4 : vector<1x8xf32> to vector<64x8xf32>
    %25 = arith.addf %23, %24 : vector<64x8xf32>
    %26 = arith.truncf %25 : vector<64x8xf32> to vector<64x8xbf16>
    %c0_12 = arith.constant 0 : index
    %c0_13 = arith.constant 0 : index
    %27 = vector.load %arg5[%c0_12, %c0_13] : memref<64x32xbf16, #tpu.memory_space<vmem>>, vector<64x8xbf16>
    tpu.vector_store %arg5[%c0_12, %c0_13], %26 {strides = array<i32>} : memref<64x32xbf16, #tpu.memory_space<vmem>>, vector<64x8xbf16>,
    %28 = vector.extract_strided_slice %2 {offsets = [0, 8], sizes = [64, 8], strides = [1, 1]} : vector<64x32xf32> to vector<64x8xf32>
    %cst_14 = arith.constant dense<0.000000e+00> : vector<64xf32>
    %29 = vector.multi_reduction <add>, %28, %cst_14 [1] : vector<64x8xf32> to vector<64xf32>
    %30 = vector.shape_cast %29 : vector<64xf32> to vector<64x1xf32>
    %cst_15 = arith.constant 8.000000e+00 : f32
    %31 = vector.broadcast %cst_15 : f32 to vector<64x1xf32>
    %32 = arith.divf %30, %31 : vector<64x1xf32>
    %33 = vector.broadcast %32 : vector<64x1xf32> to vector<64x8xf32>
    %34 = arith.subf %28, %33 : vector<64x8xf32>
    %35 = arith.mulf %34, %34 : vector<64x8xf32>
    %cst_16 = arith.constant dense<0.000000e+00> : vector<64xf32>
    %36 = vector.multi_reduction <add>, %35, %cst_16 [1] : vector<64x8xf32> to vector<64xf32>
    %37 = vector.shape_cast %36 : vector<64xf32> to vector<64x1xf32>
    %cst_17 = arith.constant 8.000000e+00 : f32
    %38 = vector.broadcast %cst_17 : f32 to vector<64x1xf32>
    %39 = arith.divf %37, %38 : vector<64x1xf32>
    %cst_18 = arith.constant 9.99999974E-6 : f32
    %40 = vector.broadcast %cst_18 : f32 to vector<64x1xf32>
    %41 = arith.addf %39, %40 : vector<64x1xf32>
    %42 = math.rsqrt %41 : vector<64x1xf32>
    %43 = vector.broadcast %42 : vector<64x1xf32> to vector<64x8xf32>
    %44 = arith.mulf %34, %43 : vector<64x8xf32>
    %45 = vector.broadcast %3 : vector<1x8xf32> to vector<64x8xf32>
    %46 = arith.mulf %44, %45 : vector<64x8xf32>
    %47 = vector.broadcast %4 : vector<1x8xf32> to vector<64x8xf32>
    %48 = arith.addf %46, %47 : vector<64x8xf32>
    %49 = arith.truncf %48 : vector<64x8xf32> to vector<64x8xbf16>
    %c0_19 = arith.constant 0 : index
    %c8 = arith.constant 8 : index
    %50 = vector.load %arg5[%c0_19, %c8] : memref<64x32xbf16, #tpu.memory_space<vmem>>, vector<64x8xbf16>
    tpu.vector_store %arg5[%c0_19, %c8], %49 {strides = array<i32>} : memref<64x32xbf16, #tpu.memory_space<vmem>>, vector<64x8xbf16>,
    %51 = vector.extract_strided_slice %2 {offsets = [0, 16], sizes = [64, 8], strides = [1, 1]} : vector<64x32xf32> to vector<64x8xf32>
    %cst_20 = arith.constant dense<0.000000e+00> : vector<64xf32>
    %52 = vector.multi_reduction <add>, %51, %cst_20 [1] : vector<64x8xf32> to vector<64xf32>
    %53 = vector.shape_cast %52 : vector<64xf32> to vector<64x1xf32>
    %cst_21 = arith.constant 8.000000e+00 : f32
    %54 = vector.broadcast %cst_21 : f32 to vector<64x1xf32>
    %55 = arith.divf %53, %54 : vector<64x1xf32>
    %56 = vector.broadcast %55 : vector<64x1xf32> to vector<64x8xf32>
    %57 = arith.subf %51, %56 : vector<64x8xf32>
    %58 = arith.mulf %57, %57 : vector<64x8xf32>
    %cst_22 = arith.constant dense<0.000000e+00> : vector<64xf32>
    %59 = vector.multi_reduction <add>, %58, %cst_22 [1] : vector<64x8xf32> to vector<64xf32>
    %60 = vector.shape_cast %59 : vector<64xf32> to vector<64x1xf32>
    %cst_23 = arith.constant 8.000000e+00 : f32
    %61 = vector.broadcast %cst_23 : f32 to vector<64x1xf32>
    %62 = arith.divf %60, %61 : vector<64x1xf32>
    %cst_24 = arith.constant 9.99999974E-6 : f32
    %63 = vector.broadcast %cst_24 : f32 to vector<64x1xf32>
    %64 = arith.addf %62, %63 : vector<64x1xf32>
    %65 = math.rsqrt %64 : vector<64x1xf32>
    %66 = vector.broadcast %65 : vector<64x1xf32> to vector<64x8xf32>
    %67 = arith.mulf %57, %66 : vector<64x8xf32>
    %68 = vector.broadcast %3 : vector<1x8xf32> to vector<64x8xf32>
    %69 = arith.mulf %67, %68 : vector<64x8xf32>
    %70 = vector.broadcast %4 : vector<1x8xf32> to vector<64x8xf32>
    %71 = arith.addf %69, %70 : vector<64x8xf32>
    %72 = arith.truncf %71 : vector<64x8xf32> to vector<64x8xbf16>
    %c0_25 = arith.constant 0 : index
    %c16 = arith.constant 16 : index
    %73 = vector.load %arg5[%c0_25, %c16] : memref<64x32xbf16, #tpu.memory_space<vmem>>, vector<64x8xbf16>
    tpu.vector_store %arg5[%c0_25, %c16], %72 {strides = array<i32>} : memref<64x32xbf16, #tpu.memory_space<vmem>>, vector<64x8xbf16>,
    %74 = vector.extract_strided_slice %2 {offsets = [0, 24], sizes = [64, 8], strides = [1, 1]} : vector<64x32xf32> to vector<64x8xf32>
    %cst_26 = arith.constant dense<0.000000e+00> : vector<64xf32>
    %75 = vector.multi_reduction <add>, %74, %cst_26 [1] : vector<64x8xf32> to vector<64xf32>
    %76 = vector.shape_cast %75 : vector<64xf32> to vector<64x1xf32>
    %cst_27 = arith.constant 8.000000e+00 : f32
    %77 = vector.broadcast %cst_27 : f32 to vector<64x1xf32>
    %78 = arith.divf %76, %77 : vector<64x1xf32>
    %79 = vector.broadcast %78 : vector<64x1xf32> to vector<64x8xf32>
    %80 = arith.subf %74, %79 : vector<64x8xf32>
    %81 = arith.mulf %80, %80 : vector<64x8xf32>
    %cst_28 = arith.constant dense<0.000000e+00> : vector<64xf32>
    %82 = vector.multi_reduction <add>, %81, %cst_28 [1] : vector<64x8xf32> to vector<64xf32>
    %83 = vector.shape_cast %82 : vector<64xf32> to vector<64x1xf32>
    %cst_29 = arith.constant 8.000000e+00 : f32
    %84 = vector.broadcast %cst_29 : f32 to vector<64x1xf32>
    %85 = arith.divf %83, %84 : vector<64x1xf32>
    %cst_30 = arith.constant 9.99999974E-6 : f32
    %86 = vector.broadcast %cst_30 : f32 to vector<64x1xf32>
    %87 = arith.addf %85, %86 : vector<64x1xf32>
    %88 = math.rsqrt %87 : vector<64x1xf32>
    %89 = vector.broadcast %88 : vector<64x1xf32> to vector<64x8xf32>
    %90 = arith.mulf %80, %89 : vector<64x8xf32>
    %91 = vector.broadcast %3 : vector<1x8xf32> to vector<64x8xf32>
    %92 = arith.mulf %90, %91 : vector<64x8xf32>
    %93 = vector.broadcast %4 : vector<1x8xf32> to vector<64x8xf32>
    %94 = arith.addf %92, %93 : vector<64x8xf32>
    %95 = arith.truncf %94 : vector<64x8xf32> to vector<64x8xbf16>
    %c0_31 = arith.constant 0 : index
    %c24 = arith.constant 24 : index
    %96 = vector.load %arg5[%c0_31, %c24] : memref<64x32xbf16, #tpu.memory_space<vmem>>, vector<64x8xbf16>
    tpu.vector_store %arg5[%c0_31, %c24], %95 {strides = array<i32>} : memref<64x32xbf16, #tpu.memory_space<vmem>>, vector<64x8xbf16>,
    return
  }
  func.func @transform_0(%arg0: i32) -> (i32, i32) {
    %c0_i32 = arith.constant 0 : i32
    %c0_i32_0 = arith.constant 0 : i32
    return %arg0, %c0_i32 : i32, i32
  }
  func.func @transform_1(%arg0: i32) -> (i32, i32) {
    %c0_i32 = arith.constant 0 : i32
    %c0_i32_0 = arith.constant 0 : i32
    %c0_i32_1 = arith.constant 0 : i32
    return %c0_i32, %c0_i32_0 : i32, i32
  }
  func.func @transform_2(%arg0: i32) -> (i32, i32) {
    %c0_i32 = arith.constant 0 : i32
    %c0_i32_0 = arith.constant 0 : i32
    %c0_i32_1 = arith.constant 0 : i32
    return %c0_i32, %c0_i32_0 : i32, i32
  }
  func.func @transform_3(%arg0: i32) -> (i32, i32) {
    %c0_i32 = arith.constant 0 : i32
    %c0_i32_0 = arith.constant 0 : i32
    %c0_i32_1 = arith.constant 0 : i32
    return %c0_i32, %c0_i32_0 : i32, i32
  }
  func.func @transform_4(%arg0: i32) -> (i32, i32) {
    %c0_i32 = arith.constant 0 : i32
    %c0_i32_0 = arith.constant 0 : i32
    return %arg0, %c0_i32 : i32, i32
  }
}

</mosaic_0001>

<llo_original>
// kernel: basic_block_up_forward.5
$region0: #{basic_block_up_forward.5}
  #allocation0 [shape = 'u32[]', space=smem, size = 0x4, offset = 0x4, fixed_abs, tag = 'smem constant byte address 0x4 - core index']
  #allocation1 [shape = 'u32[72,128]{1,0:T(1,128)}', space=vmem, size = 0x9000, scoped, tag = 'internal scratch']
  %s0 = inlined_call_operand.vmem [shape: bf16[128,16], index: 0, kind: input, shape index: {}]
  %s1 = inlined_call_operand.vmem [shape: bf16[16,32], index: 1, kind: input, shape index: {}]
  %s2 = inlined_call_operand.vmem [shape: f32[1,8], index: 2, kind: input, shape index: {}]
  %s3 = inlined_call_operand.vmem [shape: f32[1,8], index: 3, kind: input, shape index: {}]
  %s4 = inlined_call_operand.vmem [shape: bf16[128,32], index: 4, kind: output, shape index: {}]
  %s5 = sld [smem:[#allocation0]]
  $region49: #{basic_block_up_forward.5} parent=0
    _
  %s7 = ssub.s32 1, %s5
  %s8 = scalar_select 0, %s7, %s5
  loop: start=0, step=1, limit=4
  $region2: #{basic_block_up_forward.5} parent=0 // loop_pre_header
    _
  $region3: #{basic_block_up_forward.5} parent=0 // loop_header
    %s10 = sphi 0, %s14
    %p11 = scmp.ge.s32.totalorder %s10, 4
    %s20 = sphi 0, %s22
    %s23 = sphi 0, %s20
    %s24 = sphi 0, %s23
    %s40 = sphi 0, %s24
    %s44 = sphi 0, %s44
    %s46 = sphi 0, %s44
    %s47 = sphi 0, %s46
    %s61 = sphi 0, %s47
    %s65 = sphi 0, %s65
    %s67 = sphi 0, %s65
    %s68 = sphi 0, %s67
    %s82 = sphi 0, %s68
    %s86 = sphi 0, %s86
    %s88 = sphi 0, %s86
    %s89 = sphi 0, %s88
    %s103 = sphi 0, %s89
    %s109 = sphi 0, %s111
    %s112 = sphi 0, %s109
    %s113 = sphi 0, %s112
    %s129 = sphi 0, %s113
  $region4: #{basic_block_up_forward.5} parent=0 // loop_header_branch
    %13 = sbr.rel (%p11) target = $region8
  $region5: #{basic_block_up_forward.5} parent=0 // loop_body
    %s15 = ssub.s32 %s10, 1
    %s16 = ssub.s32 %s10, 2
    %s17 = sadd.s32 %s10, 1
    %s18 = ssub.s32 %s10, %s17
    %p19 = scmp.eq.s32.totalorder %s18, 0
    %s21 = sadd.s32 %s20, 1
    %s22 = scalar_select %p19, %s20, %s21
    %p25 = pneg %p19
    %p26 = scmp.eq.s32.totalorder %s10, 1
    %p27 = por %p25, %p26
    %p28 = scmp.ne.s32.totalorder %s20, %s23
    %p29 = scmp.eq.s32.totalorder %s10, 0
    %p30 = por %p28, %p29
    %p31 = scmp.ne.s32.totalorder %s20, %s23
    %p32 = scmp.eq.s32.totalorder %s15, 1
    %p33 = por %p31, %p32
    %p34 = scmp.ne.s32.totalorder %s23, %s24
    %p35 = scmp.eq.s32.totalorder %s15, 0
    %p36 = por %p34, %p35
    %p37 = scmp.ne.s32.totalorder %s23, %s24
    %p38 = scmp.eq.s32.totalorder %s16, 1
    %p39 = por %p37, %p38
    %p41 = scmp.ne.s32.totalorder %s24, %s40
    %p42 = scmp.eq.s32.totalorder %s16, 0
    %p43 = por %p41, %p42
    %s45 = sadd.s32 %s44, 1
    %p48 = scmp.eq.s32.totalorder %s10, 1
    %p49 = scmp.ne.s32.totalorder %s44, %s46
    %p50 = scmp.eq.s32.totalorder %s10, 0
    %p51 = por %p49, %p50
    %p52 = scmp.ne.s32.totalorder %s44, %s46
    %p53 = scmp.eq.s32.totalorder %s15, 1
    %p54 = por %p52, %p53
    %p55 = scmp.ne.s32.totalorder %s46, %s47
    %p56 = scmp.eq.s32.totalorder %s15, 0
    %p57 = por %p55, %p56
    %p58 = scmp.ne.s32.totalorder %s46, %s47
    %p59 = scmp.eq.s32.totalorder %s16, 1
    %p60 = por %p58, %p59
    %p62 = scmp.ne.s32.totalorder %s47, %s61
    %p63 = scmp.eq.s32.totalorder %s16, 0
    %p64 = por %p62, %p63
    %s66 = sadd.s32 %s65, 1
    %p69 = scmp.eq.s32.totalorder %s10, 1
    %p70 = scmp.ne.s32.totalorder %s65, %s67
    %p71 = scmp.eq.s32.totalorder %s10, 0
    %p72 = por %p70, %p71
    %p73 = scmp.ne.s32.totalorder %s65, %s67
    %p74 = scmp.eq.s32.totalorder %s15, 1
    %p75 = por %p73, %p74
    %p76 = scmp.ne.s32.totalorder %s67, %s68
    %p77 = scmp.eq.s32.totalorder %s15, 0
    %p78 = por %p76, %p77
    %p79 = scmp.ne.s32.totalorder %s67, %s68
    %p80 = scmp.eq.s32.totalorder %s16, 1
    %p81 = por %p79, %p80
    %p83 = scmp.ne.s32.totalorder %s68, %s82
    %p84 = scmp.eq.s32.totalorder %s16, 0
    %p85 = por %p83, %p84
    %s87 = sadd.s32 %s86, 1
    %p90 = scmp.eq.s32.totalorder %s10, 1
    %p91 = scmp.ne.s32.totalorder %s86, %s88
    %p92 = scmp.eq.s32.totalorder %s10, 0
    %p93 = por %p91, %p92
    %p94 = scmp.ne.s32.totalorder %s86, %s88
    %p95 = scmp.eq.s32.totalorder %s15, 1
    %p96 = por %p94, %p95
    %p97 = scmp.ne.s32.totalorder %s88, %s89
    %p98 = scmp.eq.s32.totalorder %s15, 0
    %p99 = por %p97, %p98
    %p100 = scmp.ne.s32.totalorder %s88, %s89
    %p101 = scmp.eq.s32.totalorder %s16, 1
    %p102 = por %p100, %p101
    %p104 = scmp.ne.s32.totalorder %s89, %s103
    %p105 = scmp.eq.s32.totalorder %s16, 0
    %p106 = por %p104, %p105
    %s107 = ssub.s32 %s10, %s17
    %p108 = scmp.eq.s32.totalorder %s107, 0
    %s110 = sadd.s32 %s109, 1
    %s111 = scalar_select %p108, %s109, %s110
    %p114 = pneg %p108
    %p115 = scmp.eq.s32.totalorder %s10, 1
    %p116 = por %p114, %p115
    %p117 = scmp.ne.s32.totalorder %s109, %s112
    %p118 = scmp.eq.s32.totalorder %s10, 0
    %p119 = por %p117, %p118
    %p120 = scmp.ne.s32.totalorder %s109, %s112
    %p121 = scmp.eq.s32.totalorder %s15, 1
    %p122 = por %p120, %p121
    %p123 = scmp.ne.s32.totalorder %s112, %s113
    %p124 = scmp.eq.s32.totalorder %s15, 0
    %p125 = por %p123, %p124
    %p126 = scmp.ne.s32.totalorder %s112, %s113
    %p127 = scmp.eq.s32.totalorder %s16, 1
    %p128 = por %p126, %p127
    %p130 = scmp.ne.s32.totalorder %s113, %s129
    %p131 = scmp.eq.s32.totalorder %s16, 0
    %p132 = por %p130, %p131
    %p133 = scmp.le.s32.totalorder 1, %s10
    %p134 = scmp.lt.s32.totalorder %s10, 3
    %p135 = pnand %p133, %p134
    %p136 = pneg %p135
    // Predicated region
    $region9: #{basic_block_up_forward.5} parent=5 // pred_check
      _
    $region10: #{basic_block_up_forward.5} parent=5 // pred_check_branch
      %138 = sbr.rel (%p135) target = $region12
    $region11: #{basic_block_up_forward.5} parent=5 // pred_region
      %s139 = ssub.s32 %s10, 1
      // Predicated region
      $region13: #{basic_block_up_forward.5} parent=11 // pred_check
        %p140 = pneg %p57
      $region14: #{basic_block_up_forward.5} parent=11 // pred_check_branch
        %142 = sbr.rel (%p140) target = $region16
      $region15: #{basic_block_up_forward.5} parent=11 // pred_region
        _
      $region16: #{basic_block_up_forward.5} parent=11 // pred_fallthru
        _
      // Predicated region
      $region17: #{basic_block_up_forward.5} parent=11 // pred_check
        %p143 = pneg %p78
      $region18: #{basic_block_up_forward.5} parent=11 // pred_check_branch
        %145 = sbr.rel (%p143) target = $region20
      $region19: #{basic_block_up_forward.5} parent=11 // pred_region
        _
      $region20: #{basic_block_up_forward.5} parent=11 // pred_fallthru
        _
      // Predicated region
      $region21: #{basic_block_up_forward.5} parent=11 // pred_check
        %p146 = pneg %p99
      $region22: #{basic_block_up_forward.5} parent=11 // pred_check_branch
        %148 = sbr.rel (%p146) target = $region24
      $region23: #{basic_block_up_forward.5} parent=11 // pred_region
        _
      $region24: #{basic_block_up_forward.5} parent=11 // pred_fallthru
        _
    $region12: #{basic_block_up_forward.5} parent=5 // pred_fallthru
      _
    %p149 = scmp.lt.s32.totalorder %s10, 2
    // Predicated region
    $region25: #{basic_block_up_forward.5} parent=5 // pred_check
      %p150 = pneg %p149
    $region26: #{basic_block_up_forward.5} parent=5 // pred_check_branch
      %152 = sbr.rel (%p150) target = $region28
    $region27: #{basic_block_up_forward.5} parent=5 // pred_region
      // Predicated region
      $region29: #{basic_block_up_forward.5} parent=27 // pred_check
        %p153 = pneg %p30
      $region30: #{basic_block_up_forward.5} parent=27 // pred_check_branch
        %155 = sbr.rel (%p153) target = $region32
      $region31: #{basic_block_up_forward.5} parent=27 // pred_region
        %s156 = smul.u32 8, %s10
        %p157 = scmp.lt.s32.totalorder %s156, 15
        %s158 = scalar_select %p157, %s156, 15
        %s159 = smul.addr %s158, 4
        %s160 = scalar_lea.vmem %s0, %s159
        %s161 = smul.u32 8, %s10
      $region32: #{basic_block_up_forward.5} parent=27 // pred_fallthru
        _
    $region28: #{basic_block_up_forward.5} parent=5 // pred_fallthru
      _
    %p162 = scmp.le.s32.totalorder 1, %s10
    %p163 = scmp.lt.s32.totalorder %s10, 3
    %p164 = pnand %p162, %p163
    %p165 = pneg %p164
    // Predicated region
    $region33: #{basic_block_up_forward.5} parent=5 // pred_check
      _
    $region34: #{basic_block_up_forward.5} parent=5 // pred_check_branch
      %167 = sbr.rel (%p164) target = $region36
    $region35: #{basic_block_up_forward.5} parent=5 // pred_region
      %s168 = ssub.s32 %s10, 1
      %s169 = smul.u32 8, %s15
      %p170 = scmp.lt.s32.totalorder %s169, 15
      %s171 = scalar_select %p170, %s169, 15
      %s172 = smul.addr %s171, 4
      %s173 = scalar_lea.vmem %s0, %s172
      %p174 = pneg %p36
      %p175 = pneg %p33
      %p176 = pneg %p57
      %p177 = pneg %p54
      %p178 = pneg %p78
      %p179 = pneg %p75
      %p180 = pneg %p99
      %p181 = pneg %p96
      %p182 = pneg %p125
      %p183 = pneg %p122
      %s184 = smul.u32 8, %s15
      %p185 = scmp.lt.s32.totalorder %s184, 15
      %s186 = scalar_select %p185, %s184, 15
      %s187 = smul.addr %s186, 4
      %s188 = scalar_lea.vmem %s4, %s187
      %s189 = smul.u32 8, %s15
      %p190 = scmp.lt.s32.totalorder %s189, 15
      %s191 = scalar_select %p190, %s189, 15
      %s192 = smul.addr %s191, 4
      %s193 = scalar_lea.vmem %s0, %s192
      %s194 = smul.u32 8, %s15
      %s195 = smul.u32 8, %s15
      %p196 = scmp.lt.s32.totalorder %s195, 15
      %s197 = scalar_select %p196, %s195, 15
      %s198 = smul.addr %s197, 4
      %s199 = scalar_lea.vmem %s4, %s198
      %s200 = smul.u32 8, %s15
      %v202 = vld [vmem:[%s193] sm:$0xf]
      %v203 = vld [vmem:[%s193 + $0x4] sm:$0xf]
      %v204 = vld [vmem:[%s193 + $0x8] sm:$0xf]
      %v205 = vld [vmem:[%s193 + $0xc] sm:$0xf]
      %v206 = vld [vmem:[%s193 + $0x10] sm:$0xf]
      %v207 = vld [vmem:[%s193 + $0x14] sm:$0xf]
      %v208 = vld [vmem:[%s193 + $0x18] sm:$0xf]
      %v209 = vld [vmem:[%s193 + $0x1c] sm:$0xf]
      %v210 = vld [vmem:[%s1] sm:$0xf]
      %v211 = vld [vmem:[%s1 + $0x4] sm:$0xf]
      %v220 = vunpack.c.l.b16 %v202
      %v221 = vunpack.c.l.b16 %v203
      %v222 = vunpack.c.l.b16 %v204
      %v223 = vunpack.c.l.b16 %v205
      %v224 = vunpack.c.l.b16 %v206
      %v225 = vunpack.c.l.b16 %v207
      %v226 = vunpack.c.l.b16 %v208
      %v227 = vunpack.c.l.b16 %v209
      %v228 = vpack.c.b16 %v221, %v220
      %v229 = vpack.c.b16 %v223, %v222
      %v230 = vpack.c.b16 %v225, %v224
      %v231 = vpack.c.b16 %v227, %v226
      %v234 = vunpack.c.l.b16 %v210
      %v235 = vunpack.c.l.b16 %v211
      %v236 = vpack.c.b16 %v235, %v234
      %vm238 = vcmask 130048
      %v240 = vsel %vm238, %v228, 0
      %v243 = vsel %vm238, %v229, 0
      %v246 = vsel %vm238, %v230, 0
      %v249 = vsel %vm238, %v231, 0
      %251 = vmatpush.bf16.msra.mxu0 0
      %252 = vmatpush.bf16.msra.mxu0 0
      %253 = vmatpush.bf16.msra.mxu0 0
      %254 = vmatpush.bf16.msra.mxu0 0
      %255 = vmatpush.bf16.msra.mxu0 0
      %256 = vmatpush.bf16.msra.mxu0 0
      %257 = vmatpush.bf16.msra.mxu0 0
      %258 = vmatpush.bf16.msra.mxu0 %v236
      %259 = vmatmul.bf16.gmra.mxu0 %v240
      %v260 = vpop.f32.mrf.mxu0
      %v261 = vadd.f32 0.0, %v260
      %v262 = vpop.f32.mrf.mxu0
      %v263 = vadd.f32 0.0, %v262
      %264 = vmatmul.bf16.gmra.mxu0 %v243
      %v265 = vpop.f32.mrf.mxu0
      %v266 = vadd.f32 0.0, %v265
      %v267 = vpop.f32.mrf.mxu0
      %v268 = vadd.f32 0.0, %v267
      %269 = vmatmul.bf16.gmra.mxu0 %v246
      %v270 = vpop.f32.mrf.mxu0
      %v271 = vadd.f32 0.0, %v270
      %v272 = vpop.f32.mrf.mxu0
      %v273 = vadd.f32 0.0, %v272
      %274 = vmatmul.bf16.gmra.mxu0 %v249
      %v275 = vpop.f32.mrf.mxu0
      %v276 = vadd.f32 0.0, %v275
      %v277 = vpop.f32.mrf.mxu0
      %v278 = vadd.f32 0.0, %v277
      %279 = vdwg.mxu0
      %v280 = vld [vmem:[%s2] sm:$0x1]
      %v281 = vld [vmem:[%s3] sm:$0x1]
      %vm282 = vcmask 64512
      %v283 = vsel %vm282, %v261, 0.0
      %284 = vadd.xlane.f32.xlu0 %v283
      %v285 = vpop.xlane.xlu0 %284
      %v286 = vsel %vm282, %v263, 0.0
      %287 = vadd.xlane.f32.xlu0 %v286
      %v288 = vpop.xlane.xlu0 %287
      %v289 = vsel %vm282, %v266, 0.0
      %290 = vadd.xlane.f32.xlu0 %v289
      %v291 = vpop.xlane.xlu0 %290
      %v292 = vsel %vm282, %v268, 0.0
      %293 = vadd.xlane.f32.xlu0 %v292
      %v294 = vpop.xlane.xlu0 %293
      %v295 = vsel %vm282, %v271, 0.0
      %296 = vadd.xlane.f32.xlu0 %v295
      %v297 = vpop.xlane.xlu0 %296
      %v298 = vsel %vm282, %v273, 0.0
      %299 = vadd.xlane.f32.xlu0 %v298
      %v300 = vpop.xlane.xlu0 %299
      %v301 = vsel %vm282, %v276, 0.0
      %302 = vadd.xlane.f32.xlu0 %v301
      %v303 = vpop.xlane.xlu0 %302
      %v304 = vsel %vm282, %v278, 0.0
      %305 = vadd.xlane.f32.xlu0 %v304
      %v306 = vpop.xlane.xlu0 %305
      %v307 = vrcp.pop 8.0
      %v308 = vmul.f32 8.0, %v307
      %v309 = vsub.f32 1.0, %v308
      %v310 = vmul.f32 %v307, %v309
      %v311 = vadd.f32 %v307, %v310
      %vm312 = vweird.f32 %v307
      %v313 = vsel %vm312, %v307, %v311
      %v314 = vmul.f32 %v285, %v313
      %v315 = vmul.f32 %v288, %v313
      %v316 = vmul.f32 %v291, %v313
      %v317 = vmul.f32 %v294, %v313
      %v318 = vmul.f32 %v297, %v313
      %v319 = vmul.f32 %v300, %v313
      %v320 = vmul.f32 %v303, %v313
      %v321 = vmul.f32 %v306, %v313
      %v322 = vsub.f32 %v261, %v314
      %v323 = vsub.f32 %v263, %v315
      %v324 = vsub.f32 %v266, %v316
      %v325 = vsub.f32 %v268, %v317
      %v326 = vsub.f32 %v271, %v318
      %v327 = vsub.f32 %v273, %v319
      %v328 = vsub.f32 %v276, %v320
      %v329 = vsub.f32 %v278, %v321
      %v330 = vmul.f32 %v322, %v322
      %v331 = vmul.f32 %v323, %v323
      %v332 = vmul.f32 %v324, %v324
      %v333 = vmul.f32 %v325, %v325
      %v334 = vmul.f32 %v326, %v326
      %v335 = vmul.f32 %v327, %v327
      %v336 = vmul.f32 %v328, %v328
      %v337 = vmul.f32 %v329, %v329
      %v338 = vsel %vm282, %v330, 0.0
      %339 = vadd.xlane.f32.xlu0 %v338
      %v340 = vpop.xlane.xlu0 %339
      %v341 = vsel %vm282, %v331, 0.0
      %342 = vadd.xlane.f32.xlu0 %v341
      %v343 = vpop.xlane.xlu0 %342
      %v344 = vsel %vm282, %v332, 0.0
      %345 = vadd.xlane.f32.xlu0 %v344
      %v346 = vpop.xlane.xlu0 %345
      %v347 = vsel %vm282, %v333, 0.0
      %348 = vadd.xlane.f32.xlu0 %v347
      %v349 = vpop.xlane.xlu0 %348
      %v350 = vsel %vm282, %v334, 0.0
      %351 = vadd.xlane.f32.xlu0 %v350
      %v352 = vpop.xlane.xlu0 %351
      %v353 = vsel %vm282, %v335, 0.0
      %354 = vadd.xlane.f32.xlu0 %v353
      %v355 = vpop.xlane.xlu0 %354
      %v356 = vsel %vm282, %v336, 0.0
      %357 = vadd.xlane.f32.xlu0 %v356
      %v358 = vpop.xlane.xlu0 %357
      %v359 = vsel %vm282, %v337, 0.0
      %360 = vadd.xlane.f32.xlu0 %v359
      %v361 = vpop.xlane.xlu0 %360
      %v362 = vmul.f32 %v340, %v313
      %v363 = vmul.f32 %v343, %v313
      %v364 = vmul.f32 %v346, %v313
      %v365 = vmul.f32 %v349, %v313
      %v366 = vmul.f32 %v352, %v313
      %v367 = vmul.f32 %v355, %v313
      %v368 = vmul.f32 %v358, %v313
      %v369 = vmul.f32 %v361, %v313
      %v370 = vadd.f32 %v362, 1e-05
      %v371 = vadd.f32 %v363, 1e-05
      %v372 = vadd.f32 %v364, 1e-05
      %v373 = vadd.f32 %v365, 1e-05
      %v374 = vadd.f32 %v366, 1e-05
      %v375 = vadd.f32 %v367, 1e-05
      %v376 = vadd.f32 %v368, 1e-05
      %v377 = vadd.f32 %v369, 1e-05
      %v378 = vrsqrt.pop %v370
      %v379 = vmul.f32 %v378, %v370
      %v380 = vmul.f32 %v379, %v378
      %v381 = vmul.f32 0.5, %v380
      %v382 = vsub.f32 1.5, %v381
      %v383 = vmul.f32 %v378, %v382
      %vm384 = vweird.f32 %v370
      %vm385 = vweird.f32 %v378
      %vm386 = vmor %vm384, %vm385
      %v387 = vsel %vm386, %v378, %v383
      %v388 = vrsqrt.pop %v371
      %v389 = vmul.f32 %v388, %v371
      %v390 = vmul.f32 %v389, %v388
      %v391 = vmul.f32 0.5, %v390
      %v392 = vsub.f32 1.5, %v391
      %v393 = vmul.f32 %v388, %v392
      %vm394 = vweird.f32 %v371
      %vm395 = vweird.f32 %v388
      %vm396 = vmor %vm394, %vm395
      %v397 = vsel %vm396, %v388, %v393
      %v398 = vrsqrt.pop %v372
      %v399 = vmul.f32 %v398, %v372
      %v400 = vmul.f32 %v399, %v398
      %v401 = vmul.f32 0.5, %v400
      %v402 = vsub.f32 1.5, %v401
      %v403 = vmul.f32 %v398, %v402
      %vm404 = vweird.f32 %v372
      %vm405 = vweird.f32 %v398
      %vm406 = vmor %vm404, %vm405
      %v407 = vsel %vm406, %v398, %v403
      %v408 = vrsqrt.pop %v373
      %v409 = vmul.f32 %v408, %v373
      %v410 = vmul.f32 %v409, %v408
      %v411 = vmul.f32 0.5, %v410
      %v412 = vsub.f32 1.5, %v411
      %v413 = vmul.f32 %v408, %v412
      %vm414 = vweird.f32 %v373
      %vm415 = vweird.f32 %v408
      %vm416 = vmor %vm414, %vm415
      %v417 = vsel %vm416, %v408, %v413
      %v418 = vrsqrt.pop %v374
      %v419 = vmul.f32 %v418, %v374
      %v420 = vmul.f32 %v419, %v418
      %v421 = vmul.f32 0.5, %v420
      %v422 = vsub.f32 1.5, %v421
      %v423 = vmul.f32 %v418, %v422
      %vm424 = vweird.f32 %v374
      %vm425 = vweird.f32 %v418
      %vm426 = vmor %vm424, %vm425
      %v427 = vsel %vm426, %v418, %v423
      %v428 = vrsqrt.pop %v375
      %v429 = vmul.f32 %v428, %v375
      %v430 = vmul.f32 %v429, %v428
      %v431 = vmul.f32 0.5, %v430
      %v432 = vsub.f32 1.5, %v431
      %v433 = vmul.f32 %v428, %v432
      %vm434 = vweird.f32 %v375
      %vm435 = vweird.f32 %v428
      %vm436 = vmor %vm434, %vm435
      %v437 = vsel %vm436, %v428, %v433
      %v438 = vrsqrt.pop %v376
      %v439 = vmul.f32 %v438, %v376
      %v440 = vmul.f32 %v439, %v438
      %v441 = vmul.f32 0.5, %v440
      %v442 = vsub.f32 1.5, %v441
      %v443 = vmul.f32 %v438, %v442
      %vm444 = vweird.f32 %v376
      %vm445 = vweird.f32 %v438
      %vm446 = vmor %vm444, %vm445
      %v447 = vsel %vm446, %v438, %v443
      %v448 = vrsqrt.pop %v377
      %v449 = vmul.f32 %v448, %v377
      %v450 = vmul.f32 %v449, %v448
      %v451 = vmul.f32 0.5, %v450
      %v452 = vsub.f32 1.5, %v451
      %v453 = vmul.f32 %v448, %v452
      %vm454 = vweird.f32 %v377
      %vm455 = vweird.f32 %v448
      %vm456 = vmor %vm454, %vm455
      %v457 = vsel %vm456, %v448, %v453
      %v458 = vmul.f32 %v322, %v387
      %v459 = vmul.f32 %v323, %v397
      %v460 = vmul.f32 %v324, %v407
      %v461 = vmul.f32 %v325, %v417
      %v462 = vmul.f32 %v326, %v427
      %v463 = vmul.f32 %v327, %v437
      %v464 = vmul.f32 %v328, %v447
      %v465 = vmul.f32 %v329, %v457
      %v467 = vperm.slane %v280, 0
      %v469 = vmul.f32 %v458, %v467
      %v470 = vmul.f32 %v459, %v467
      %v471 = vmul.f32 %v460, %v467
      %v472 = vmul.f32 %v461, %v467
      %v473 = vmul.f32 %v462, %v467
      %v474 = vmul.f32 %v463, %v467
      %v475 = vmul.f32 %v464, %v467
      %v476 = vmul.f32 %v465, %v467
      %v478 = vperm.slane %v281, 0
      %v480 = vadd.f32 %v469, %v478
      %v481 = vadd.f32 %v470, %v478
      %v482 = vadd.f32 %v471, %v478
      %v483 = vadd.f32 %v472, %v478
      %v484 = vadd.f32 %v473, %v478
      %v485 = vadd.f32 %v474, %v478
      %v486 = vadd.f32 %v475, %v478
      %v487 = vadd.f32 %v476, %v478
      %v488 = vpack.c.bf16 %v480, %v480
      %v489 = vpack.c.bf16 %v481, %v481
      %v490 = vpack.c.bf16 %v482, %v482
      %v491 = vpack.c.bf16 %v483, %v483
      %v492 = vpack.c.bf16 %v484, %v484
      %v493 = vpack.c.bf16 %v485, %v485
      %v494 = vpack.c.bf16 %v486, %v486
      %v495 = vpack.c.bf16 %v487, %v487
      %vm496 = vcmask 60416
      %497 = vst.msk [vmem:[%s199] sm:$0xf] %vm496, %v488
      %498 = vst.msk [vmem:[%s199 + $0x4] sm:$0xf] %vm496, %v489
      %499 = vst.msk [vmem:[%s199 + $0x8] sm:$0xf] %vm496, %v490
      %500 = vst.msk [vmem:[%s199 + $0xc] sm:$0xf] %vm496, %v491
      %501 = vst.msk [vmem:[%s199 + $0x10] sm:$0xf] %vm496, %v492
      %502 = vst.msk [vmem:[%s199 + $0x14] sm:$0xf] %vm496, %v493
      %503 = vst.msk [vmem:[%s199 + $0x18] sm:$0xf] %vm496, %v494
      %504 = vst.msk [vmem:[%s199 + $0x1c] sm:$0xf] %vm496, %v495
      %513 = vrot.lane.b32.xlu0 %v261, 120
      %v514 = vpop.permute.xlu0 %513
      %515 = vrot.lane.b32.xlu0 %v263, 120
      %v516 = vpop.permute.xlu0 %515
      %517 = vrot.lane.b32.xlu0 %v266, 120
      %v518 = vpop.permute.xlu0 %517
      %519 = vrot.lane.b32.xlu0 %v268, 120
      %v520 = vpop.permute.xlu0 %519
      %521 = vrot.lane.b32.xlu0 %v271, 120
      %v522 = vpop.permute.xlu0 %521
      %523 = vrot.lane.b32.xlu0 %v273, 120
      %v524 = vpop.permute.xlu0 %523
      %525 = vrot.lane.b32.xlu0 %v276, 120
      %v526 = vpop.permute.xlu0 %525
      %527 = vrot.lane.b32.xlu0 %v278, 120
      %v528 = vpop.permute.xlu0 %527
      %v537 = vsel %vm282, %v514, 0.0
      %538 = vadd.xlane.f32.xlu0 %v537
      %v539 = vpop.xlane.xlu0 %538
      %v540 = vsel %vm282, %v516, 0.0
      %541 = vadd.xlane.f32.xlu0 %v540
      %v542 = vpop.xlane.xlu0 %541
      %v543 = vsel %vm282, %v518, 0.0
      %544 = vadd.xlane.f32.xlu0 %v543
      %v545 = vpop.xlane.xlu0 %544
      %v546 = vsel %vm282, %v520, 0.0
      %547 = vadd.xlane.f32.xlu0 %v546
      %v548 = vpop.xlane.xlu0 %547
      %v549 = vsel %vm282, %v522, 0.0
      %550 = vadd.xlane.f32.xlu0 %v549
      %v551 = vpop.xlane.xlu0 %550
      %v552 = vsel %vm282, %v524, 0.0
      %553 = vadd.xlane.f32.xlu0 %v552
      %v554 = vpop.xlane.xlu0 %553
      %v555 = vsel %vm282, %v526, 0.0
      %556 = vadd.xlane.f32.xlu0 %v555
      %v557 = vpop.xlane.xlu0 %556
      %v558 = vsel %vm282, %v528, 0.0
      %559 = vadd.xlane.f32.xlu0 %v558
      %v560 = vpop.xlane.xlu0 %559
      %v561 = vmul.f32 %v539, %v313
      %v562 = vmul.f32 %v542, %v313
      %v563 = vmul.f32 %v545, %v313
      %v564 = vmul.f32 %v548, %v313
      %v565 = vmul.f32 %v551, %v313
      %v566 = vmul.f32 %v554, %v313
      %v567 = vmul.f32 %v557, %v313
      %v568 = vmul.f32 %v560, %v313
      %v569 = vsub.f32 %v261, %v561
      %v570 = vsub.f32 %v263, %v562
      %v571 = vsub.f32 %v266, %v563
      %v572 = vsub.f32 %v268, %v564
      %v573 = vsub.f32 %v271, %v565
      %v574 = vsub.f32 %v273, %v566
      %v575 = vsub.f32 %v276, %v567
      %v576 = vsub.f32 %v278, %v568
      %v577 = vmul.f32 %v569, %v569
      %v578 = vmul.f32 %v570, %v570
      %v579 = vmul.f32 %v571, %v571
      %v580 = vmul.f32 %v572, %v572
      %v581 = vmul.f32 %v573, %v573
      %v582 = vmul.f32 %v574, %v574
      %v583 = vmul.f32 %v575, %v575
      %v584 = vmul.f32 %v576, %v576
      %593 = vrot.lane.b32.xlu0 %v577, 120
      %v594 = vpop.permute.xlu0 %593
      %595 = vrot.lane.b32.xlu0 %v578, 120
      %v596 = vpop.permute.xlu0 %595
      %597 = vrot.lane.b32.xlu0 %v579, 120
      %v598 = vpop.permute.xlu0 %597
      %599 = vrot.lane.b32.xlu0 %v580, 120
      %v600 = vpop.permute.xlu0 %599
      %601 = vrot.lane.b32.xlu0 %v581, 120
      %v602 = vpop.permute.xlu0 %601
      %603 = vrot.lane.b32.xlu0 %v582, 120
      %v604 = vpop.permute.xlu0 %603
      %605 = vrot.lane.b32.xlu0 %v583, 120
      %v606 = vpop.permute.xlu0 %605
      %607 = vrot.lane.b32.xlu0 %v584, 120
      %v608 = vpop.permute.xlu0 %607
      %v617 = vsel %vm282, %v594, 0.0
      %618 = vadd.xlane.f32.xlu0 %v617
      %v619 = vpop.xlane.xlu0 %618
      %v620 = vsel %vm282, %v596, 0.0
      %621 = vadd.xlane.f32.xlu0 %v620
      %v622 = vpop.xlane.xlu0 %621
      %v623 = vsel %vm282, %v598, 0.0
      %624 = vadd.xlane.f32.xlu0 %v623
      %v625 = vpop.xlane.xlu0 %624
      %v626 = vsel %vm282, %v600, 0.0
      %627 = vadd.xlane.f32.xlu0 %v626
      %v628 = vpop.xlane.xlu0 %627
      %v629 = vsel %vm282, %v602, 0.0
      %630 = vadd.xlane.f32.xlu0 %v629
      %v631 = vpop.xlane.xlu0 %630
      %v632 = vsel %vm282, %v604, 0.0
      %633 = vadd.xlane.f32.xlu0 %v632
      %v634 = vpop.xlane.xlu0 %633
      %v635 = vsel %vm282, %v606, 0.0
      %636 = vadd.xlane.f32.xlu0 %v635
      %v637 = vpop.xlane.xlu0 %636
      %v638 = vsel %vm282, %v608, 0.0
      %639 = vadd.xlane.f32.xlu0 %v638
      %v640 = vpop.xlane.xlu0 %639
      %v641 = vmul.f32 %v619, %v313
      %v642 = vmul.f32 %v622, %v313
      %v643 = vmul.f32 %v625, %v313
      %v644 = vmul.f32 %v628, %v313
      %v645 = vmul.f32 %v631, %v313
      %v646 = vmul.f32 %v634, %v313
      %v647 = vmul.f32 %v637, %v313
      %v648 = vmul.f32 %v640, %v313
      %v649 = vadd.f32 %v641, 1e-05
      %v650 = vadd.f32 %v642, 1e-05
      %v651 = vadd.f32 %v643, 1e-05
      %v652 = vadd.f32 %v644, 1e-05
      %v653 = vadd.f32 %v645, 1e-05
      %v654 = vadd.f32 %v646, 1e-05
      %v655 = vadd.f32 %v647, 1e-05
      %v656 = vadd.f32 %v648, 1e-05
      %v657 = vrsqrt.pop %v649
      %v658 = vmul.f32 %v657, %v649
      %v659 = vmul.f32 %v658, %v657
      %v660 = vmul.f32 0.5, %v659
      %v661 = vsub.f32 1.5, %v660
      %v662 = vmul.f32 %v657, %v661
      %vm663 = vweird.f32 %v649
      %vm664 = vweird.f32 %v657
      %vm665 = vmor %vm663, %vm664
      %v666 = vsel %vm665, %v657, %v662
      %v667 = vrsqrt.pop %v650
      %v668 = vmul.f32 %v667, %v650
      %v669 = vmul.f32 %v668, %v667
      %v670 = vmul.f32 0.5, %v669
      %v671 = vsub.f32 1.5, %v670
      %v672 = vmul.f32 %v667, %v671
      %vm673 = vweird.f32 %v650
      %vm674 = vweird.f32 %v667
      %vm675 = vmor %vm673, %vm674
      %v676 = vsel %vm675, %v667, %v672
      %v677 = vrsqrt.pop %v651
      %v678 = vmul.f32 %v677, %v651
      %v679 = vmul.f32 %v678, %v677
      %v680 = vmul.f32 0.5, %v679
      %v681 = vsub.f32 1.5, %v680
      %v682 = vmul.f32 %v677, %v681
      %vm683 = vweird.f32 %v651
      %vm684 = vweird.f32 %v677
      %vm685 = vmor %vm683, %vm684
      %v686 = vsel %vm685, %v677, %v682
      %v687 = vrsqrt.pop %v652
      %v688 = vmul.f32 %v687, %v652
      %v689 = vmul.f32 %v688, %v687
      %v690 = vmul.f32 0.5, %v689
      %v691 = vsub.f32 1.5, %v690
      %v692 = vmul.f32 %v687, %v691
      %vm693 = vweird.f32 %v652
      %vm694 = vweird.f32 %v687
      %vm695 = vmor %vm693, %vm694
      %v696 = vsel %vm695, %v687, %v692
      %v697 = vrsqrt.pop %v653
      %v698 = vmul.f32 %v697, %v653
      %v699 = vmul.f32 %v698, %v697
      %v700 = vmul.f32 0.5, %v699
      %v701 = vsub.f32 1.5, %v700
      %v702 = vmul.f32 %v697, %v701
      %vm703 = vweird.f32 %v653
      %vm704 = vweird.f32 %v697
      %vm705 = vmor %vm703, %vm704
      %v706 = vsel %vm705, %v697, %v702
      %v707 = vrsqrt.pop %v654
      %v708 = vmul.f32 %v707, %v654
      %v709 = vmul.f32 %v708, %v707
      %v710 = vmul.f32 0.5, %v709
      %v711 = vsub.f32 1.5, %v710
      %v712 = vmul.f32 %v707, %v711
      %vm713 = vweird.f32 %v654
      %vm714 = vweird.f32 %v707
      %vm715 = vmor %vm713, %vm714
      %v716 = vsel %vm715, %v707, %v712
      %v717 = vrsqrt.pop %v655
      %v718 = vmul.f32 %v717, %v655
      %v719 = vmul.f32 %v718, %v717
      %v720 = vmul.f32 0.5, %v719
      %v721 = vsub.f32 1.5, %v720
      %v722 = vmul.f32 %v717, %v721
      %vm723 = vweird.f32 %v655
      %vm724 = vweird.f32 %v717
      %vm725 = vmor %vm723, %vm724
      %v726 = vsel %vm725, %v717, %v722
      %v727 = vrsqrt.pop %v656
      %v728 = vmul.f32 %v727, %v656
      %v729 = vmul.f32 %v728, %v727
      %v730 = vmul.f32 0.5, %v729
      %v731 = vsub.f32 1.5, %v730
      %v732 = vmul.f32 %v727, %v731
      %vm733 = vweird.f32 %v656
      %vm734 = vweird.f32 %v727
      %vm735 = vmor %vm733, %vm734
      %v736 = vsel %vm735, %v727, %v732
      %v737 = vmul.f32 %v569, %v666
      %v738 = vmul.f32 %v570, %v676
      %v739 = vmul.f32 %v571, %v686
      %v740 = vmul.f32 %v572, %v696
      %v741 = vmul.f32 %v573, %v706
      %v742 = vmul.f32 %v574, %v716
      %v743 = vmul.f32 %v575, %v726
      %v744 = vmul.f32 %v576, %v736
      %745 = vrot.lane.b32.xlu0 %v467, 8
      %v746 = vpop.permute.xlu0 %745
      %v748 = vmul.f32 %v737, %v746
      %v749 = vmul.f32 %v738, %v746
      %v750 = vmul.f32 %v739, %v746
      %v751 = vmul.f32 %v740, %v746
      %v752 = vmul.f32 %v741, %v746
      %v753 = vmul.f32 %v742, %v746
      %v754 = vmul.f32 %v743, %v746
      %v755 = vmul.f32 %v744, %v746
      %756 = vrot.lane.b32.xlu0 %v478, 8
      %v757 = vpop.permute.xlu0 %756
      %v759 = vadd.f32 %v748, %v757
      %v760 = vadd.f32 %v749, %v757
      %v761 = vadd.f32 %v750, %v757
      %v762 = vadd.f32 %v751, %v757
      %v763 = vadd.f32 %v752, %v757
      %v764 = vadd.f32 %v753, %v757
      %v765 = vadd.f32 %v754, %v757
      %v766 = vadd.f32 %v755, %v757
      %v767 = vpack.c.bf16 %v759, %v759
      %v768 = vpack.c.bf16 %v760, %v760
      %v769 = vpack.c.bf16 %v761, %v761
      %v770 = vpack.c.bf16 %v762, %v762
      %v771 = vpack.c.bf16 %v763, %v763
      %v772 = vpack.c.bf16 %v764, %v764
      %v773 = vpack.c.bf16 %v765, %v765
      %v774 = vpack.c.bf16 %v766, %v766
      %vm775 = vcmask 126016
      %776 = vst.msk [vmem:[%s199] sm:$0xf] %vm775, %v767
      %777 = vst.msk [vmem:[%s199 + $0x4] sm:$0xf] %vm775, %v768
      %778 = vst.msk [vmem:[%s199 + $0x8] sm:$0xf] %vm775, %v769
      %779 = vst.msk [vmem:[%s199 + $0xc] sm:$0xf] %vm775, %v770
      %780 = vst.msk [vmem:[%s199 + $0x10] sm:$0xf] %vm775, %v771
      %781 = vst.msk [vmem:[%s199 + $0x14] sm:$0xf] %vm775, %v772
      %782 = vst.msk [vmem:[%s199 + $0x18] sm:$0xf] %vm775, %v773
      %783 = vst.msk [vmem:[%s199 + $0x1c] sm:$0xf] %vm775, %v774
      %784 = vrot.lane.b32.xlu0 %v261, 112
      %v785 = vpop.permute.xlu0 %784
      %786 = vrot.lane.b32.xlu0 %v263, 112
      %v787 = vpop.permute.xlu0 %786
      %788 = vrot.lane.b32.xlu0 %v266, 112
      %v789 = vpop.permute.xlu0 %788
      %790 = vrot.lane.b32.xlu0 %v268, 112
      %v791 = vpop.permute.xlu0 %790
      %792 = vrot.lane.b32.xlu0 %v271, 112
      %v793 = vpop.permute.xlu0 %792
      %794 = vrot.lane.b32.xlu0 %v273, 112
      %v795 = vpop.permute.xlu0 %794
      %796 = vrot.lane.b32.xlu0 %v276, 112
      %v797 = vpop.permute.xlu0 %796
      %798 = vrot.lane.b32.xlu0 %v278, 112
      %v799 = vpop.permute.xlu0 %798
      %v808 = vsel %vm282, %v785, 0.0
      %809 = vadd.xlane.f32.xlu0 %v808
      %v810 = vpop.xlane.xlu0 %809
      %v811 = vsel %vm282, %v787, 0.0
      %812 = vadd.xlane.f32.xlu0 %v811
      %v813 = vpop.xlane.xlu0 %812
      %v814 = vsel %vm282, %v789, 0.0
      %815 = vadd.xlane.f32.xlu0 %v814
      %v816 = vpop.xlane.xlu0 %815
      %v817 = vsel %vm282, %v791, 0.0
      %818 = vadd.xlane.f32.xlu0 %v817
      %v819 = vpop.xlane.xlu0 %818
      %v820 = vsel %vm282, %v793, 0.0
      %821 = vadd.xlane.f32.xlu0 %v820
      %v822 = vpop.xlane.xlu0 %821
      %v823 = vsel %vm282, %v795, 0.0
      %824 = vadd.xlane.f32.xlu0 %v823
      %v825 = vpop.xlane.xlu0 %824
      %v826 = vsel %vm282, %v797, 0.0
      %827 = vadd.xlane.f32.xlu0 %v826
      %v828 = vpop.xlane.xlu0 %827
      %v829 = vsel %vm282, %v799, 0.0
      %830 = vadd.xlane.f32.xlu0 %v829
      %v831 = vpop.xlane.xlu0 %830
      %v832 = vmul.f32 %v810, %v313
      %v833 = vmul.f32 %v813, %v313
      %v834 = vmul.f32 %v816, %v313
      %v835 = vmul.f32 %v819, %v313
      %v836 = vmul.f32 %v822, %v313
      %v837 = vmul.f32 %v825, %v313
      %v838 = vmul.f32 %v828, %v313
      %v839 = vmul.f32 %v831, %v313
      %v840 = vsub.f32 %v261, %v832
      %v841 = vsub.f32 %v263, %v833
      %v842 = vsub.f32 %v266, %v834
      %v843 = vsub.f32 %v268, %v835
      %v844 = vsub.f32 %v271, %v836
      %v845 = vsub.f32 %v273, %v837
      %v846 = vsub.f32 %v276, %v838
      %v847 = vsub.f32 %v278, %v839
      %v848 = vmul.f32 %v840, %v840
      %v849 = vmul.f32 %v841, %v841
      %v850 = vmul.f32 %v842, %v842
      %v851 = vmul.f32 %v843, %v843
      %v852 = vmul.f32 %v844, %v844
      %v853 = vmul.f32 %v845, %v845
      %v854 = vmul.f32 %v846, %v846
      %v855 = vmul.f32 %v847, %v847
      %864 = vrot.lane.b32.xlu0 %v848, 112
      %v865 = vpop.permute.xlu0 %864
      %866 = vrot.lane.b32.xlu0 %v849, 112
      %v867 = vpop.permute.xlu0 %866
      %868 = vrot.lane.b32.xlu0 %v850, 112
      %v869 = vpop.permute.xlu0 %868
      %870 = vrot.lane.b32.xlu0 %v851, 112
      %v871 = vpop.permute.xlu0 %870
      %872 = vrot.lane.b32.xlu0 %v852, 112
      %v873 = vpop.permute.xlu0 %872
      %874 = vrot.lane.b32.xlu0 %v853, 112
      %v875 = vpop.permute.xlu0 %874
      %876 = vrot.lane.b32.xlu0 %v854, 112
      %v877 = vpop.permute.xlu0 %876
      %878 = vrot.lane.b32.xlu0 %v855, 112
      %v879 = vpop.permute.xlu0 %878
      %v888 = vsel %vm282, %v865, 0.0
      %889 = vadd.xlane.f32.xlu0 %v888
      %v890 = vpop.xlane.xlu0 %889
      %v891 = vsel %vm282, %v867, 0.0
      %892 = vadd.xlane.f32.xlu0 %v891
      %v893 = vpop.xlane.xlu0 %892
      %v894 = vsel %vm282, %v869, 0.0
      %895 = vadd.xlane.f32.xlu0 %v894
      %v896 = vpop.xlane.xlu0 %895
      %v897 = vsel %vm282, %v871, 0.0
      %898 = vadd.xlane.f32.xlu0 %v897
      %v899 = vpop.xlane.xlu0 %898
      %v900 = vsel %vm282, %v873, 0.0
      %901 = vadd.xlane.f32.xlu0 %v900
      %v902 = vpop.xlane.xlu0 %901
      %v903 = vsel %vm282, %v875, 0.0
      %904 = vadd.xlane.f32.xlu0 %v903
      %v905 = vpop.xlane.xlu0 %904
      %v906 = vsel %vm282, %v877, 0.0
      %907 = vadd.xlane.f32.xlu0 %v906
      %v908 = vpop.xlane.xlu0 %907
      %v909 = vsel %vm282, %v879, 0.0
      %910 = vadd.xlane.f32.xlu0 %v909
      %v911 = vpop.xlane.xlu0 %910
      %v912 = vmul.f32 %v890, %v313
      %v913 = vmul.f32 %v893, %v313
      %v914 = vmul.f32 %v896, %v313
      %v915 = vmul.f32 %v899, %v313
      %v916 = vmul.f32 %v902, %v313
      %v917 = vmul.f32 %v905, %v313
      %v918 = vmul.f32 %v908, %v313
      %v919 = vmul.f32 %v911, %v313
      %v920 = vadd.f32 %v912, 1e-05
      %v921 = vadd.f32 %v913, 1e-05
      %v922 = vadd.f32 %v914, 1e-05
      %v923 = vadd.f32 %v915, 1e-05
      %v924 = vadd.f32 %v916, 1e-05
      %v925 = vadd.f32 %v917, 1e-05
      %v926 = vadd.f32 %v918, 1e-05
      %v927 = vadd.f32 %v919, 1e-05
      %v928 = vrsqrt.pop %v920
      %v929 = vmul.f32 %v928, %v920
      %v930 = vmul.f32 %v929, %v928
      %v931 = vmul.f32 0.5, %v930
      %v932 = vsub.f32 1.5, %v931
      %v933 = vmul.f32 %v928, %v932
      %vm934 = vweird.f32 %v920
      %vm935 = vweird.f32 %v928
      %vm936 = vmor %vm934, %vm935
      %v937 = vsel %vm936, %v928, %v933
      %v938 = vrsqrt.pop %v921
      %v939 = vmul.f32 %v938, %v921
      %v940 = vmul.f32 %v939, %v938
      %v941 = vmul.f32 0.5, %v940
      %v942 = vsub.f32 1.5, %v941
      %v943 = vmul.f32 %v938, %v942
      %vm944 = vweird.f32 %v921
      %vm945 = vweird.f32 %v938
      %vm946 = vmor %vm944, %vm945
      %v947 = vsel %vm946, %v938, %v943
      %v948 = vrsqrt.pop %v922
      %v949 = vmul.f32 %v948, %v922
      %v950 = vmul.f32 %v949, %v948
      %v951 = vmul.f32 0.5, %v950
      %v952 = vsub.f32 1.5, %v951
      %v953 = vmul.f32 %v948, %v952
      %vm954 = vweird.f32 %v922
      %vm955 = vweird.f32 %v948
      %vm956 = vmor %vm954, %vm955
      %v957 = vsel %vm956, %v948, %v953
      %v958 = vrsqrt.pop %v923
      %v959 = vmul.f32 %v958, %v923
      %v960 = vmul.f32 %v959, %v958
      %v961 = vmul.f32 0.5, %v960
      %v962 = vsub.f32 1.5, %v961
      %v963 = vmul.f32 %v958, %v962
      %vm964 = vweird.f32 %v923
      %vm965 = vweird.f32 %v958
      %vm966 = vmor %vm964, %vm965
      %v967 = vsel %vm966, %v958, %v963
      %v968 = vrsqrt.pop %v924
      %v969 = vmul.f32 %v968, %v924
      %v970 = vmul.f32 %v969, %v968
      %v971 = vmul.f32 0.5, %v970
      %v972 = vsub.f32 1.5, %v971
      %v973 = vmul.f32 %v968, %v972
      %vm974 = vweird.f32 %v924
      %vm975 = vweird.f32 %v968
      %vm976 = vmor %vm974, %vm975
      %v977 = vsel %vm976, %v968, %v973
      %v978 = vrsqrt.pop %v925
      %v979 = vmul.f32 %v978, %v925
      %v980 = vmul.f32 %v979, %v978
      %v981 = vmul.f32 0.5, %v980
      %v982 = vsub.f32 1.5, %v981
      %v983 = vmul.f32 %v978, %v982
      %vm984 = vweird.f32 %v925
      %vm985 = vweird.f32 %v978
      %vm986 = vmor %vm984, %vm985
      %v987 = vsel %vm986, %v978, %v983
      %v988 = vrsqrt.pop %v926
      %v989 = vmul.f32 %v988, %v926
      %v990 = vmul.f32 %v989, %v988
      %v991 = vmul.f32 0.5, %v990
      %v992 = vsub.f32 1.5, %v991
      %v993 = vmul.f32 %v988, %v992
      %vm994 = vweird.f32 %v926
      %vm995 = vweird.f32 %v988
      %vm996 = vmor %vm994, %vm995
      %v997 = vsel %vm996, %v988, %v993
      %v998 = vrsqrt.pop %v927
      %v999 = vmul.f32 %v998, %v927
      %v1000 = vmul.f32 %v999, %v998
      %v1001 = vmul.f32 0.5, %v1000
      %v1002 = vsub.f32 1.5, %v1001
      %v1003 = vmul.f32 %v998, %v1002
      %vm1004 = vweird.f32 %v927
      %vm1005 = vweird.f32 %v998
      %vm1006 = vmor %vm1004, %vm1005
      %v1007 = vsel %vm1006, %v998, %v1003
      %v1008 = vmul.f32 %v840, %v937
      %v1009 = vmul.f32 %v841, %v947
      %v1010 = vmul.f32 %v842, %v957
      %v1011 = vmul.f32 %v843, %v967
      %v1012 = vmul.f32 %v844, %v977
      %v1013 = vmul.f32 %v845, %v987
      %v1014 = vmul.f32 %v846, %v997
      %v1015 = vmul.f32 %v847, %v1007
      %1016 = vrot.lane.b32.xlu0 %v467, 16
      %v1017 = vpop.permute.xlu0 %1016
      %v1019 = vmul.f32 %v1008, %v1017
      %v1020 = vmul.f32 %v1009, %v1017
      %v1021 = vmul.f32 %v1010, %v1017
      %v1022 = vmul.f32 %v1011, %v1017
      %v1023 = vmul.f32 %v1012, %v1017
      %v1024 = vmul.f32 %v1013, %v1017
      %v1025 = vmul.f32 %v1014, %v1017
      %v1026 = vmul.f32 %v1015, %v1017
      %1027 = vrot.lane.b32.xlu0 %v478, 16
      %v1028 = vpop.permute.xlu0 %1027
      %v1030 = vadd.f32 %v1019, %v1028
      %v1031 = vadd.f32 %v1020, %v1028
      %v1032 = vadd.f32 %v1021, %v1028
      %v1033 = vadd.f32 %v1022, %v1028
      %v1034 = vadd.f32 %v1023, %v1028
      %v1035 = vadd.f32 %v1024, %v1028
      %v1036 = vadd.f32 %v1025, %v1028
      %v1037 = vadd.f32 %v1026, %v1028
      %v1038 = vpack.c.bf16 %v1030, %v1030
      %v1039 = vpack.c.bf16 %v1031, %v1031
      %v1040 = vpack.c.bf16 %v1032, %v1032
      %v1041 = vpack.c.bf16 %v1033, %v1033
      %v1042 = vpack.c.bf16 %v1034, %v1034
      %v1043 = vpack.c.bf16 %v1035, %v1035
      %v1044 = vpack.c.bf16 %v1036, %v1036
      %v1045 = vpack.c.bf16 %v1037, %v1037
      %vm1046 = vcmask 191616
      %1047 = vst.msk [vmem:[%s199] sm:$0xf] %vm1046, %v1038
      %1048 = vst.msk [vmem:[%s199 + $0x4] sm:$0xf] %vm1046, %v1039
      %1049 = vst.msk [vmem:[%s199 + $0x8] sm:$0xf] %vm1046, %v1040
      %1050 = vst.msk [vmem:[%s199 + $0xc] sm:$0xf] %vm1046, %v1041
      %1051 = vst.msk [vmem:[%s199 + $0x10] sm:$0xf] %vm1046, %v1042
      %1052 = vst.msk [vmem:[%s199 + $0x14] sm:$0xf] %vm1046, %v1043
      %1053 = vst.msk [vmem:[%s199 + $0x18] sm:$0xf] %vm1046, %v1044
      %1054 = vst.msk [vmem:[%s199 + $0x1c] sm:$0xf] %vm1046, %v1045
      %1055 = vrot.lane.b32.xlu0 %v261, 104
      %v1056 = vpop.permute.xlu0 %1055
      %1057 = vrot.lane.b32.xlu0 %v263, 104
      %v1058 = vpop.permute.xlu0 %1057
      %1059 = vrot.lane.b32.xlu0 %v266, 104
      %v1060 = vpop.permute.xlu0 %1059
      %1061 = vrot.lane.b32.xlu0 %v268, 104
      %v1062 = vpop.permute.xlu0 %1061
      %1063 = vrot.lane.b32.xlu0 %v271, 104
      %v1064 = vpop.permute.xlu0 %1063
      %1065 = vrot.lane.b32.xlu0 %v273, 104
      %v1066 = vpop.permute.xlu0 %1065
      %1067 = vrot.lane.b32.xlu0 %v276, 104
      %v1068 = vpop.permute.xlu0 %1067
      %1069 = vrot.lane.b32.xlu0 %v278, 104
      %v1070 = vpop.permute.xlu0 %1069
      %v1079 = vsel %vm282, %v1056, 0.0
      %1080 = vadd.xlane.f32.xlu0 %v1079
      %v1081 = vpop.xlane.xlu0 %1080
      %v1082 = vsel %vm282, %v1058, 0.0
      %1083 = vadd.xlane.f32.xlu0 %v1082
      %v1084 = vpop.xlane.xlu0 %1083
      %v1085 = vsel %vm282, %v1060, 0.0
      %1086 = vadd.xlane.f32.xlu0 %v1085
      %v1087 = vpop.xlane.xlu0 %1086
      %v1088 = vsel %vm282, %v1062, 0.0
      %1089 = vadd.xlane.f32.xlu0 %v1088
      %v1090 = vpop.xlane.xlu0 %1089
      %v1091 = vsel %vm282, %v1064, 0.0
      %1092 = vadd.xlane.f32.xlu0 %v1091
      %v1093 = vpop.xlane.xlu0 %1092
      %v1094 = vsel %vm282, %v1066, 0.0
      %1095 = vadd.xlane.f32.xlu0 %v1094
      %v1096 = vpop.xlane.xlu0 %1095
      %v1097 = vsel %vm282, %v1068, 0.0
      %1098 = vadd.xlane.f32.xlu0 %v1097
      %v1099 = vpop.xlane.xlu0 %1098
      %v1100 = vsel %vm282, %v1070, 0.0
      %1101 = vadd.xlane.f32.xlu0 %v1100
      %v1102 = vpop.xlane.xlu0 %1101
      %v1103 = vmul.f32 %v1081, %v313
      %v1104 = vmul.f32 %v1084, %v313
      %v1105 = vmul.f32 %v1087, %v313
      %v1106 = vmul.f32 %v1090, %v313
      %v1107 = vmul.f32 %v1093, %v313
      %v1108 = vmul.f32 %v1096, %v313
      %v1109 = vmul.f32 %v1099, %v313
      %v1110 = vmul.f32 %v1102, %v313
      %v1111 = vsub.f32 %v261, %v1103
      %v1112 = vsub.f32 %v263, %v1104
      %v1113 = vsub.f32 %v266, %v1105
      %v1114 = vsub.f32 %v268, %v1106
      %v1115 = vsub.f32 %v271, %v1107
      %v1116 = vsub.f32 %v273, %v1108
      %v1117 = vsub.f32 %v276, %v1109
      %v1118 = vsub.f32 %v278, %v1110
      %v1119 = vmul.f32 %v1111, %v1111
      %v1120 = vmul.f32 %v1112, %v1112
      %v1121 = vmul.f32 %v1113, %v1113
      %v1122 = vmul.f32 %v1114, %v1114
      %v1123 = vmul.f32 %v1115, %v1115
      %v1124 = vmul.f32 %v1116, %v1116
      %v1125 = vmul.f32 %v1117, %v1117
      %v1126 = vmul.f32 %v1118, %v1118
      %1135 = vrot.lane.b32.xlu0 %v1119, 104
      %v1136 = vpop.permute.xlu0 %1135
      %1137 = vrot.lane.b32.xlu0 %v1120, 104
      %v1138 = vpop.permute.xlu0 %1137
      %1139 = vrot.lane.b32.xlu0 %v1121, 104
      %v1140 = vpop.permute.xlu0 %1139
      %1141 = vrot.lane.b32.xlu0 %v1122, 104
      %v1142 = vpop.permute.xlu0 %1141
      %1143 = vrot.lane.b32.xlu0 %v1123, 104
      %v1144 = vpop.permute.xlu0 %1143
      %1145 = vrot.lane.b32.xlu0 %v1124, 104
      %v1146 = vpop.permute.xlu0 %1145
      %1147 = vrot.lane.b32.xlu0 %v1125, 104
      %v1148 = vpop.permute.xlu0 %1147
      %1149 = vrot.lane.b32.xlu0 %v1126, 104
      %v1150 = vpop.permute.xlu0 %1149
      %v1159 = vsel %vm282, %v1136, 0.0
      %1160 = vadd.xlane.f32.xlu0 %v1159
      %v1161 = vpop.xlane.xlu0 %1160
      %v1162 = vsel %vm282, %v1138, 0.0
      %1163 = vadd.xlane.f32.xlu0 %v1162
      %v1164 = vpop.xlane.xlu0 %1163
      %v1165 = vsel %vm282, %v1140, 0.0
      %1166 = vadd.xlane.f32.xlu0 %v1165
      %v1167 = vpop.xlane.xlu0 %1166
      %v1168 = vsel %vm282, %v1142, 0.0
      %1169 = vadd.xlane.f32.xlu0 %v1168
      %v1170 = vpop.xlane.xlu0 %1169
      %v1171 = vsel %vm282, %v1144, 0.0
      %1172 = vadd.xlane.f32.xlu0 %v1171
      %v1173 = vpop.xlane.xlu0 %1172
      %v1174 = vsel %vm282, %v1146, 0.0
      %1175 = vadd.xlane.f32.xlu0 %v1174
      %v1176 = vpop.xlane.xlu0 %1175
      %v1177 = vsel %vm282, %v1148, 0.0
      %1178 = vadd.xlane.f32.xlu0 %v1177
      %v1179 = vpop.xlane.xlu0 %1178
      %v1180 = vsel %vm282, %v1150, 0.0
      %1181 = vadd.xlane.f32.xlu0 %v1180
      %v1182 = vpop.xlane.xlu0 %1181
      %v1183 = vmul.f32 %v1161, %v313
      %v1184 = vmul.f32 %v1164, %v313
      %v1185 = vmul.f32 %v1167, %v313
      %v1186 = vmul.f32 %v1170, %v313
      %v1187 = vmul.f32 %v1173, %v313
      %v1188 = vmul.f32 %v1176, %v313
      %v1189 = vmul.f32 %v1179, %v313
      %v1190 = vmul.f32 %v1182, %v313
      %v1191 = vadd.f32 %v1183, 1e-05
      %v1192 = vadd.f32 %v1184, 1e-05
      %v1193 = vadd.f32 %v1185, 1e-05
      %v1194 = vadd.f32 %v1186, 1e-05
      %v1195 = vadd.f32 %v1187, 1e-05
      %v1196 = vadd.f32 %v1188, 1e-05
      %v1197 = vadd.f32 %v1189, 1e-05
      %v1198 = vadd.f32 %v1190, 1e-05
      %v1199 = vrsqrt.pop %v1191
      %v1200 = vmul.f32 %v1199, %v1191
      %v1201 = vmul.f32 %v1200, %v1199
      %v1202 = vmul.f32 0.5, %v1201
      %v1203 = vsub.f32 1.5, %v1202
      %v1204 = vmul.f32 %v1199, %v1203
      %vm1205 = vweird.f32 %v1191
      %vm1206 = vweird.f32 %v1199
      %vm1207 = vmor %vm1205, %vm1206
      %v1208 = vsel %vm1207, %v1199, %v1204
      %v1209 = vrsqrt.pop %v1192
      %v1210 = vmul.f32 %v1209, %v1192
      %v1211 = vmul.f32 %v1210, %v1209
      %v1212 = vmul.f32 0.5, %v1211
      %v1213 = vsub.f32 1.5, %v1212
      %v1214 = vmul.f32 %v1209, %v1213
      %vm1215 = vweird.f32 %v1192
      %vm1216 = vweird.f32 %v1209
      %vm1217 = vmor %vm1215, %vm1216
      %v1218 = vsel %vm1217, %v1209, %v1214
      %v1219 = vrsqrt.pop %v1193
      %v1220 = vmul.f32 %v1219, %v1193
      %v1221 = vmul.f32 %v1220, %v1219
      %v1222 = vmul.f32 0.5, %v1221
      %v1223 = vsub.f32 1.5, %v1222
      %v1224 = vmul.f32 %v1219, %v1223
      %vm1225 = vweird.f32 %v1193
      %vm1226 = vweird.f32 %v1219
      %vm1227 = vmor %vm1225, %vm1226
      %v1228 = vsel %vm1227, %v1219, %v1224
      %v1229 = vrsqrt.pop %v1194
      %v1230 = vmul.f32 %v1229, %v1194
      %v1231 = vmul.f32 %v1230, %v1229
      %v1232 = vmul.f32 0.5, %v1231
      %v1233 = vsub.f32 1.5, %v1232
      %v1234 = vmul.f32 %v1229, %v1233
      %vm1235 = vweird.f32 %v1194
      %vm1236 = vweird.f32 %v1229
      %vm1237 = vmor %vm1235, %vm1236
      %v1238 = vsel %vm1237, %v1229, %v1234
      %v1239 = vrsqrt.pop %v1195
      %v1240 = vmul.f32 %v1239, %v1195
      %v1241 = vmul.f32 %v1240, %v1239
      %v1242 = vmul.f32 0.5, %v1241
      %v1243 = vsub.f32 1.5, %v1242
      %v1244 = vmul.f32 %v1239, %v1243
      %vm1245 = vweird.f32 %v1195
      %vm1246 = vweird.f32 %v1239
      %vm1247 = vmor %vm1245, %vm1246
      %v1248 = vsel %vm1247, %v1239, %v1244
      %v1249 = vrsqrt.pop %v1196
      %v1250 = vmul.f32 %v1249, %v1196
      %v1251 = vmul.f32 %v1250, %v1249
      %v1252 = vmul.f32 0.5, %v1251
      %v1253 = vsub.f32 1.5, %v1252
      %v1254 = vmul.f32 %v1249, %v1253
      %vm1255 = vweird.f32 %v1196
      %vm1256 = vweird.f32 %v1249
      %vm1257 = vmor %vm1255, %vm1256
      %v1258 = vsel %vm1257, %v1249, %v1254
      %v1259 = vrsqrt.pop %v1197
      %v1260 = vmul.f32 %v1259, %v1197
      %v1261 = vmul.f32 %v1260, %v1259
      %v1262 = vmul.f32 0.5, %v1261
      %v1263 = vsub.f32 1.5, %v1262
      %v1264 = vmul.f32 %v1259, %v1263
      %vm1265 = vweird.f32 %v1197
      %vm1266 = vweird.f32 %v1259
      %vm1267 = vmor %vm1265, %vm1266
      %v1268 = vsel %vm1267, %v1259, %v1264
      %v1269 = vrsqrt.pop %v1198
      %v1270 = vmul.f32 %v1269, %v1198
      %v1271 = vmul.f32 %v1270, %v1269
      %v1272 = vmul.f32 0.5, %v1271
      %v1273 = vsub.f32 1.5, %v1272
      %v1274 = vmul.f32 %v1269, %v1273
      %vm1275 = vweird.f32 %v1198
      %vm1276 = vweird.f32 %v1269
      %vm1277 = vmor %vm1275, %vm1276
      %v1278 = vsel %vm1277, %v1269, %v1274
      %v1279 = vmul.f32 %v1111, %v1208
      %v1280 = vmul.f32 %v1112, %v1218
      %v1281 = vmul.f32 %v1113, %v1228
      %v1282 = vmul.f32 %v1114, %v1238
      %v1283 = vmul.f32 %v1115, %v1248
      %v1284 = vmul.f32 %v1116, %v1258
      %v1285 = vmul.f32 %v1117, %v1268
      %v1286 = vmul.f32 %v1118, %v1278
      %1287 = vrot.lane.b32.xlu0 %v467, 24
      %v1288 = vpop.permute.xlu0 %1287
      %v1290 = vmul.f32 %v1279, %v1288
      %v1291 = vmul.f32 %v1280, %v1288
      %v1292 = vmul.f32 %v1281, %v1288
      %v1293 = vmul.f32 %v1282, %v1288
      %v1294 = vmul.f32 %v1283, %v1288
      %v1295 = vmul.f32 %v1284, %v1288
      %v1296 = vmul.f32 %v1285, %v1288
      %v1297 = vmul.f32 %v1286, %v1288
      %1298 = vrot.lane.b32.xlu0 %v478, 24
      %v1299 = vpop.permute.xlu0 %1298
      %v1301 = vadd.f32 %v1290, %v1299
      %v1302 = vadd.f32 %v1291, %v1299
      %v1303 = vadd.f32 %v1292, %v1299
      %v1304 = vadd.f32 %v1293, %v1299
      %v1305 = vadd.f32 %v1294, %v1299
      %v1306 = vadd.f32 %v1295, %v1299
      %v1307 = vadd.f32 %v1296, %v1299
      %v1308 = vadd.f32 %v1297, %v1299
      %v1309 = vpack.c.bf16 %v1301, %v1301
      %v1310 = vpack.c.bf16 %v1302, %v1302
      %v1311 = vpack.c.bf16 %v1303, %v1303
      %v1312 = vpack.c.bf16 %v1304, %v1304
      %v1313 = vpack.c.bf16 %v1305, %v1305
      %v1314 = vpack.c.bf16 %v1306, %v1306
      %v1315 = vpack.c.bf16 %v1307, %v1307
      %v1316 = vpack.c.bf16 %v1308, %v1308
      %vm1317 = vcmask 257216
      %1318 = vst.msk [vmem:[%s199] sm:$0xf] %vm1317, %v1309
      %1319 = vst.msk [vmem:[%s199 + $0x4] sm:$0xf] %vm1317, %v1310
      %1320 = vst.msk [vmem:[%s199 + $0x8] sm:$0xf] %vm1317, %v1311
      %1321 = vst.msk [vmem:[%s199 + $0xc] sm:$0xf] %vm1317, %v1312
      %1322 = vst.msk [vmem:[%s199 + $0x10] sm:$0xf] %vm1317, %v1313
      %1323 = vst.msk [vmem:[%s199 + $0x14] sm:$0xf] %vm1317, %v1314
      %1324 = vst.msk [vmem:[%s199 + $0x18] sm:$0xf] %vm1317, %v1315
      %1325 = vst.msk [vmem:[%s199 + $0x1c] sm:$0xf] %vm1317, %v1316
      %s1326 = smul.u32 8, %s15
      %p1327 = scmp.lt.s32.totalorder %s1326, 15
      %s1328 = scalar_select %p1327, %s1326, 15
      %s1329 = smul.addr %s1328, 4
      %s1330 = scalar_lea.vmem %s4, %s1329
      // Predicated region
      $region37: #{basic_block_up_forward.5} parent=35 // pred_check
        %p1331 = pneg %p122
      $region38: #{basic_block_up_forward.5} parent=35 // pred_check_branch
        %1333 = sbr.rel (%p1331) target = $region40
      $region39: #{basic_block_up_forward.5} parent=35 // pred_region
        %s1334 = smul.u32 8, %s15
      $region40: #{basic_block_up_forward.5} parent=35 // pred_fallthru
        _
    $region36: #{basic_block_up_forward.5} parent=5 // pred_fallthru
      _
    %p1335 = scmp.le.s32.totalorder 2, %s10
    // Predicated region
    $region41: #{basic_block_up_forward.5} parent=5 // pred_check
      %p1336 = pneg %p1335
    $region42: #{basic_block_up_forward.5} parent=5 // pred_check_branch
      %1338 = sbr.rel (%p1336) target = $region44
    $region43: #{basic_block_up_forward.5} parent=5 // pred_region
      %s1339 = ssub.s32 %s10, 2
      // Predicated region
      $region45: #{basic_block_up_forward.5} parent=43 // pred_check
        %p1340 = pneg %p128
      $region46: #{basic_block_up_forward.5} parent=43 // pred_check_branch
        %1342 = sbr.rel (%p1340) target = $region48
      $region47: #{basic_block_up_forward.5} parent=43 // pred_region
        %s1343 = smul.u32 8, %s16
        %p1344 = scmp.lt.s32.totalorder %s1343, 15
        %s1345 = scalar_select %p1344, %s1343, 15
        %s1346 = smul.addr %s1345, 4
        %s1347 = scalar_lea.vmem %s4, %s1346
      $region48: #{basic_block_up_forward.5} parent=43 // pred_fallthru
        _
    $region44: #{basic_block_up_forward.5} parent=5 // pred_fallthru
      _
  $region6: #{basic_block_up_forward.5} parent=0 // loop_footer
    %s14 = sadd.s32 1, %s10
  $region7: #{basic_block_up_forward.5} parent=0 // loop_footer_branch
    %9 = sbr.rel target = $region3
  $region8: #{basic_block_up_forward.5} parent=0 // loop_exit
    _

// kernel: basic_block_up_forward.3
$region0: #{basic_block_up_forward.3}
  #allocation0 [shape = 'u32[]', space=smem, size = 0x4, offset = 0x4, fixed_abs, tag = 'smem constant byte address 0x4 - core index']
  #allocation1 [shape = 'u32[72,128]{1,0:T(1,128)}', space=vmem, size = 0x9000, scoped, tag = 'internal scratch']
  %s0 = inlined_call_operand.vmem [shape: bf16[128,16], index: 0, kind: input, shape index: {}]
  %s1 = inlined_call_operand.vmem [shape: f32[2,16,16], index: 1, kind: input, shape index: {}]
  %s2 = inlined_call_operand.vmem [shape: f32[1,16], index: 2, kind: input, shape index: {}]
  %s3 = inlined_call_operand.vmem [shape: f32[1,16], index: 3, kind: input, shape index: {}]
  %s4 = inlined_call_operand.vmem [shape: bf16[16,48], index: 4, kind: input, shape index: {}]
  %s5 = inlined_call_operand.vmem [shape: f32[1,48], index: 5, kind: input, shape index: {}]
  %s6 = inlined_call_operand.vmem [shape: bf16[16,16], index: 6, kind: input, shape index: {}]
  %s7 = inlined_call_operand.vmem [shape: f32[1,16], index: 7, kind: input, shape index: {}]
  %s8 = inlined_call_operand.vmem [shape: f32[1,16], index: 8, kind: input, shape index: {}]
  %s9 = inlined_call_operand.vmem [shape: f32[1,16], index: 9, kind: input, shape index: {}]
  %s10 = inlined_call_operand.vmem [shape: bf16[16,64], index: 10, kind: input, shape index: {}]
  %s11 = inlined_call_operand.vmem [shape: f32[1,64], index: 11, kind: input, shape index: {}]
  %s12 = inlined_call_operand.vmem [shape: bf16[64,16], index: 12, kind: input, shape index: {}]
  %s13 = inlined_call_operand.vmem [shape: f32[1,16], index: 13, kind: input, shape index: {}]
  %s14 = inlined_call_operand.vmem [shape: bf16[128,16], index: 14, kind: output, shape index: {}]
  %s15 = sld [smem:[#allocation0]]
  $region89: #{basic_block_up_forward.3} parent=0
    _
  %s17 = ssub.s32 1, %s15
  %s18 = scalar_select 0, %s17, %s15
  loop: start=0, step=1, limit=4
  $region2: #{basic_block_up_forward.3} parent=0 // loop_pre_header
    _
  $region3: #{basic_block_up_forward.3} parent=0 // loop_header
    %s20 = sphi 0, %s24
    %p21 = scmp.ge.s32.totalorder %s20, 4
    %s30 = sphi 0, %s32
    %s33 = sphi 0, %s30
    %s34 = sphi 0, %s33
    %s50 = sphi 0, %s34
    %s54 = sphi 0, %s54
    %s56 = sphi 0, %s54
    %s57 = sphi 0, %s56
    %s71 = sphi 0, %s57
    %s75 = sphi 0, %s75
    %s77 = sphi 0, %s75
    %s78 = sphi 0, %s77
    %s92 = sphi 0, %s78
    %s96 = sphi 0, %s96
    %s98 = sphi 0, %s96
    %s99 = sphi 0, %s98
    %s113 = sphi 0, %s99
    %s117 = sphi 0, %s117
    %s119 = sphi 0, %s117
    %s120 = sphi 0, %s119
    %s134 = sphi 0, %s120
    %s138 = sphi 0, %s138
    %s140 = sphi 0, %s138
    %s141 = sphi 0, %s140
    %s155 = sphi 0, %s141
    %s159 = sphi 0, %s159
    %s161 = sphi 0, %s159
    %s162 = sphi 0, %s161
    %s176 = sphi 0, %s162
    %s180 = sphi 0, %s180
    %s182 = sphi 0, %s180
    %s183 = sphi 0, %s182
    %s197 = sphi 0, %s183
    %s201 = sphi 0, %s201
    %s203 = sphi 0, %s201
    %s204 = sphi 0, %s203
    %s218 = sphi 0, %s204
    %s222 = sphi 0, %s222
    %s224 = sphi 0, %s222
    %s225 = sphi 0, %s224
    %s239 = sphi 0, %s225
    %s243 = sphi 0, %s243
    %s245 = sphi 0, %s243
    %s246 = sphi 0, %s245
    %s260 = sphi 0, %s246
    %s264 = sphi 0, %s264
    %s266 = sphi 0, %s264
    %s267 = sphi 0, %s266
    %s281 = sphi 0, %s267
    %s285 = sphi 0, %s285
    %s287 = sphi 0, %s285
    %s288 = sphi 0, %s287
    %s302 = sphi 0, %s288
    %s306 = sphi 0, %s306
    %s308 = sphi 0, %s306
    %s309 = sphi 0, %s308
    %s323 = sphi 0, %s309
    %s329 = sphi 0, %s331
    %s332 = sphi 0, %s329
    %s333 = sphi 0, %s332
    %s349 = sphi 0, %s333
  $region4: #{basic_block_up_forward.3} parent=0 // loop_header_branch
    %23 = sbr.rel (%p21) target = $region8
  $region5: #{basic_block_up_forward.3} parent=0 // loop_body
    %s25 = ssub.s32 %s20, 1
    %s26 = ssub.s32 %s20, 2
    %s27 = sadd.s32 %s20, 1
    %s28 = ssub.s32 %s20, %s27
    %p29 = scmp.eq.s32.totalorder %s28, 0
    %s31 = sadd.s32 %s30, 1
    %s32 = scalar_select %p29, %s30, %s31
    %p35 = pneg %p29
    %p36 = scmp.eq.s32.totalorder %s20, 1
    %p37 = por %p35, %p36
    %p38 = scmp.ne.s32.totalorder %s30, %s33
    %p39 = scmp.eq.s32.totalorder %s20, 0
    %p40 = por %p38, %p39
    %p41 = scmp.ne.s32.totalorder %s30, %s33
    %p42 = scmp.eq.s32.totalorder %s25, 1
    %p43 = por %p41, %p42
    %p44 = scmp.ne.s32.totalorder %s33, %s34
    %p45 = scmp.eq.s32.totalorder %s25, 0
    %p46 = por %p44, %p45
    %p47 = scmp.ne.s32.totalorder %s33, %s34
    %p48 = scmp.eq.s32.totalorder %s26, 1
    %p49 = por %p47, %p48
    %p51 = scmp.ne.s32.totalorder %s34, %s50
    %p52 = scmp.eq.s32.totalorder %s26, 0
    %p53 = por %p51, %p52
    %s55 = sadd.s32 %s54, 1
    %p58 = scmp.eq.s32.totalorder %s20, 1
    %p59 = scmp.ne.s32.totalorder %s54, %s56
    %p60 = scmp.eq.s32.totalorder %s20, 0
    %p61 = por %p59, %p60
    %p62 = scmp.ne.s32.totalorder %s54, %s56
    %p63 = scmp.eq.s32.totalorder %s25, 1
    %p64 = por %p62, %p63
    %p65 = scmp.ne.s32.totalorder %s56, %s57
    %p66 = scmp.eq.s32.totalorder %s25, 0
    %p67 = por %p65, %p66
    %p68 = scmp.ne.s32.totalorder %s56, %s57
    %p69 = scmp.eq.s32.totalorder %s26, 1
    %p70 = por %p68, %p69
    %p72 = scmp.ne.s32.totalorder %s57, %s71
    %p73 = scmp.eq.s32.totalorder %s26, 0
    %p74 = por %p72, %p73
    %s76 = sadd.s32 %s75, 1
    %p79 = scmp.eq.s32.totalorder %s20, 1
    %p80 = scmp.ne.s32.totalorder %s75, %s77
    %p81 = scmp.eq.s32.totalorder %s20, 0
    %p82 = por %p80, %p81
    %p83 = scmp.ne.s32.totalorder %s75, %s77
    %p84 = scmp.eq.s32.totalorder %s25, 1
    %p85 = por %p83, %p84
    %p86 = scmp.ne.s32.totalorder %s77, %s78
    %p87 = scmp.eq.s32.totalorder %s25, 0
    %p88 = por %p86, %p87
    %p89 = scmp.ne.s32.totalorder %s77, %s78
    %p90 = scmp.eq.s32.totalorder %s26, 1
    %p91 = por %p89, %p90
    %p93 = scmp.ne.s32.totalorder %s78, %s92
    %p94 = scmp.eq.s32.totalorder %s26, 0
    %p95 = por %p93, %p94
    %s97 = sadd.s32 %s96, 1
    %p100 = scmp.eq.s32.totalorder %s20, 1
    %p101 = scmp.ne.s32.totalorder %s96, %s98
    %p102 = scmp.eq.s32.totalorder %s20, 0
    %p103 = por %p101, %p102
    %p104 = scmp.ne.s32.totalorder %s96, %s98
    %p105 = scmp.eq.s32.totalorder %s25, 1
    %p106 = por %p104, %p105
    %p107 = scmp.ne.s32.totalorder %s98, %s99
    %p108 = scmp.eq.s32.totalorder %s25, 0
    %p109 = por %p107, %p108
    %p110 = scmp.ne.s32.totalorder %s98, %s99
    %p111 = scmp.eq.s32.totalorder %s26, 1
    %p112 = por %p110, %p111
    %p114 = scmp.ne.s32.totalorder %s99, %s113
    %p115 = scmp.eq.s32.totalorder %s26, 0
    %p116 = por %p114, %p115
    %s118 = sadd.s32 %s117, 1
    %p121 = scmp.eq.s32.totalorder %s20, 1
    %p122 = scmp.ne.s32.totalorder %s117, %s119
    %p123 = scmp.eq.s32.totalorder %s20, 0
    %p124 = por %p122, %p123
    %p125 = scmp.ne.s32.totalorder %s117, %s119
    %p126 = scmp.eq.s32.totalorder %s25, 1
    %p127 = por %p125, %p126
    %p128 = scmp.ne.s32.totalorder %s119, %s120
    %p129 = scmp.eq.s32.totalorder %s25, 0
    %p130 = por %p128, %p129
    %p131 = scmp.ne.s32.totalorder %s119, %s120
    %p132 = scmp.eq.s32.totalorder %s26, 1
    %p133 = por %p131, %p132
    %p135 = scmp.ne.s32.totalorder %s120, %s134
    %p136 = scmp.eq.s32.totalorder %s26, 0
    %p137 = por %p135, %p136
    %s139 = sadd.s32 %s138, 1
    %p142 = scmp.eq.s32.totalorder %s20, 1
    %p143 = scmp.ne.s32.totalorder %s138, %s140
    %p144 = scmp.eq.s32.totalorder %s20, 0
    %p145 = por %p143, %p144
    %p146 = scmp.ne.s32.totalorder %s138, %s140
    %p147 = scmp.eq.s32.totalorder %s25, 1
    %p148 = por %p146, %p147
    %p149 = scmp.ne.s32.totalorder %s140, %s141
    %p150 = scmp.eq.s32.totalorder %s25, 0
    %p151 = por %p149, %p150
    %p152 = scmp.ne.s32.totalorder %s140, %s141
    %p153 = scmp.eq.s32.totalorder %s26, 1
    %p154 = por %p152, %p153
    %p156 = scmp.ne.s32.totalorder %s141, %s155
    %p157 = scmp.eq.s32.totalorder %s26, 0
    %p158 = por %p156, %p157
    %s160 = sadd.s32 %s159, 1
    %p163 = scmp.eq.s32.totalorder %s20, 1
    %p164 = scmp.ne.s32.totalorder %s159, %s161
    %p165 = scmp.eq.s32.totalorder %s20, 0
    %p166 = por %p164, %p165
    %p167 = scmp.ne.s32.totalorder %s159, %s161
    %p168 = scmp.eq.s32.totalorder %s25, 1
    %p169 = por %p167, %p168
    %p170 = scmp.ne.s32.totalorder %s161, %s162
    %p171 = scmp.eq.s32.totalorder %s25, 0
    %p172 = por %p170, %p171
    %p173 = scmp.ne.s32.totalorder %s161, %s162
    %p174 = scmp.eq.s32.totalorder %s26, 1
    %p175 = por %p173, %p174
    %p177 = scmp.ne.s32.totalorder %s162, %s176
    %p178 = scmp.eq.s32.totalorder %s26, 0
    %p179 = por %p177, %p178
    %s181 = sadd.s32 %s180, 1
    %p184 = scmp.eq.s32.totalorder %s20, 1
    %p185 = scmp.ne.s32.totalorder %s180, %s182
    %p186 = scmp.eq.s32.totalorder %s20, 0
    %p187 = por %p185, %p186
    %p188 = scmp.ne.s32.totalorder %s180, %s182
    %p189 = scmp.eq.s32.totalorder %s25, 1
    %p190 = por %p188, %p189
    %p191 = scmp.ne.s32.totalorder %s182, %s183
    %p192 = scmp.eq.s32.totalorder %s25, 0
    %p193 = por %p191, %p192
    %p194 = scmp.ne.s32.totalorder %s182, %s183
    %p195 = scmp.eq.s32.totalorder %s26, 1
    %p196 = por %p194, %p195
    %p198 = scmp.ne.s32.totalorder %s183, %s197
    %p199 = scmp.eq.s32.totalorder %s26, 0
    %p200 = por %p198, %p199
    %s202 = sadd.s32 %s201, 1
    %p205 = scmp.eq.s32.totalorder %s20, 1
    %p206 = scmp.ne.s32.totalorder %s201, %s203
    %p207 = scmp.eq.s32.totalorder %s20, 0
    %p208 = por %p206, %p207
    %p209 = scmp.ne.s32.totalorder %s201, %s203
    %p210 = scmp.eq.s32.totalorder %s25, 1
    %p211 = por %p209, %p210
    %p212 = scmp.ne.s32.totalorder %s203, %s204
    %p213 = scmp.eq.s32.totalorder %s25, 0
    %p214 = por %p212, %p213
    %p215 = scmp.ne.s32.totalorder %s203, %s204
    %p216 = scmp.eq.s32.totalorder %s26, 1
    %p217 = por %p215, %p216
    %p219 = scmp.ne.s32.totalorder %s204, %s218
    %p220 = scmp.eq.s32.totalorder %s26, 0
    %p221 = por %p219, %p220
    %s223 = sadd.s32 %s222, 1
    %p226 = scmp.eq.s32.totalorder %s20, 1
    %p227 = scmp.ne.s32.totalorder %s222, %s224
    %p228 = scmp.eq.s32.totalorder %s20, 0
    %p229 = por %p227, %p228
    %p230 = scmp.ne.s32.totalorder %s222, %s224
    %p231 = scmp.eq.s32.totalorder %s25, 1
    %p232 = por %p230, %p231
    %p233 = scmp.ne.s32.totalorder %s224, %s225
    %p234 = scmp.eq.s32.totalorder %s25, 0
    %p235 = por %p233, %p234
    %p236 = scmp.ne.s32.totalorder %s224, %s225
    %p237 = scmp.eq.s32.totalorder %s26, 1
    %p238 = por %p236, %p237
    %p240 = scmp.ne.s32.totalorder %s225, %s239
    %p241 = scmp.eq.s32.totalorder %s26, 0
    %p242 = por %p240, %p241
    %s244 = sadd.s32 %s243, 1
    %p247 = scmp.eq.s32.totalorder %s20, 1
    %p248 = scmp.ne.s32.totalorder %s243, %s245
    %p249 = scmp.eq.s32.totalorder %s20, 0
    %p250 = por %p248, %p249
    %p251 = scmp.ne.s32.totalorder %s243, %s245
    %p252 = scmp.eq.s32.totalorder %s25, 1
    %p253 = por %p251, %p252
    %p254 = scmp.ne.s32.totalorder %s245, %s246
    %p255 = scmp.eq.s32.totalorder %s25, 0
    %p256 = por %p254, %p255
    %p257 = scmp.ne.s32.totalorder %s245, %s246
    %p258 = scmp.eq.s32.totalorder %s26, 1
    %p259 = por %p257, %p258
    %p261 = scmp.ne.s32.totalorder %s246, %s260
    %p262 = scmp.eq.s32.totalorder %s26, 0
    %p263 = por %p261, %p262
    %s265 = sadd.s32 %s264, 1
    %p268 = scmp.eq.s32.totalorder %s20, 1
    %p269 = scmp.ne.s32.totalorder %s264, %s266
    %p270 = scmp.eq.s32.totalorder %s20, 0
    %p271 = por %p269, %p270
    %p272 = scmp.ne.s32.totalorder %s264, %s266
    %p273 = scmp.eq.s32.totalorder %s25, 1
    %p274 = por %p272, %p273
    %p275 = scmp.ne.s32.totalorder %s266, %s267
    %p276 = scmp.eq.s32.totalorder %s25, 0
    %p277 = por %p275, %p276
    %p278 = scmp.ne.s32.totalorder %s266, %s267
    %p279 = scmp.eq.s32.totalorder %s26, 1
    %p280 = por %p278, %p279
    %p282 = scmp.ne.s32.totalorder %s267, %s281
    %p283 = scmp.eq.s32.totalorder %s26, 0
    %p284 = por %p282, %p283
    %s286 = sadd.s32 %s285, 1
    %p289 = scmp.eq.s32.totalorder %s20, 1
    %p290 = scmp.ne.s32.totalorder %s285, %s287
    %p291 = scmp.eq.s32.totalorder %s20, 0
    %p292 = por %p290, %p291
    %p293 = scmp.ne.s32.totalorder %s285, %s287
    %p294 = scmp.eq.s32.totalorder %s25, 1
    %p295 = por %p293, %p294
    %p296 = scmp.ne.s32.totalorder %s287, %s288
    %p297 = scmp.eq.s32.totalorder %s25, 0
    %p298 = por %p296, %p297
    %p299 = scmp.ne.s32.totalorder %s287, %s288
    %p300 = scmp.eq.s32.totalorder %s26, 1
    %p301 = por %p299, %p300
    %p303 = scmp.ne.s32.totalorder %s288, %s302
    %p304 = scmp.eq.s32.totalorder %s26, 0
    %p305 = por %p303, %p304
    %s307 = sadd.s32 %s306, 1
    %p310 = scmp.eq.s32.totalorder %s20, 1
    %p311 = scmp.ne.s32.totalorder %s306, %s308
    %p312 = scmp.eq.s32.totalorder %s20, 0
    %p313 = por %p311, %p312
    %p314 = scmp.ne.s32.totalorder %s306, %s308
    %p315 = scmp.eq.s32.totalorder %s25, 1
    %p316 = por %p314, %p315
    %p317 = scmp.ne.s32.totalorder %s308, %s309
    %p318 = scmp.eq.s32.totalorder %s25, 0
    %p319 = por %p317, %p318
    %p320 = scmp.ne.s32.totalorder %s308, %s309
    %p321 = scmp.eq.s32.totalorder %s26, 1
    %p322 = por %p320, %p321
    %p324 = scmp.ne.s32.totalorder %s309, %s323
    %p325 = scmp.eq.s32.totalorder %s26, 0
    %p326 = por %p324, %p325
    %s327 = ssub.s32 %s20, %s27
    %p328 = scmp.eq.s32.totalorder %s327, 0
    %s330 = sadd.s32 %s329, 1
    %s331 = scalar_select %p328, %s329, %s330
    %p334 = pneg %p328
    %p335 = scmp.eq.s32.totalorder %s20, 1
    %p336 = por %p334, %p335
    %p337 = scmp.ne.s32.totalorder %s329, %s332
    %p338 = scmp.eq.s32.totalorder %s20, 0
    %p339 = por %p337, %p338
    %p340 = scmp.ne.s32.totalorder %s329, %s332
    %p341 = scmp.eq.s32.totalorder %s25, 1
    %p342 = por %p340, %p341
    %p343 = scmp.ne.s32.totalorder %s332, %s333
    %p344 = scmp.eq.s32.totalorder %s25, 0
    %p345 = por %p343, %p344
    %p346 = scmp.ne.s32.totalorder %s332, %s333
    %p347 = scmp.eq.s32.totalorder %s26, 1
    %p348 = por %p346, %p347
    %p350 = scmp.ne.s32.totalorder %s333, %s349
    %p351 = scmp.eq.s32.totalorder %s26, 0
    %p352 = por %p350, %p351
    %p353 = scmp.le.s32.totalorder 1, %s20
    %p354 = scmp.lt.s32.totalorder %s20, 3
    %p355 = pnand %p353, %p354
    %p356 = pneg %p355
    // Predicated region
    $region9: #{basic_block_up_forward.3} parent=5 // pred_check
      _
    $region10: #{basic_block_up_forward.3} parent=5 // pred_check_branch
      %358 = sbr.rel (%p355) target = $region12
    $region11: #{basic_block_up_forward.3} parent=5 // pred_region
      %s359 = ssub.s32 %s20, 1
      // Predicated region
      $region13: #{basic_block_up_forward.3} parent=11 // pred_check
        %p360 = pneg %p67
      $region14: #{basic_block_up_forward.3} parent=11 // pred_check_branch
        %362 = sbr.rel (%p360) target = $region16
      $region15: #{basic_block_up_forward.3} parent=11 // pred_region
        _
      $region16: #{basic_block_up_forward.3} parent=11 // pred_fallthru
        _
      // Predicated region
      $region17: #{basic_block_up_forward.3} parent=11 // pred_check
        %p363 = pneg %p88
      $region18: #{basic_block_up_forward.3} parent=11 // pred_check_branch
        %365 = sbr.rel (%p363) target = $region20
      $region19: #{basic_block_up_forward.3} parent=11 // pred_region
        _
      $region20: #{basic_block_up_forward.3} parent=11 // pred_fallthru
        _
      // Predicated region
      $region21: #{basic_block_up_forward.3} parent=11 // pred_check
        %p366 = pneg %p109
      $region22: #{basic_block_up_forward.3} parent=11 // pred_check_branch
        %368 = sbr.rel (%p366) target = $region24
      $region23: #{basic_block_up_forward.3} parent=11 // pred_region
        _
      $region24: #{basic_block_up_forward.3} parent=11 // pred_fallthru
        _
      // Predicated region
      $region25: #{basic_block_up_forward.3} parent=11 // pred_check
        %p369 = pneg %p130
      $region26: #{basic_block_up_forward.3} parent=11 // pred_check_branch
        %371 = sbr.rel (%p369) target = $region28
      $region27: #{basic_block_up_forward.3} parent=11 // pred_region
        _
      $region28: #{basic_block_up_forward.3} parent=11 // pred_fallthru
        _
      // Predicated region
      $region29: #{basic_block_up_forward.3} parent=11 // pred_check
        %p372 = pneg %p151
      $region30: #{basic_block_up_forward.3} parent=11 // pred_check_branch
        %374 = sbr.rel (%p372) target = $region32
      $region31: #{basic_block_up_forward.3} parent=11 // pred_region
        _
      $region32: #{basic_block_up_forward.3} parent=11 // pred_fallthru
        _
      // Predicated region
      $region33: #{basic_block_up_forward.3} parent=11 // pred_check
        %p375 = pneg %p172
      $region34: #{basic_block_up_forward.3} parent=11 // pred_check_branch
        %377 = sbr.rel (%p375) target = $region36
      $region35: #{basic_block_up_forward.3} parent=11 // pred_region
        _
      $region36: #{basic_block_up_forward.3} parent=11 // pred_fallthru
        _
      // Predicated region
      $region37: #{basic_block_up_forward.3} parent=11 // pred_check
        %p378 = pneg %p193
      $region38: #{basic_block_up_forward.3} parent=11 // pred_check_branch
        %380 = sbr.rel (%p378) target = $region40
      $region39: #{basic_block_up_forward.3} parent=11 // pred_region
        _
      $region40: #{basic_block_up_forward.3} parent=11 // pred_fallthru
        _
      // Predicated region
      $region41: #{basic_block_up_forward.3} parent=11 // pred_check
        %p381 = pneg %p214
      $region42: #{basic_block_up_forward.3} parent=11 // pred_check_branch
        %383 = sbr.rel (%p381) target = $region44
      $region43: #{basic_block_up_forward.3} parent=11 // pred_region
        _
      $region44: #{basic_block_up_forward.3} parent=11 // pred_fallthru
        _
      // Predicated region
      $region45: #{basic_block_up_forward.3} parent=11 // pred_check
        %p384 = pneg %p235
      $region46: #{basic_block_up_forward.3} parent=11 // pred_check_branch
        %386 = sbr.rel (%p384) target = $region48
      $region47: #{basic_block_up_forward.3} parent=11 // pred_region
        _
      $region48: #{basic_block_up_forward.3} parent=11 // pred_fallthru
        _
      // Predicated region
      $region49: #{basic_block_up_forward.3} parent=11 // pred_check
        %p387 = pneg %p256
      $region50: #{basic_block_up_forward.3} parent=11 // pred_check_branch
        %389 = sbr.rel (%p387) target = $region52
      $region51: #{basic_block_up_forward.3} parent=11 // pred_region
        _
      $region52: #{basic_block_up_forward.3} parent=11 // pred_fallthru
        _
      // Predicated region
      $region53: #{basic_block_up_forward.3} parent=11 // pred_check
        %p390 = pneg %p277
      $region54: #{basic_block_up_forward.3} parent=11 // pred_check_branch
        %392 = sbr.rel (%p390) target = $region56
      $region55: #{basic_block_up_forward.3} parent=11 // pred_region
        _
      $region56: #{basic_block_up_forward.3} parent=11 // pred_fallthru
        _
      // Predicated region
      $region57: #{basic_block_up_forward.3} parent=11 // pred_check
        %p393 = pneg %p298
      $region58: #{basic_block_up_forward.3} parent=11 // pred_check_branch
        %395 = sbr.rel (%p393) target = $region60
      $region59: #{basic_block_up_forward.3} parent=11 // pred_region
        _
      $region60: #{basic_block_up_forward.3} parent=11 // pred_fallthru
        _
      // Predicated region
      $region61: #{basic_block_up_forward.3} parent=11 // pred_check
        %p396 = pneg %p319
      $region62: #{basic_block_up_forward.3} parent=11 // pred_check_branch
        %398 = sbr.rel (%p396) target = $region64
      $region63: #{basic_block_up_forward.3} parent=11 // pred_region
        _
      $region64: #{basic_block_up_forward.3} parent=11 // pred_fallthru
        _
    $region12: #{basic_block_up_forward.3} parent=5 // pred_fallthru
      _
    %p399 = scmp.lt.s32.totalorder %s20, 2
    // Predicated region
    $region65: #{basic_block_up_forward.3} parent=5 // pred_check
      %p400 = pneg %p399
    $region66: #{basic_block_up_forward.3} parent=5 // pred_check_branch
      %402 = sbr.rel (%p400) target = $region68
    $region67: #{basic_block_up_forward.3} parent=5 // pred_region
      // Predicated region
      $region69: #{basic_block_up_forward.3} parent=67 // pred_check
        %p403 = pneg %p40
      $region70: #{basic_block_up_forward.3} parent=67 // pred_check_branch
        %405 = sbr.rel (%p403) target = $region72
      $region71: #{basic_block_up_forward.3} parent=67 // pred_region
        %s406 = smul.u32 8, %s20
        %p407 = scmp.lt.s32.totalorder %s406, 15
        %s408 = scalar_select %p407, %s406, 15
        %s409 = smul.addr %s408, 4
        %s410 = scalar_lea.vmem %s0, %s409
        %s411 = smul.u32 8, %s20
      $region72: #{basic_block_up_forward.3} parent=67 // pred_fallthru
        _
    $region68: #{basic_block_up_forward.3} parent=5 // pred_fallthru
      _
    %p412 = scmp.le.s32.totalorder 1, %s20
    %p413 = scmp.lt.s32.totalorder %s20, 3
    %p414 = pnand %p412, %p413
    %p415 = pneg %p414
    // Predicated region
    $region73: #{basic_block_up_forward.3} parent=5 // pred_check
      _
    $region74: #{basic_block_up_forward.3} parent=5 // pred_check_branch
      %417 = sbr.rel (%p414) target = $region76
    $region75: #{basic_block_up_forward.3} parent=5 // pred_region
      %s418 = ssub.s32 %s20, 1
      %s419 = smul.u32 8, %s25
      %p420 = scmp.lt.s32.totalorder %s419, 15
      %s421 = scalar_select %p420, %s419, 15
      %s422 = smul.addr %s421, 4
      %s423 = scalar_lea.vmem %s0, %s422
      %p424 = pneg %p46
      %p425 = pneg %p43
      %p426 = pneg %p67
      %p427 = pneg %p64
      %p428 = pneg %p88
      %p429 = pneg %p85
      %p430 = pneg %p109
      %p431 = pneg %p106
      %p432 = pneg %p130
      %p433 = pneg %p127
      %p434 = pneg %p151
      %p435 = pneg %p148
      %p436 = pneg %p172
      %p437 = pneg %p169
      %p438 = pneg %p193
      %p439 = pneg %p190
      %p440 = pneg %p214
      %p441 = pneg %p211
      %p442 = pneg %p235
      %p443 = pneg %p232
      %p444 = pneg %p256
      %p445 = pneg %p253
      %p446 = pneg %p277
      %p447 = pneg %p274
      %p448 = pneg %p298
      %p449 = pneg %p295
      %p450 = pneg %p319
      %p451 = pneg %p316
      %p452 = pneg %p345
      %p453 = pneg %p342
      %s454 = smul.u32 8, %s25
      %p455 = scmp.lt.s32.totalorder %s454, 15
      %s456 = scalar_select %p455, %s454, 15
      %s457 = smul.addr %s456, 4
      %s458 = scalar_lea.vmem %s14, %s457
      %s459 = smul.u32 8, %s25
      %p460 = scmp.lt.s32.totalorder %s459, 15
      %s461 = scalar_select %p460, %s459, 15
      %s462 = smul.addr %s461, 4
      %s463 = scalar_lea.vmem %s0, %s462
      %s464 = smul.u32 8, %s25
      %s465 = smul.u32 8, %s25
      %p466 = scmp.lt.s32.totalorder %s465, 15
      %s467 = scalar_select %p466, %s465, 15
      %s468 = smul.addr %s467, 4
      %s469 = scalar_lea.vmem %s14, %s468
      %s470 = smul.u32 8, %s25
      %v472 = vld [vmem:[%s463] sm:$0xf]
      %v473 = vld [vmem:[%s463 + $0x4] sm:$0xf]
      %v474 = vld [vmem:[%s463 + $0x8] sm:$0xf]
      %v475 = vld [vmem:[%s463 + $0xc] sm:$0xf]
      %v476 = vld [vmem:[%s463 + $0x10] sm:$0xf]
      %v477 = vld [vmem:[%s463 + $0x14] sm:$0xf]
      %v478 = vld [vmem:[%s463 + $0x18] sm:$0xf]
      %v479 = vld [vmem:[%s463 + $0x1c] sm:$0xf]
      %v480 = vunpack.c.l.bf16 %v472
      %v481 = vunpack.c.l.bf16 %v473
      %v482 = vunpack.c.l.bf16 %v474
      %v483 = vunpack.c.l.bf16 %v475
      %v484 = vunpack.c.l.bf16 %v476
      %v485 = vunpack.c.l.bf16 %v477
      %v486 = vunpack.c.l.bf16 %v478
      %v487 = vunpack.c.l.bf16 %v479
      %v488 = vld [vmem:[%s2] sm:$0x1]
      %v489 = vld [vmem:[%s3] sm:$0x1]
      %vm490 = vcmask 130048
      %v491 = vsel %vm490, %v480, 0.0
      %492 = vadd.xlane.f32.xlu0 %v491
      %v493 = vpop.xlane.xlu0 %492
      %v494 = vsel %vm490, %v481, 0.0
      %495 = vadd.xlane.f32.xlu0 %v494
      %v496 = vpop.xlane.xlu0 %495
      %v497 = vsel %vm490, %v482, 0.0
      %498 = vadd.xlane.f32.xlu0 %v497
      %v499 = vpop.xlane.xlu0 %498
      %v500 = vsel %vm490, %v483, 0.0
      %501 = vadd.xlane.f32.xlu0 %v500
      %v502 = vpop.xlane.xlu0 %501
      %v503 = vsel %vm490, %v484, 0.0
      %504 = vadd.xlane.f32.xlu0 %v503
      %v505 = vpop.xlane.xlu0 %504
      %v506 = vsel %vm490, %v485, 0.0
      %507 = vadd.xlane.f32.xlu0 %v506
      %v508 = vpop.xlane.xlu0 %507
      %v509 = vsel %vm490, %v486, 0.0
      %510 = vadd.xlane.f32.xlu0 %v509
      %v511 = vpop.xlane.xlu0 %510
      %v512 = vsel %vm490, %v487, 0.0
      %513 = vadd.xlane.f32.xlu0 %v512
      %v514 = vpop.xlane.xlu0 %513
      %v515 = vrcp.pop 16.0
      %v516 = vmul.f32 16.0, %v515
      %v517 = vsub.f32 1.0, %v516
      %v518 = vmul.f32 %v515, %v517
      %v519 = vadd.f32 %v515, %v518
      %vm520 = vweird.f32 %v515
      %v521 = vsel %vm520, %v515, %v519
      %v522 = vmul.f32 %v493, %v521
      %v523 = vmul.f32 %v496, %v521
      %v524 = vmul.f32 %v499, %v521
      %v525 = vmul.f32 %v502, %v521
      %v526 = vmul.f32 %v505, %v521
      %v527 = vmul.f32 %v508, %v521
      %v528 = vmul.f32 %v511, %v521
      %v529 = vmul.f32 %v514, %v521
      %v530 = vsub.f32 %v480, %v522
      %v531 = vsub.f32 %v481, %v523
      %v532 = vsub.f32 %v482, %v524
      %v533 = vsub.f32 %v483, %v525
      %v534 = vsub.f32 %v484, %v526
      %v535 = vsub.f32 %v485, %v527
      %v536 = vsub.f32 %v486, %v528
      %v537 = vsub.f32 %v487, %v529
      %v538 = vmul.f32 %v530, %v530
      %v539 = vmul.f32 %v531, %v531
      %v540 = vmul.f32 %v532, %v532
      %v541 = vmul.f32 %v533, %v533
      %v542 = vmul.f32 %v534, %v534
      %v543 = vmul.f32 %v535, %v535
      %v544 = vmul.f32 %v536, %v536
      %v545 = vmul.f32 %v537, %v537
      %v546 = vsel %vm490, %v538, 0.0
      %547 = vadd.xlane.f32.xlu0 %v546
      %v548 = vpop.xlane.xlu0 %547
      %v549 = vsel %vm490, %v539, 0.0
      %550 = vadd.xlane.f32.xlu0 %v549
      %v551 = vpop.xlane.xlu0 %550
      %v552 = vsel %vm490, %v540, 0.0
      %553 = vadd.xlane.f32.xlu0 %v552
      %v554 = vpop.xlane.xlu0 %553
      %v555 = vsel %vm490, %v541, 0.0
      %556 = vadd.xlane.f32.xlu0 %v555
      %v557 = vpop.xlane.xlu0 %556
      %v558 = vsel %vm490, %v542, 0.0
      %559 = vadd.xlane.f32.xlu0 %v558
      %v560 = vpop.xlane.xlu0 %559
      %v561 = vsel %vm490, %v543, 0.0
      %562 = vadd.xlane.f32.xlu0 %v561
      %v563 = vpop.xlane.xlu0 %562
      %v564 = vsel %vm490, %v544, 0.0
      %565 = vadd.xlane.f32.xlu0 %v564
      %v566 = vpop.xlane.xlu0 %565
      %v567 = vsel %vm490, %v545, 0.0
      %568 = vadd.xlane.f32.xlu0 %v567
      %v569 = vpop.xlane.xlu0 %568
      %v570 = vmul.f32 %v548, %v521
      %v571 = vmul.f32 %v551, %v521
      %v572 = vmul.f32 %v554, %v521
      %v573 = vmul.f32 %v557, %v521
      %v574 = vmul.f32 %v560, %v521
      %v575 = vmul.f32 %v563, %v521
      %v576 = vmul.f32 %v566, %v521
      %v577 = vmul.f32 %v569, %v521
      %v578 = vadd.f32 %v570, 1e-05
      %v579 = vadd.f32 %v571, 1e-05
      %v580 = vadd.f32 %v572, 1e-05
      %v581 = vadd.f32 %v573, 1e-05
      %v582 = vadd.f32 %v574, 1e-05
      %v583 = vadd.f32 %v575, 1e-05
      %v584 = vadd.f32 %v576, 1e-05
      %v585 = vadd.f32 %v577, 1e-05
      %v586 = vrsqrt.pop %v578
      %v587 = vmul.f32 %v586, %v578
      %v588 = vmul.f32 %v587, %v586
      %v589 = vmul.f32 0.5, %v588
      %v590 = vsub.f32 1.5, %v589
      %v591 = vmul.f32 %v586, %v590
      %vm592 = vweird.f32 %v578
      %vm593 = vweird.f32 %v586
      %vm594 = vmor %vm592, %vm593
      %v595 = vsel %vm594, %v586, %v591
      %v596 = vrsqrt.pop %v579
      %v597 = vmul.f32 %v596, %v579
      %v598 = vmul.f32 %v597, %v596
      %v599 = vmul.f32 0.5, %v598
      %v600 = vsub.f32 1.5, %v599
      %v601 = vmul.f32 %v596, %v600
      %vm602 = vweird.f32 %v579
      %vm603 = vweird.f32 %v596
      %vm604 = vmor %vm602, %vm603
      %v605 = vsel %vm604, %v596, %v601
      %v606 = vrsqrt.pop %v580
      %v607 = vmul.f32 %v606, %v580
      %v608 = vmul.f32 %v607, %v606
      %v609 = vmul.f32 0.5, %v608
      %v610 = vsub.f32 1.5, %v609
      %v611 = vmul.f32 %v606, %v610
      %vm612 = vweird.f32 %v580
      %vm613 = vweird.f32 %v606
      %vm614 = vmor %vm612, %vm613
      %v615 = vsel %vm614, %v606, %v611
      %v616 = vrsqrt.pop %v581
      %v617 = vmul.f32 %v616, %v581
      %v618 = vmul.f32 %v617, %v616
      %v619 = vmul.f32 0.5, %v618
      %v620 = vsub.f32 1.5, %v619
      %v621 = vmul.f32 %v616, %v620
      %vm622 = vweird.f32 %v581
      %vm623 = vweird.f32 %v616
      %vm624 = vmor %vm622, %vm623
      %v625 = vsel %vm624, %v616, %v621
      %v626 = vrsqrt.pop %v582
      %v627 = vmul.f32 %v626, %v582
      %v628 = vmul.f32 %v627, %v626
      %v629 = vmul.f32 0.5, %v628
      %v630 = vsub.f32 1.5, %v629
      %v631 = vmul.f32 %v626, %v630
      %vm632 = vweird.f32 %v582
      %vm633 = vweird.f32 %v626
      %vm634 = vmor %vm632, %vm633
      %v635 = vsel %vm634, %v626, %v631
      %v636 = vrsqrt.pop %v583
      %v637 = vmul.f32 %v636, %v583
      %v638 = vmul.f32 %v637, %v636
      %v639 = vmul.f32 0.5, %v638
      %v640 = vsub.f32 1.5, %v639
      %v641 = vmul.f32 %v636, %v640
      %vm642 = vweird.f32 %v583
      %vm643 = vweird.f32 %v636
      %vm644 = vmor %vm642, %vm643
      %v645 = vsel %vm644, %v636, %v641
      %v646 = vrsqrt.pop %v584
      %v647 = vmul.f32 %v646, %v584
      %v648 = vmul.f32 %v647, %v646
      %v649 = vmul.f32 0.5, %v648
      %v650 = vsub.f32 1.5, %v649
      %v651 = vmul.f32 %v646, %v650
      %vm652 = vweird.f32 %v584
      %vm653 = vweird.f32 %v646
      %vm654 = vmor %vm652, %vm653
      %v655 = vsel %vm654, %v646, %v651
      %v656 = vrsqrt.pop %v585
      %v657 = vmul.f32 %v656, %v585
      %v658 = vmul.f32 %v657, %v656
      %v659 = vmul.f32 0.5, %v658
      %v660 = vsub.f32 1.5, %v659
      %v661 = vmul.f32 %v656, %v660
      %vm662 = vweird.f32 %v585
      %vm663 = vweird.f32 %v656
      %vm664 = vmor %vm662, %vm663
      %v665 = vsel %vm664, %v656, %v661
      %v666 = vmul.f32 %v530, %v595
      %v667 = vmul.f32 %v531, %v605
      %v668 = vmul.f32 %v532, %v615
      %v669 = vmul.f32 %v533, %v625
      %v670 = vmul.f32 %v534, %v635
      %v671 = vmul.f32 %v535, %v645
      %v672 = vmul.f32 %v536, %v655
      %v673 = vmul.f32 %v537, %v665
      %v675 = vperm.slane %v488, 0
      %v677 = vmul.f32 %v666, %v675
      %v678 = vmul.f32 %v667, %v675
      %v679 = vmul.f32 %v668, %v675
      %v680 = vmul.f32 %v669, %v675
      %v681 = vmul.f32 %v670, %v675
      %v682 = vmul.f32 %v671, %v675
      %v683 = vmul.f32 %v672, %v675
      %v684 = vmul.f32 %v673, %v675
      %v686 = vperm.slane %v489, 0
      %v688 = vadd.f32 %v677, %v686
      %v689 = vadd.f32 %v678, %v686
      %v690 = vadd.f32 %v679, %v686
      %v691 = vadd.f32 %v680, %v686
      %v692 = vadd.f32 %v681, %v686
      %v693 = vadd.f32 %v682, %v686
      %v694 = vadd.f32 %v683, %v686
      %v695 = vadd.f32 %v684, %v686
      %v696 = vpack.c.bf16 %v689, %v688
      %v697 = vpack.c.bf16 %v691, %v690
      %v698 = vpack.c.bf16 %v693, %v692
      %v699 = vpack.c.bf16 %v695, %v694
      %v700 = vld [vmem:[%s4] sm:$0xf]
      %v701 = vld [vmem:[%s4 + $0x4] sm:$0xf]
      %v702 = vld [vmem:[%s5] sm:$0x1]
      %v704 = vperm.slane %v702, 0
      %v708 = vunpack.c.l.b16 %v700
      %v709 = vunpack.c.l.b16 %v701
      %v710 = vpack.c.b16 %v709, %v708
      %v713 = vsel %vm490, %v696, 0
      %v716 = vsel %vm490, %v697, 0
      %v719 = vsel %vm490, %v698, 0
      %v722 = vsel %vm490, %v699, 0
      %724 = vmatpush.bf16.msra.mxu0 0
      %725 = vmatpush.bf16.msra.mxu0 0
      %726 = vmatpush.bf16.msra.mxu0 0
      %727 = vmatpush.bf16.msra.mxu0 0
      %728 = vmatpush.bf16.msra.mxu0 0
      %729 = vmatpush.bf16.msra.mxu0 0
      %730 = vmatpush.bf16.msra.mxu0 0
      %731 = vmatpush.bf16.msra.mxu0 %v710
      %732 = vmatmul.bf16.gmra.mxu0 %v713
      %v733 = vpop.f32.mrf.mxu0
      %v734 = vadd.f32 %v704, %v733
      %v735 = vpop.f32.mrf.mxu0
      %v736 = vadd.f32 %v704, %v735
      %737 = vmatmul.bf16.gmra.mxu0 %v716
      %v738 = vpop.f32.mrf.mxu0
      %v739 = vadd.f32 %v704, %v738
      %v740 = vpop.f32.mrf.mxu0
      %v741 = vadd.f32 %v704, %v740
      %742 = vmatmul.bf16.gmra.mxu0 %v719
      %v743 = vpop.f32.mrf.mxu0
      %v744 = vadd.f32 %v704, %v743
      %v745 = vpop.f32.mrf.mxu0
      %v746 = vadd.f32 %v704, %v745
      %747 = vmatmul.bf16.gmra.mxu0 %v722
      %v748 = vpop.f32.mrf.mxu0
      %v749 = vadd.f32 %v704, %v748
      %v750 = vpop.f32.mrf.mxu0
      %v751 = vadd.f32 %v704, %v750
      %752 = vdwg.mxu0
      %v753 = vld [vmem:[%s1] sm:$0xff]
      %v754 = vld [vmem:[%s1 + $0x8] sm:$0xff]
      %v755 = vld [vmem:[%s1 + $0x10] sm:$0xff]
      %v756 = vld [vmem:[%s1 + $0x18] sm:$0xff]
      %v757 = vmul.f32 %v734, 0.35355338
      %v758 = vmul.f32 %v736, 0.35355338
      %v759 = vmul.f32 %v739, 0.35355338
      %v760 = vmul.f32 %v741, 0.35355338
      %v761 = vmul.f32 %v744, 0.35355338
      %v762 = vmul.f32 %v746, 0.35355338
      %v763 = vmul.f32 %v749, 0.35355338
      %v764 = vmul.f32 %v751, 0.35355338
      %v765 = vpack.c.bf16 %v757, %v757
      %v766 = vpack.c.bf16 %v758, %v758
      %v767 = vpack.c.bf16 %v759, %v759
      %v768 = vpack.c.bf16 %v760, %v760
      %v769 = vpack.c.bf16 %v761, %v761
      %v770 = vpack.c.bf16 %v762, %v762
      %v771 = vpack.c.bf16 %v763, %v763
      %v772 = vpack.c.bf16 %v764, %v764
      %v773 = vpack.c.bf16 %v734, %v734
      %v774 = vpack.c.bf16 %v736, %v736
      %v775 = vpack.c.bf16 %v739, %v739
      %v776 = vpack.c.bf16 %v741, %v741
      %v777 = vpack.c.bf16 %v744, %v744
      %v778 = vpack.c.bf16 %v746, %v746
      %v779 = vpack.c.bf16 %v749, %v749
      %v780 = vpack.c.bf16 %v751, %v751
      %v783 = vunpack.c.l.b16 %v765
      %v784 = vunpack.c.l.b16 %v766
      %v785 = vpack.c.b16 %v784, %v783
      %v788 = vunpack.c.l.b16 %v773
      %v789 = vunpack.c.l.b16 %v774
      %v790 = vpack.c.b16 %v789, %v788
      %791 = vrot.lane.b32.xlu0 %v790, 112
      %v792 = vpop.permute.xlu0 %791
      %vm793 = vcmask 64512
      %v795 = vsel %vm793, %v785, 0
      %v798 = vsel %vm793, %v792, 0
      %800 = vmatpush.bf16.xpose.msra.mxu0 0
      %801 = vmatpush.bf16.xpose.msra.mxu0 0
      %802 = vmatpush.bf16.xpose.msra.mxu0 0
      %803 = vmatpush.bf16.xpose.msra.mxu0 0
      %804 = vmatpush.bf16.xpose.msra.mxu0 0
      %805 = vmatpush.bf16.xpose.msra.mxu0 0
      %806 = vmatpush.bf16.xpose.msra.mxu0 0
      %807 = vmatpush.bf16.xpose.msra.mxu0 %v798
      %808 = vmatmul.bf16.gmra.mxu0 %v795
      %v809 = vpop.f32.mrf.mxu0
      %v810 = vadd.f32 %v753, %v809
      %v811 = vpop.f32.mrf.mxu0
      %v812 = vadd.f32 %v754, %v811
      %813 = vdwg.mxu0
      %v816 = vunpack.c.l.b16 %v767
      %v817 = vunpack.c.l.b16 %v768
      %v818 = vpack.c.b16 %v817, %v816
      %v821 = vunpack.c.l.b16 %v775
      %v822 = vunpack.c.l.b16 %v776
      %v823 = vpack.c.b16 %v822, %v821
      %824 = vrot.lane.b32.xlu0 %v823, 112
      %v825 = vpop.permute.xlu0 %824
      %v827 = vsel %vm793, %v818, 0
      %v830 = vsel %vm793, %v825, 0
      %832 = vmatpush.bf16.xpose.msra.mxu0 0
      %833 = vmatpush.bf16.xpose.msra.mxu0 0
      %834 = vmatpush.bf16.xpose.msra.mxu0 0
      %835 = vmatpush.bf16.xpose.msra.mxu0 0
      %836 = vmatpush.bf16.xpose.msra.mxu0 0
      %837 = vmatpush.bf16.xpose.msra.mxu0 0
      %838 = vmatpush.bf16.xpose.msra.mxu0 0
      %839 = vmatpush.bf16.xpose.msra.mxu0 %v830
      %840 = vmatmul.bf16.gmra.mxu0 %v827
      %v841 = vpop.f32.mrf.mxu0
      %v842 = vadd.f32 %v753, %v841
      %v843 = vpop.f32.mrf.mxu0
      %v844 = vadd.f32 %v754, %v843
      %845 = vdwg.mxu0
      %v848 = vunpack.c.l.b16 %v769
      %v849 = vunpack.c.l.b16 %v770
      %v850 = vpack.c.b16 %v849, %v848
      %v853 = vunpack.c.l.b16 %v777
      %v854 = vunpack.c.l.b16 %v778
      %v855 = vpack.c.b16 %v854, %v853
      %856 = vrot.lane.b32.xlu0 %v855, 112
      %v857 = vpop.permute.xlu0 %856
      %v859 = vsel %vm793, %v850, 0
      %v862 = vsel %vm793, %v857, 0
      %864 = vmatpush.bf16.xpose.msra.mxu0 0
      %865 = vmatpush.bf16.xpose.msra.mxu0 0
      %866 = vmatpush.bf16.xpose.msra.mxu0 0
      %867 = vmatpush.bf16.xpose.msra.mxu0 0
      %868 = vmatpush.bf16.xpose.msra.mxu0 0
      %869 = vmatpush.bf16.xpose.msra.mxu0 0
      %870 = vmatpush.bf16.xpose.msra.mxu0 0
      %871 = vmatpush.bf16.xpose.msra.mxu0 %v862
      %872 = vmatmul.bf16.gmra.mxu0 %v859
      %v873 = vpop.f32.mrf.mxu0
      %v874 = vadd.f32 %v753, %v873
      %v875 = vpop.f32.mrf.mxu0
      %v876 = vadd.f32 %v754, %v875
      %877 = vdwg.mxu0
      %v880 = vunpack.c.l.b16 %v771
      %v881 = vunpack.c.l.b16 %v772
      %v882 = vpack.c.b16 %v881, %v880
      %v885 = vunpack.c.l.b16 %v779
      %v886 = vunpack.c.l.b16 %v780
      %v887 = vpack.c.b16 %v886, %v885
      %888 = vrot.lane.b32.xlu0 %v887, 112
      %v889 = vpop.permute.xlu0 %888
      %v891 = vsel %vm793, %v882, 0
      %v894 = vsel %vm793, %v889, 0
      %896 = vmatpush.bf16.xpose.msra.mxu0 0
      %897 = vmatpush.bf16.xpose.msra.mxu0 0
      %898 = vmatpush.bf16.xpose.msra.mxu0 0
      %899 = vmatpush.bf16.xpose.msra.mxu0 0
      %900 = vmatpush.bf16.xpose.msra.mxu0 0
      %901 = vmatpush.bf16.xpose.msra.mxu0 0
      %902 = vmatpush.bf16.xpose.msra.mxu0 0
      %903 = vmatpush.bf16.xpose.msra.mxu0 %v894
      %904 = vmatmul.bf16.gmra.mxu0 %v891
      %v905 = vpop.f32.mrf.mxu0
      %v906 = vadd.f32 %v753, %v905
      %v907 = vpop.f32.mrf.mxu0
      %v908 = vadd.f32 %v754, %v907
      %909 = vdwg.mxu0
      %v910 = vsel %vm490, %v810, -inf
      %911 = vmax.xlane.f32.xlu0 %v910
      %v912 = vpop.xlane.xlu0 %911
      %v913 = vsel %vm490, %v812, -inf
      %914 = vmax.xlane.f32.xlu0 %v913
      %v915 = vpop.xlane.xlu0 %914
      %v916 = vsel %vm490, %v842, -inf
      %917 = vmax.xlane.f32.xlu0 %v916
      %v918 = vpop.xlane.xlu0 %917
      %v919 = vsel %vm490, %v844, -inf
      %920 = vmax.xlane.f32.xlu0 %v919
      %v921 = vpop.xlane.xlu0 %920
      %v922 = vsel %vm490, %v874, -inf
      %923 = vmax.xlane.f32.xlu0 %v922
      %v924 = vpop.xlane.xlu0 %923
      %v925 = vsel %vm490, %v876, -inf
      %926 = vmax.xlane.f32.xlu0 %v925
      %v927 = vpop.xlane.xlu0 %926
      %v928 = vsel %vm490, %v906, -inf
      %929 = vmax.xlane.f32.xlu0 %v928
      %v930 = vpop.xlane.xlu0 %929
      %v931 = vsel %vm490, %v908, -inf
      %932 = vmax.xlane.f32.xlu0 %v931
      %v933 = vpop.xlane.xlu0 %932
      %v934 = vsub.f32 %v810, %v912
      %v935 = vsub.f32 %v812, %v915
      %v936 = vsub.f32 %v842, %v918
      %v937 = vsub.f32 %v844, %v921
      %v938 = vsub.f32 %v874, %v924
      %v939 = vsub.f32 %v876, %v927
      %v940 = vsub.f32 %v906, %v930
      %v941 = vsub.f32 %v908, %v933
      %v942 = vmul.f32 %v934, 1.442695
      %v943 = vpow.pop %v942
      %v944 = vmul.f32 %v935, 1.442695
      %v945 = vpow.pop %v944
      %v946 = vmul.f32 %v936, 1.442695
      %v947 = vpow.pop %v946
      %v948 = vmul.f32 %v937, 1.442695
      %v949 = vpow.pop %v948
      %v950 = vmul.f32 %v938, 1.442695
      %v951 = vpow.pop %v950
      %v952 = vmul.f32 %v939, 1.442695
      %v953 = vpow.pop %v952
      %v954 = vmul.f32 %v940, 1.442695
      %v955 = vpow.pop %v954
      %v956 = vmul.f32 %v941, 1.442695
      %v957 = vpow.pop %v956
      %v958 = vsel %vm490, %v943, 0.0
      %959 = vadd.xlane.f32.xlu0 %v958
      %v960 = vpop.xlane.xlu0 %959
      %v961 = vsel %vm490, %v945, 0.0
      %962 = vadd.xlane.f32.xlu0 %v961
      %v963 = vpop.xlane.xlu0 %962
      %v964 = vsel %vm490, %v947, 0.0
      %965 = vadd.xlane.f32.xlu0 %v964
      %v966 = vpop.xlane.xlu0 %965
      %v967 = vsel %vm490, %v949, 0.0
      %968 = vadd.xlane.f32.xlu0 %v967
      %v969 = vpop.xlane.xlu0 %968
      %v970 = vsel %vm490, %v951, 0.0
      %971 = vadd.xlane.f32.xlu0 %v970
      %v972 = vpop.xlane.xlu0 %971
      %v973 = vsel %vm490, %v953, 0.0
      %974 = vadd.xlane.f32.xlu0 %v973
      %v975 = vpop.xlane.xlu0 %974
      %v976 = vsel %vm490, %v955, 0.0
      %977 = vadd.xlane.f32.xlu0 %v976
      %v978 = vpop.xlane.xlu0 %977
      %v979 = vsel %vm490, %v957, 0.0
      %980 = vadd.xlane.f32.xlu0 %v979
      %v981 = vpop.xlane.xlu0 %980
      %v982 = vrcp.pop %v960
      %v983 = vrcp.pop %v963
      %v984 = vrcp.pop %v966
      %v985 = vrcp.pop %v969
      %v986 = vrcp.pop %v972
      %v987 = vrcp.pop %v975
      %v988 = vrcp.pop %v978
      %v989 = vrcp.pop %v981
      %v990 = vmul.f32 %v943, %v982
      %v991 = vmul.f32 %v945, %v983
      %v992 = vmul.f32 %v947, %v984
      %v993 = vmul.f32 %v949, %v985
      %v994 = vmul.f32 %v951, %v986
      %v995 = vmul.f32 %v953, %v987
      %v996 = vmul.f32 %v955, %v988
      %v997 = vmul.f32 %v957, %v989
      %v998 = vpack.c.bf16 %v990, %v990
      %v999 = vpack.c.bf16 %v991, %v991
      %v1000 = vpack.c.bf16 %v992, %v992
      %v1001 = vpack.c.bf16 %v993, %v993
      %v1002 = vpack.c.bf16 %v994, %v994
      %v1003 = vpack.c.bf16 %v995, %v995
      %v1004 = vpack.c.bf16 %v996, %v996
      %v1005 = vpack.c.bf16 %v997, %v997
      %v1008 = vunpack.c.l.b16 %v998
      %v1009 = vunpack.c.l.b16 %v999
      %v1010 = vpack.c.b16 %v1009, %v1008
      %1011 = vrot.lane.b32.xlu0 %v790, 96
      %v1012 = vpop.permute.xlu0 %1011
      %v1015 = vsel %vm490, %v1010, 0
      %1017 = vmatpush.bf16.msra.mxu0 0
      %1018 = vmatpush.bf16.msra.mxu0 0
      %1019 = vmatpush.bf16.msra.mxu0 0
      %1020 = vmatpush.bf16.msra.mxu0 0
      %1021 = vmatpush.bf16.msra.mxu0 0
      %1022 = vmatpush.bf16.msra.mxu0 0
      %1023 = vmatpush.bf16.msra.mxu0 0
      %1024 = vmatpush.bf16.msra.mxu0 %v1012
      %1025 = vmatmul.bf16.gmra.mxu0 %v1015
      %v1026 = vpop.f32.mrf.mxu0
      %v1027 = vadd.f32 0.0, %v1026
      %v1028 = vpop.f32.mrf.mxu0
      %v1029 = vadd.f32 0.0, %v1028
      %1030 = vdwg.mxu0
      %v1033 = vunpack.c.l.b16 %v1000
      %v1034 = vunpack.c.l.b16 %v1001
      %v1035 = vpack.c.b16 %v1034, %v1033
      %1036 = vrot.lane.b32.xlu0 %v823, 96
      %v1037 = vpop.permute.xlu0 %1036
      %v1040 = vsel %vm490, %v1035, 0
      %1042 = vmatpush.bf16.msra.mxu0 0
      %1043 = vmatpush.bf16.msra.mxu0 0
      %1044 = vmatpush.bf16.msra.mxu0 0
      %1045 = vmatpush.bf16.msra.mxu0 0
      %1046 = vmatpush.bf16.msra.mxu0 0
      %1047 = vmatpush.bf16.msra.mxu0 0
      %1048 = vmatpush.bf16.msra.mxu0 0
      %1049 = vmatpush.bf16.msra.mxu0 %v1037
      %1050 = vmatmul.bf16.gmra.mxu0 %v1040
      %v1051 = vpop.f32.mrf.mxu0
      %v1052 = vadd.f32 0.0, %v1051
      %v1053 = vpop.f32.mrf.mxu0
      %v1054 = vadd.f32 0.0, %v1053
      %1055 = vdwg.mxu0
      %v1058 = vunpack.c.l.b16 %v1002
      %v1059 = vunpack.c.l.b16 %v1003
      %v1060 = vpack.c.b16 %v1059, %v1058
      %1061 = vrot.lane.b32.xlu0 %v855, 96
      %v1062 = vpop.permute.xlu0 %1061
      %v1065 = vsel %vm490, %v1060, 0
      %1067 = vmatpush.bf16.msra.mxu0 0
      %1068 = vmatpush.bf16.msra.mxu0 0
      %1069 = vmatpush.bf16.msra.mxu0 0
      %1070 = vmatpush.bf16.msra.mxu0 0
      %1071 = vmatpush.bf16.msra.mxu0 0
      %1072 = vmatpush.bf16.msra.mxu0 0
      %1073 = vmatpush.bf16.msra.mxu0 0
      %1074 = vmatpush.bf16.msra.mxu0 %v1062
      %1075 = vmatmul.bf16.gmra.mxu0 %v1065
      %v1076 = vpop.f32.mrf.mxu0
      %v1077 = vadd.f32 0.0, %v1076
      %v1078 = vpop.f32.mrf.mxu0
      %v1079 = vadd.f32 0.0, %v1078
      %1080 = vdwg.mxu0
      %v1083 = vunpack.c.l.b16 %v1004
      %v1084 = vunpack.c.l.b16 %v1005
      %v1085 = vpack.c.b16 %v1084, %v1083
      %1086 = vrot.lane.b32.xlu0 %v887, 96
      %v1087 = vpop.permute.xlu0 %1086
      %v1090 = vsel %vm490, %v1085, 0
      %1092 = vmatpush.bf16.msra.mxu0 0
      %1093 = vmatpush.bf16.msra.mxu0 0
      %1094 = vmatpush.bf16.msra.mxu0 0
      %1095 = vmatpush.bf16.msra.mxu0 0
      %1096 = vmatpush.bf16.msra.mxu0 0
      %1097 = vmatpush.bf16.msra.mxu0 0
      %1098 = vmatpush.bf16.msra.mxu0 0
      %1099 = vmatpush.bf16.msra.mxu0 %v1087
      %1100 = vmatmul.bf16.gmra.mxu0 %v1090
      %v1101 = vpop.f32.mrf.mxu0
      %v1102 = vadd.f32 0.0, %v1101
      %v1103 = vpop.f32.mrf.mxu0
      %v1104 = vadd.f32 0.0, %v1103
      %1105 = vdwg.mxu0
      %1106 = vrot.lane.b32.xlu0 %v785, 120
      %v1107 = vpop.permute.xlu0 %1106
      %1108 = vrot.lane.b32.xlu0 %v790, 104
      %v1109 = vpop.permute.xlu0 %1108
      %v1111 = vsel %vm793, %v1107, 0
      %v1114 = vsel %vm793, %v1109, 0
      %1116 = vmatpush.bf16.xpose.msra.mxu0 0
      %1117 = vmatpush.bf16.xpose.msra.mxu0 0
      %1118 = vmatpush.bf16.xpose.msra.mxu0 0
      %1119 = vmatpush.bf16.xpose.msra.mxu0 0
      %1120 = vmatpush.bf16.xpose.msra.mxu0 0
      %1121 = vmatpush.bf16.xpose.msra.mxu0 0
      %1122 = vmatpush.bf16.xpose.msra.mxu0 0
      %1123 = vmatpush.bf16.xpose.msra.mxu0 %v1114
      %1124 = vmatmul.bf16.gmra.mxu0 %v1111
      %v1125 = vpop.f32.mrf.mxu0
      %v1126 = vadd.f32 %v755, %v1125
      %v1127 = vpop.f32.mrf.mxu0
      %v1128 = vadd.f32 %v756, %v1127
      %1129 = vdwg.mxu0
      %1130 = vrot.lane.b32.xlu0 %v818, 120
      %v1131 = vpop.permute.xlu0 %1130
      %1132 = vrot.lane.b32.xlu0 %v823, 104
      %v1133 = vpop.permute.xlu0 %1132
      %v1135 = vsel %vm793, %v1131, 0
      %v1138 = vsel %vm793, %v1133, 0
      %1140 = vmatpush.bf16.xpose.msra.mxu0 0
      %1141 = vmatpush.bf16.xpose.msra.mxu0 0
      %1142 = vmatpush.bf16.xpose.msra.mxu0 0
      %1143 = vmatpush.bf16.xpose.msra.mxu0 0
      %1144 = vmatpush.bf16.xpose.msra.mxu0 0
      %1145 = vmatpush.bf16.xpose.msra.mxu0 0
      %1146 = vmatpush.bf16.xpose.msra.mxu0 0
      %1147 = vmatpush.bf16.xpose.msra.mxu0 %v1138
      %1148 = vmatmul.bf16.gmra.mxu0 %v1135
      %v1149 = vpop.f32.mrf.mxu0
      %v1150 = vadd.f32 %v755, %v1149
      %v1151 = vpop.f32.mrf.mxu0
      %v1152 = vadd.f32 %v756, %v1151
      %1153 = vdwg.mxu0
      %1154 = vrot.lane.b32.xlu0 %v850, 120
      %v1155 = vpop.permute.xlu0 %1154
      %1156 = vrot.lane.b32.xlu0 %v855, 104
      %v1157 = vpop.permute.xlu0 %1156
      %v1159 = vsel %vm793, %v1155, 0
      %v1162 = vsel %vm793, %v1157, 0
      %1164 = vmatpush.bf16.xpose.msra.mxu0 0
      %1165 = vmatpush.bf16.xpose.msra.mxu0 0
      %1166 = vmatpush.bf16.xpose.msra.mxu0 0
      %1167 = vmatpush.bf16.xpose.msra.mxu0 0
      %1168 = vmatpush.bf16.xpose.msra.mxu0 0
      %1169 = vmatpush.bf16.xpose.msra.mxu0 0
      %1170 = vmatpush.bf16.xpose.msra.mxu0 0
      %1171 = vmatpush.bf16.xpose.msra.mxu0 %v1162
      %1172 = vmatmul.bf16.gmra.mxu0 %v1159
      %v1173 = vpop.f32.mrf.mxu0
      %v1174 = vadd.f32 %v755, %v1173
      %v1175 = vpop.f32.mrf.mxu0
      %v1176 = vadd.f32 %v756, %v1175
      %1177 = vdwg.mxu0
      %1178 = vrot.lane.b32.xlu0 %v882, 120
      %v1179 = vpop.permute.xlu0 %1178
      %1180 = vrot.lane.b32.xlu0 %v887, 104
      %v1181 = vpop.permute.xlu0 %1180
      %v1183 = vsel %vm793, %v1179, 0
      %v1186 = vsel %vm793, %v1181, 0
      %1188 = vmatpush.bf16.xpose.msra.mxu0 0
      %1189 = vmatpush.bf16.xpose.msra.mxu0 0
      %1190 = vmatpush.bf16.xpose.msra.mxu0 0
      %1191 = vmatpush.bf16.xpose.msra.mxu0 0
      %1192 = vmatpush.bf16.xpose.msra.mxu0 0
      %1193 = vmatpush.bf16.xpose.msra.mxu0 0
      %1194 = vmatpush.bf16.xpose.msra.mxu0 0
      %1195 = vmatpush.bf16.xpose.msra.mxu0 %v1186
      %1196 = vmatmul.bf16.gmra.mxu0 %v1183
      %v1197 = vpop.f32.mrf.mxu0
      %v1198 = vadd.f32 %v755, %v1197
      %v1199 = vpop.f32.mrf.mxu0
      %v1200 = vadd.f32 %v756, %v1199
      %1201 = vdwg.mxu0
      %v1202 = vsel %vm490, %v1126, -inf
      %1203 = vmax.xlane.f32.xlu0 %v1202
      %v1204 = vpop.xlane.xlu0 %1203
      %v1205 = vsel %vm490, %v1128, -inf
      %1206 = vmax.xlane.f32.xlu0 %v1205
      %v1207 = vpop.xlane.xlu0 %1206
      %v1208 = vsel %vm490, %v1150, -inf
      %1209 = vmax.xlane.f32.xlu0 %v1208
      %v1210 = vpop.xlane.xlu0 %1209
      %v1211 = vsel %vm490, %v1152, -inf
      %1212 = vmax.xlane.f32.xlu0 %v1211
      %v1213 = vpop.xlane.xlu0 %1212
      %v1214 = vsel %vm490, %v1174, -inf
      %1215 = vmax.xlane.f32.xlu0 %v1214
      %v1216 = vpop.xlane.xlu0 %1215
      %v1217 = vsel %vm490, %v1176, -inf
      %1218 = vmax.xlane.f32.xlu0 %v1217
      %v1219 = vpop.xlane.xlu0 %1218
      %v1220 = vsel %vm490, %v1198, -inf
      %1221 = vmax.xlane.f32.xlu0 %v1220
      %v1222 = vpop.xlane.xlu0 %1221
      %v1223 = vsel %vm490, %v1200, -inf
      %1224 = vmax.xlane.f32.xlu0 %v1223
      %v1225 = vpop.xlane.xlu0 %1224
      %v1226 = vsub.f32 %v1126, %v1204
      %v1227 = vsub.f32 %v1128, %v1207
      %v1228 = vsub.f32 %v1150, %v1210
      %v1229 = vsub.f32 %v1152, %v1213
      %v1230 = vsub.f32 %v1174, %v1216
      %v1231 = vsub.f32 %v1176, %v1219
      %v1232 = vsub.f32 %v1198, %v1222
      %v1233 = vsub.f32 %v1200, %v1225
      %v1234 = vmul.f32 %v1226, 1.442695
      %v1235 = vpow.pop %v1234
      %v1236 = vmul.f32 %v1227, 1.442695
      %v1237 = vpow.pop %v1236
      %v1238 = vmul.f32 %v1228, 1.442695
      %v1239 = vpow.pop %v1238
      %v1240 = vmul.f32 %v1229, 1.442695
      %v1241 = vpow.pop %v1240
      %v1242 = vmul.f32 %v1230, 1.442695
      %v1243 = vpow.pop %v1242
      %v1244 = vmul.f32 %v1231, 1.442695
      %v1245 = vpow.pop %v1244
      %v1246 = vmul.f32 %v1232, 1.442695
      %v1247 = vpow.pop %v1246
      %v1248 = vmul.f32 %v1233, 1.442695
      %v1249 = vpow.pop %v1248
      %v1250 = vsel %vm490, %v1235, 0.0
      %1251 = vadd.xlane.f32.xlu0 %v1250
      %v1252 = vpop.xlane.xlu0 %1251
      %v1253 = vsel %vm490, %v1237, 0.0
      %1254 = vadd.xlane.f32.xlu0 %v1253
      %v1255 = vpop.xlane.xlu0 %1254
      %v1256 = vsel %vm490, %v1239, 0.0
      %1257 = vadd.xlane.f32.xlu0 %v1256
      %v1258 = vpop.xlane.xlu0 %1257
      %v1259 = vsel %vm490, %v1241, 0.0
      %1260 = vadd.xlane.f32.xlu0 %v1259
      %v1261 = vpop.xlane.xlu0 %1260
      %v1262 = vsel %vm490, %v1243, 0.0
      %1263 = vadd.xlane.f32.xlu0 %v1262
      %v1264 = vpop.xlane.xlu0 %1263
      %v1265 = vsel %vm490, %v1245, 0.0
      %1266 = vadd.xlane.f32.xlu0 %v1265
      %v1267 = vpop.xlane.xlu0 %1266
      %v1268 = vsel %vm490, %v1247, 0.0
      %1269 = vadd.xlane.f32.xlu0 %v1268
      %v1270 = vpop.xlane.xlu0 %1269
      %v1271 = vsel %vm490, %v1249, 0.0
      %1272 = vadd.xlane.f32.xlu0 %v1271
      %v1273 = vpop.xlane.xlu0 %1272
      %v1274 = vrcp.pop %v1252
      %v1275 = vrcp.pop %v1255
      %v1276 = vrcp.pop %v1258
      %v1277 = vrcp.pop %v1261
      %v1278 = vrcp.pop %v1264
      %v1279 = vrcp.pop %v1267
      %v1280 = vrcp.pop %v1270
      %v1281 = vrcp.pop %v1273
      %v1282 = vmul.f32 %v1235, %v1274
      %v1283 = vmul.f32 %v1237, %v1275
      %v1284 = vmul.f32 %v1239, %v1276
      %v1285 = vmul.f32 %v1241, %v1277
      %v1286 = vmul.f32 %v1243, %v1278
      %v1287 = vmul.f32 %v1245, %v1279
      %v1288 = vmul.f32 %v1247, %v1280
      %v1289 = vmul.f32 %v1249, %v1281
      %v1290 = vpack.c.bf16 %v1282, %v1282
      %v1291 = vpack.c.bf16 %v1283, %v1283
      %v1292 = vpack.c.bf16 %v1284, %v1284
      %v1293 = vpack.c.bf16 %v1285, %v1285
      %v1294 = vpack.c.bf16 %v1286, %v1286
      %v1295 = vpack.c.bf16 %v1287, %v1287
      %v1296 = vpack.c.bf16 %v1288, %v1288
      %v1297 = vpack.c.bf16 %v1289, %v1289
      %v1300 = vunpack.c.l.b16 %v1290
      %v1301 = vunpack.c.l.b16 %v1291
      %v1302 = vpack.c.b16 %v1301, %v1300
      %1303 = vrot.lane.b32.xlu0 %v790, 88
      %v1304 = vpop.permute.xlu0 %1303
      %v1307 = vsel %vm490, %v1302, 0
      %1309 = vmatpush.bf16.msra.mxu0 0
      %1310 = vmatpush.bf16.msra.mxu0 0
      %1311 = vmatpush.bf16.msra.mxu0 0
      %1312 = vmatpush.bf16.msra.mxu0 0
      %1313 = vmatpush.bf16.msra.mxu0 0
      %1314 = vmatpush.bf16.msra.mxu0 0
      %1315 = vmatpush.bf16.msra.mxu0 0
      %1316 = vmatpush.bf16.msra.mxu0 %v1304
      %1317 = vmatmul.bf16.gmra.mxu0 %v1307
      %v1318 = vpop.f32.mrf.mxu0
      %v1319 = vadd.f32 0.0, %v1318
      %v1320 = vpop.f32.mrf.mxu0
      %v1321 = vadd.f32 0.0, %v1320
      %1322 = vdwg.mxu0
      %v1325 = vunpack.c.l.b16 %v1292
      %v1326 = vunpack.c.l.b16 %v1293
      %v1327 = vpack.c.b16 %v1326, %v1325
      %1328 = vrot.lane.b32.xlu0 %v823, 88
      %v1329 = vpop.permute.xlu0 %1328
      %v1332 = vsel %vm490, %v1327, 0
      %1334 = vmatpush.bf16.msra.mxu0 0
      %1335 = vmatpush.bf16.msra.mxu0 0
      %1336 = vmatpush.bf16.msra.mxu0 0
      %1337 = vmatpush.bf16.msra.mxu0 0
      %1338 = vmatpush.bf16.msra.mxu0 0
      %1339 = vmatpush.bf16.msra.mxu0 0
      %1340 = vmatpush.bf16.msra.mxu0 0
      %1341 = vmatpush.bf16.msra.mxu0 %v1329
      %1342 = vmatmul.bf16.gmra.mxu0 %v1332
      %v1343 = vpop.f32.mrf.mxu0
      %v1344 = vadd.f32 0.0, %v1343
      %v1345 = vpop.f32.mrf.mxu0
      %v1346 = vadd.f32 0.0, %v1345
      %1347 = vdwg.mxu0
      %v1350 = vunpack.c.l.b16 %v1294
      %v1351 = vunpack.c.l.b16 %v1295
      %v1352 = vpack.c.b16 %v1351, %v1350
      %1353 = vrot.lane.b32.xlu0 %v855, 88
      %v1354 = vpop.permute.xlu0 %1353
      %v1357 = vsel %vm490, %v1352, 0
      %1359 = vmatpush.bf16.msra.mxu0 0
      %1360 = vmatpush.bf16.msra.mxu0 0
      %1361 = vmatpush.bf16.msra.mxu0 0
      %1362 = vmatpush.bf16.msra.mxu0 0
      %1363 = vmatpush.bf16.msra.mxu0 0
      %1364 = vmatpush.bf16.msra.mxu0 0
      %1365 = vmatpush.bf16.msra.mxu0 0
      %1366 = vmatpush.bf16.msra.mxu0 %v1354
      %1367 = vmatmul.bf16.gmra.mxu0 %v1357
      %v1368 = vpop.f32.mrf.mxu0
      %v1369 = vadd.f32 0.0, %v1368
      %v1370 = vpop.f32.mrf.mxu0
      %v1371 = vadd.f32 0.0, %v1370
      %1372 = vdwg.mxu0
      %v1375 = vunpack.c.l.b16 %v1296
      %v1376 = vunpack.c.l.b16 %v1297
      %v1377 = vpack.c.b16 %v1376, %v1375
      %1378 = vrot.lane.b32.xlu0 %v887, 88
      %v1379 = vpop.permute.xlu0 %1378
      %v1382 = vsel %vm490, %v1377, 0
      %1384 = vmatpush.bf16.msra.mxu0 0
      %1385 = vmatpush.bf16.msra.mxu0 0
      %1386 = vmatpush.bf16.msra.mxu0 0
      %1387 = vmatpush.bf16.msra.mxu0 0
      %1388 = vmatpush.bf16.msra.mxu0 0
      %1389 = vmatpush.bf16.msra.mxu0 0
      %1390 = vmatpush.bf16.msra.mxu0 0
      %1391 = vmatpush.bf16.msra.mxu0 %v1379
      %1392 = vmatmul.bf16.gmra.mxu0 %v1382
      %v1393 = vpop.f32.mrf.mxu0
      %v1394 = vadd.f32 0.0, %v1393
      %v1395 = vpop.f32.mrf.mxu0
      %v1396 = vadd.f32 0.0, %v1395
      %1397 = vdwg.mxu0
      %1406 = vrot.lane.b32.xlu0 %v1319, 8
      %v1407 = vpop.permute.xlu0 %1406
      %1408 = vrot.lane.b32.xlu0 %v1321, 8
      %v1409 = vpop.permute.xlu0 %1408
      %1410 = vrot.lane.b32.xlu0 %v1344, 8
      %v1411 = vpop.permute.xlu0 %1410
      %1412 = vrot.lane.b32.xlu0 %v1346, 8
      %v1413 = vpop.permute.xlu0 %1412
      %1414 = vrot.lane.b32.xlu0 %v1369, 8
      %v1415 = vpop.permute.xlu0 %1414
      %1416 = vrot.lane.b32.xlu0 %v1371, 8
      %v1417 = vpop.permute.xlu0 %1416
      %1418 = vrot.lane.b32.xlu0 %v1394, 8
      %v1419 = vpop.permute.xlu0 %1418
      %1420 = vrot.lane.b32.xlu0 %v1396, 8
      %v1421 = vpop.permute.xlu0 %1420
      %v1430 = vsel %vm793, %v1027, %v1407
      %v1431 = vsel %vm793, %v1029, %v1409
      %v1432 = vsel %vm793, %v1052, %v1411
      %v1433 = vsel %vm793, %v1054, %v1413
      %v1434 = vsel %vm793, %v1077, %v1415
      %v1435 = vsel %vm793, %v1079, %v1417
      %v1436 = vsel %vm793, %v1102, %v1419
      %v1437 = vsel %vm793, %v1104, %v1421
      %v1438 = vpack.c.bf16 %v1431, %v1430
      %v1439 = vpack.c.bf16 %v1433, %v1432
      %v1440 = vpack.c.bf16 %v1435, %v1434
      %v1441 = vpack.c.bf16 %v1437, %v1436
      %v1442 = vld [vmem:[%s6] sm:$0xf]
      %v1443 = vld [vmem:[%s6 + $0x4] sm:$0xf]
      %v1444 = vld [vmem:[%s7] sm:$0x1]
      %v1446 = vperm.slane %v1444, 0
      %v1450 = vunpack.c.l.b16 %v1442
      %v1451 = vunpack.c.l.b16 %v1443
      %v1452 = vpack.c.b16 %v1451, %v1450
      %v1455 = vsel %vm490, %v1438, 0
      %v1458 = vsel %vm490, %v1439, 0
      %v1461 = vsel %vm490, %v1440, 0
      %v1464 = vsel %vm490, %v1441, 0
      %1466 = vmatpush.bf16.msra.mxu0 0
      %1467 = vmatpush.bf16.msra.mxu0 0
      %1468 = vmatpush.bf16.msra.mxu0 0
      %1469 = vmatpush.bf16.msra.mxu0 0
      %1470 = vmatpush.bf16.msra.mxu0 0
      %1471 = vmatpush.bf16.msra.mxu0 0
      %1472 = vmatpush.bf16.msra.mxu0 0
      %1473 = vmatpush.bf16.msra.mxu0 %v1452
      %1474 = vmatmul.bf16.gmra.mxu0 %v1455
      %v1475 = vpop.f32.mrf.mxu0
      %v1476 = vadd.f32 %v1446, %v1475
      %v1477 = vpop.f32.mrf.mxu0
      %v1478 = vadd.f32 %v1446, %v1477
      %1479 = vmatmul.bf16.gmra.mxu0 %v1458
      %v1480 = vpop.f32.mrf.mxu0
      %v1481 = vadd.f32 %v1446, %v1480
      %v1482 = vpop.f32.mrf.mxu0
      %v1483 = vadd.f32 %v1446, %v1482
      %1484 = vmatmul.bf16.gmra.mxu0 %v1461
      %v1485 = vpop.f32.mrf.mxu0
      %v1486 = vadd.f32 %v1446, %v1485
      %v1487 = vpop.f32.mrf.mxu0
      %v1488 = vadd.f32 %v1446, %v1487
      %1489 = vmatmul.bf16.gmra.mxu0 %v1464
      %v1490 = vpop.f32.mrf.mxu0
      %v1491 = vadd.f32 %v1446, %v1490
      %v1492 = vpop.f32.mrf.mxu0
      %v1493 = vadd.f32 %v1446, %v1492
      %1494 = vdwg.mxu0
      %v1495 = vadd.f32 %v480, %v1476
      %v1496 = vadd.f32 %v481, %v1478
      %v1497 = vadd.f32 %v482, %v1481
      %v1498 = vadd.f32 %v483, %v1483
      %v1499 = vadd.f32 %v484, %v1486
      %v1500 = vadd.f32 %v485, %v1488
      %v1501 = vadd.f32 %v486, %v1491
      %v1502 = vadd.f32 %v487, %v1493
      %v1503 = vld [vmem:[%s8] sm:$0x1]
      %v1504 = vld [vmem:[%s9] sm:$0x1]
      %v1505 = vsel %vm490, %v1495, 0.0
      %1506 = vadd.xlane.f32.xlu0 %v1505
      %v1507 = vpop.xlane.xlu0 %1506
      %v1508 = vsel %vm490, %v1496, 0.0
      %1509 = vadd.xlane.f32.xlu0 %v1508
      %v1510 = vpop.xlane.xlu0 %1509
      %v1511 = vsel %vm490, %v1497, 0.0
      %1512 = vadd.xlane.f32.xlu0 %v1511
      %v1513 = vpop.xlane.xlu0 %1512
      %v1514 = vsel %vm490, %v1498, 0.0
      %1515 = vadd.xlane.f32.xlu0 %v1514
      %v1516 = vpop.xlane.xlu0 %1515
      %v1517 = vsel %vm490, %v1499, 0.0
      %1518 = vadd.xlane.f32.xlu0 %v1517
      %v1519 = vpop.xlane.xlu0 %1518
      %v1520 = vsel %vm490, %v1500, 0.0
      %1521 = vadd.xlane.f32.xlu0 %v1520
      %v1522 = vpop.xlane.xlu0 %1521
      %v1523 = vsel %vm490, %v1501, 0.0
      %1524 = vadd.xlane.f32.xlu0 %v1523
      %v1525 = vpop.xlane.xlu0 %1524
      %v1526 = vsel %vm490, %v1502, 0.0
      %1527 = vadd.xlane.f32.xlu0 %v1526
      %v1528 = vpop.xlane.xlu0 %1527
      %v1529 = vmul.f32 %v1507, %v521
      %v1530 = vmul.f32 %v1510, %v521
      %v1531 = vmul.f32 %v1513, %v521
      %v1532 = vmul.f32 %v1516, %v521
      %v1533 = vmul.f32 %v1519, %v521
      %v1534 = vmul.f32 %v1522, %v521
      %v1535 = vmul.f32 %v1525, %v521
      %v1536 = vmul.f32 %v1528, %v521
      %v1537 = vsub.f32 %v1495, %v1529
      %v1538 = vsub.f32 %v1496, %v1530
      %v1539 = vsub.f32 %v1497, %v1531
      %v1540 = vsub.f32 %v1498, %v1532
      %v1541 = vsub.f32 %v1499, %v1533
      %v1542 = vsub.f32 %v1500, %v1534
      %v1543 = vsub.f32 %v1501, %v1535
      %v1544 = vsub.f32 %v1502, %v1536
      %v1545 = vmul.f32 %v1537, %v1537
      %v1546 = vmul.f32 %v1538, %v1538
      %v1547 = vmul.f32 %v1539, %v1539
      %v1548 = vmul.f32 %v1540, %v1540
      %v1549 = vmul.f32 %v1541, %v1541
      %v1550 = vmul.f32 %v1542, %v1542
      %v1551 = vmul.f32 %v1543, %v1543
      %v1552 = vmul.f32 %v1544, %v1544
      %v1553 = vsel %vm490, %v1545, 0.0
      %1554 = vadd.xlane.f32.xlu0 %v1553
      %v1555 = vpop.xlane.xlu0 %1554
      %v1556 = vsel %vm490, %v1546, 0.0
      %1557 = vadd.xlane.f32.xlu0 %v1556
      %v1558 = vpop.xlane.xlu0 %1557
      %v1559 = vsel %vm490, %v1547, 0.0
      %1560 = vadd.xlane.f32.xlu0 %v1559
      %v1561 = vpop.xlane.xlu0 %1560
      %v1562 = vsel %vm490, %v1548, 0.0
      %1563 = vadd.xlane.f32.xlu0 %v1562
      %v1564 = vpop.xlane.xlu0 %1563
      %v1565 = vsel %vm490, %v1549, 0.0
      %1566 = vadd.xlane.f32.xlu0 %v1565
      %v1567 = vpop.xlane.xlu0 %1566
      %v1568 = vsel %vm490, %v1550, 0.0
      %1569 = vadd.xlane.f32.xlu0 %v1568
      %v1570 = vpop.xlane.xlu0 %1569
      %v1571 = vsel %vm490, %v1551, 0.0
      %1572 = vadd.xlane.f32.xlu0 %v1571
      %v1573 = vpop.xlane.xlu0 %1572
      %v1574 = vsel %vm490, %v1552, 0.0
      %1575 = vadd.xlane.f32.xlu0 %v1574
      %v1576 = vpop.xlane.xlu0 %1575
      %v1577 = vmul.f32 %v1555, %v521
      %v1578 = vmul.f32 %v1558, %v521
      %v1579 = vmul.f32 %v1561, %v521
      %v1580 = vmul.f32 %v1564, %v521
      %v1581 = vmul.f32 %v1567, %v521
      %v1582 = vmul.f32 %v1570, %v521
      %v1583 = vmul.f32 %v1573, %v521
      %v1584 = vmul.f32 %v1576, %v521
      %v1585 = vadd.f32 %v1577, 1e-05
      %v1586 = vadd.f32 %v1578, 1e-05
      %v1587 = vadd.f32 %v1579, 1e-05
      %v1588 = vadd.f32 %v1580, 1e-05
      %v1589 = vadd.f32 %v1581, 1e-05
      %v1590 = vadd.f32 %v1582, 1e-05
      %v1591 = vadd.f32 %v1583, 1e-05
      %v1592 = vadd.f32 %v1584, 1e-05
      %v1593 = vrsqrt.pop %v1585
      %v1594 = vmul.f32 %v1593, %v1585
      %v1595 = vmul.f32 %v1594, %v1593
      %v1596 = vmul.f32 0.5, %v1595
      %v1597 = vsub.f32 1.5, %v1596
      %v1598 = vmul.f32 %v1593, %v1597
      %vm1599 = vweird.f32 %v1585
      %vm1600 = vweird.f32 %v1593
      %vm1601 = vmor %vm1599, %vm1600
      %v1602 = vsel %vm1601, %v1593, %v1598
      %v1603 = vrsqrt.pop %v1586
      %v1604 = vmul.f32 %v1603, %v1586
      %v1605 = vmul.f32 %v1604, %v1603
      %v1606 = vmul.f32 0.5, %v1605
      %v1607 = vsub.f32 1.5, %v1606
      %v1608 = vmul.f32 %v1603, %v1607
      %vm1609 = vweird.f32 %v1586
      %vm1610 = vweird.f32 %v1603
      %vm1611 = vmor %vm1609, %vm1610
      %v1612 = vsel %vm1611, %v1603, %v1608
      %v1613 = vrsqrt.pop %v1587
      %v1614 = vmul.f32 %v1613, %v1587
      %v1615 = vmul.f32 %v1614, %v1613
      %v1616 = vmul.f32 0.5, %v1615
      %v1617 = vsub.f32 1.5, %v1616
      %v1618 = vmul.f32 %v1613, %v1617
      %vm1619 = vweird.f32 %v1587
      %vm1620 = vweird.f32 %v1613
      %vm1621 = vmor %vm1619, %vm1620
      %v1622 = vsel %vm1621, %v1613, %v1618
      %v1623 = vrsqrt.pop %v1588
      %v1624 = vmul.f32 %v1623, %v1588
      %v1625 = vmul.f32 %v1624, %v1623
      %v1626 = vmul.f32 0.5, %v1625
      %v1627 = vsub.f32 1.5, %v1626
      %v1628 = vmul.f32 %v1623, %v1627
      %vm1629 = vweird.f32 %v1588
      %vm1630 = vweird.f32 %v1623
      %vm1631 = vmor %vm1629, %vm1630
      %v1632 = vsel %vm1631, %v1623, %v1628
      %v1633 = vrsqrt.pop %v1589
      %v1634 = vmul.f32 %v1633, %v1589
      %v1635 = vmul.f32 %v1634, %v1633
      %v1636 = vmul.f32 0.5, %v1635
      %v1637 = vsub.f32 1.5, %v1636
      %v1638 = vmul.f32 %v1633, %v1637
      %vm1639 = vweird.f32 %v1589
      %vm1640 = vweird.f32 %v1633
      %vm1641 = vmor %vm1639, %vm1640
      %v1642 = vsel %vm1641, %v1633, %v1638
      %v1643 = vrsqrt.pop %v1590
      %v1644 = vmul.f32 %v1643, %v1590
      %v1645 = vmul.f32 %v1644, %v1643
      %v1646 = vmul.f32 0.5, %v1645
      %v1647 = vsub.f32 1.5, %v1646
      %v1648 = vmul.f32 %v1643, %v1647
      %vm1649 = vweird.f32 %v1590
      %vm1650 = vweird.f32 %v1643
      %vm1651 = vmor %vm1649, %vm1650
      %v1652 = vsel %vm1651, %v1643, %v1648
      %v1653 = vrsqrt.pop %v1591
      %v1654 = vmul.f32 %v1653, %v1591
      %v1655 = vmul.f32 %v1654, %v1653
      %v1656 = vmul.f32 0.5, %v1655
      %v1657 = vsub.f32 1.5, %v1656
      %v1658 = vmul.f32 %v1653, %v1657
      %vm1659 = vweird.f32 %v1591
      %vm1660 = vweird.f32 %v1653
      %vm1661 = vmor %vm1659, %vm1660
      %v1662 = vsel %vm1661, %v1653, %v1658
      %v1663 = vrsqrt.pop %v1592
      %v1664 = vmul.f32 %v1663, %v1592
      %v1665 = vmul.f32 %v1664, %v1663
      %v1666 = vmul.f32 0.5, %v1665
      %v1667 = vsub.f32 1.5, %v1666
      %v1668 = vmul.f32 %v1663, %v1667
      %vm1669 = vweird.f32 %v1592
      %vm1670 = vweird.f32 %v1663
      %vm1671 = vmor %vm1669, %vm1670
      %v1672 = vsel %vm1671, %v1663, %v1668
      %v1673 = vmul.f32 %v1537, %v1602
      %v1674 = vmul.f32 %v1538, %v1612
      %v1675 = vmul.f32 %v1539, %v1622
      %v1676 = vmul.f32 %v1540, %v1632
      %v1677 = vmul.f32 %v1541, %v1642
      %v1678 = vmul.f32 %v1542, %v1652
      %v1679 = vmul.f32 %v1543, %v1662
      %v1680 = vmul.f32 %v1544, %v1672
      %v1682 = vperm.slane %v1503, 0
      %v1684 = vmul.f32 %v1673, %v1682
      %v1685 = vmul.f32 %v1674, %v1682
      %v1686 = vmul.f32 %v1675, %v1682
      %v1687 = vmul.f32 %v1676, %v1682
      %v1688 = vmul.f32 %v1677, %v1682
      %v1689 = vmul.f32 %v1678, %v1682
      %v1690 = vmul.f32 %v1679, %v1682
      %v1691 = vmul.f32 %v1680, %v1682
      %v1693 = vperm.slane %v1504, 0
      %v1695 = vadd.f32 %v1684, %v1693
      %v1696 = vadd.f32 %v1685, %v1693
      %v1697 = vadd.f32 %v1686, %v1693
      %v1698 = vadd.f32 %v1687, %v1693
      %v1699 = vadd.f32 %v1688, %v1693
      %v1700 = vadd.f32 %v1689, %v1693
      %v1701 = vadd.f32 %v1690, %v1693
      %v1702 = vadd.f32 %v1691, %v1693
      %v1703 = vpack.c.bf16 %v1696, %v1695
      %v1704 = vpack.c.bf16 %v1698, %v1697
      %v1705 = vpack.c.bf16 %v1700, %v1699
      %v1706 = vpack.c.bf16 %v1702, %v1701
      %v1707 = vld [vmem:[%s10] sm:$0xf]
      %v1708 = vld [vmem:[%s10 + $0x4] sm:$0xf]
      %v1709 = vld [vmem:[%s11] sm:$0x1]
      %v1711 = vperm.slane %v1709, 0
      %v1715 = vunpack.c.l.b16 %v1707
      %v1716 = vunpack.c.l.b16 %v1708
      %v1717 = vpack.c.b16 %v1716, %v1715
      %v1720 = vsel %vm490, %v1703, 0
      %v1723 = vsel %vm490, %v1704, 0
      %v1726 = vsel %vm490, %v1705, 0
      %v1729 = vsel %vm490, %v1706, 0
      %1731 = vmatpush.bf16.msra.mxu0 0
      %1732 = vmatpush.bf16.msra.mxu0 0
      %1733 = vmatpush.bf16.msra.mxu0 0
      %1734 = vmatpush.bf16.msra.mxu0 0
      %1735 = vmatpush.bf16.msra.mxu0 0
      %1736 = vmatpush.bf16.msra.mxu0 0
      %1737 = vmatpush.bf16.msra.mxu0 0
      %1738 = vmatpush.bf16.msra.mxu0 %v1717
      %1739 = vmatmul.bf16.gmra.mxu0 %v1720
      %v1740 = vpop.f32.mrf.mxu0
      %v1741 = vadd.f32 %v1711, %v1740
      %v1742 = vpop.f32.mrf.mxu0
      %v1743 = vadd.f32 %v1711, %v1742
      %1744 = vmatmul.bf16.gmra.mxu0 %v1723
      %v1745 = vpop.f32.mrf.mxu0
      %v1746 = vadd.f32 %v1711, %v1745
      %v1747 = vpop.f32.mrf.mxu0
      %v1748 = vadd.f32 %v1711, %v1747
      %1749 = vmatmul.bf16.gmra.mxu0 %v1726
      %v1750 = vpop.f32.mrf.mxu0
      %v1751 = vadd.f32 %v1711, %v1750
      %v1752 = vpop.f32.mrf.mxu0
      %v1753 = vadd.f32 %v1711, %v1752
      %1754 = vmatmul.bf16.gmra.mxu0 %v1729
      %v1755 = vpop.f32.mrf.mxu0
      %v1756 = vadd.f32 %v1711, %v1755
      %v1757 = vpop.f32.mrf.mxu0
      %v1758 = vadd.f32 %v1711, %v1757
      %1759 = vdwg.mxu0
      %v1760 = vmul.f32 %v1741, %v1741
      %v1761 = vmul.f32 %v1743, %v1743
      %v1762 = vmul.f32 %v1746, %v1746
      %v1763 = vmul.f32 %v1748, %v1748
      %v1764 = vmul.f32 %v1751, %v1751
      %v1765 = vmul.f32 %v1753, %v1753
      %v1766 = vmul.f32 %v1756, %v1756
      %v1767 = vmul.f32 %v1758, %v1758
      %v1768 = vmul.f32 %v1741, %v1760
      %v1769 = vmul.f32 %v1743, %v1761
      %v1770 = vmul.f32 %v1746, %v1762
      %v1771 = vmul.f32 %v1748, %v1763
      %v1772 = vmul.f32 %v1751, %v1764
      %v1773 = vmul.f32 %v1753, %v1765
      %v1774 = vmul.f32 %v1756, %v1766
      %v1775 = vmul.f32 %v1758, %v1767
      %v1776 = vmul.f32 %v1768, 0.044715
      %v1777 = vmul.f32 %v1769, 0.044715
      %v1778 = vmul.f32 %v1770, 0.044715
      %v1779 = vmul.f32 %v1771, 0.044715
      %v1780 = vmul.f32 %v1772, 0.044715
      %v1781 = vmul.f32 %v1773, 0.044715
      %v1782 = vmul.f32 %v1774, 0.044715
      %v1783 = vmul.f32 %v1775, 0.044715
      %v1784 = vadd.f32 %v1741, %v1776
      %v1785 = vadd.f32 %v1743, %v1777
      %v1786 = vadd.f32 %v1746, %v1778
      %v1787 = vadd.f32 %v1748, %v1779
      %v1788 = vadd.f32 %v1751, %v1780
      %v1789 = vadd.f32 %v1753, %v1781
      %v1790 = vadd.f32 %v1756, %v1782
      %v1791 = vadd.f32 %v1758, %v1783
      %v1792 = vmul.f32 %v1784, 0.7978846
      %v1793 = vmul.f32 %v1785, 0.7978846
      %v1794 = vmul.f32 %v1786, 0.7978846
      %v1795 = vmul.f32 %v1787, 0.7978846
      %v1796 = vmul.f32 %v1788, 0.7978846
      %v1797 = vmul.f32 %v1789, 0.7978846
      %v1798 = vmul.f32 %v1790, 0.7978846
      %v1799 = vmul.f32 %v1791, 0.7978846
      %v1800 = vtanh.pop %v1792
      %v1801 = vtanh.pop %v1793
      %v1802 = vtanh.pop %v1794
      %v1803 = vtanh.pop %v1795
      %v1804 = vtanh.pop %v1796
      %v1805 = vtanh.pop %v1797
      %v1806 = vtanh.pop %v1798
      %v1807 = vtanh.pop %v1799
      %v1808 = vadd.f32 %v1800, 1.0
      %v1809 = vadd.f32 %v1801, 1.0
      %v1810 = vadd.f32 %v1802, 1.0
      %v1811 = vadd.f32 %v1803, 1.0
      %v1812 = vadd.f32 %v1804, 1.0
      %v1813 = vadd.f32 %v1805, 1.0
      %v1814 = vadd.f32 %v1806, 1.0
      %v1815 = vadd.f32 %v1807, 1.0
      %v1816 = vmul.f32 %v1808, 0.5
      %v1817 = vmul.f32 %v1809, 0.5
      %v1818 = vmul.f32 %v1810, 0.5
      %v1819 = vmul.f32 %v1811, 0.5
      %v1820 = vmul.f32 %v1812, 0.5
      %v1821 = vmul.f32 %v1813, 0.5
      %v1822 = vmul.f32 %v1814, 0.5
      %v1823 = vmul.f32 %v1815, 0.5
      %v1824 = vmul.f32 %v1741, %v1816
      %v1825 = vmul.f32 %v1743, %v1817
      %v1826 = vmul.f32 %v1746, %v1818
      %v1827 = vmul.f32 %v1748, %v1819
      %v1828 = vmul.f32 %v1751, %v1820
      %v1829 = vmul.f32 %v1753, %v1821
      %v1830 = vmul.f32 %v1756, %v1822
      %v1831 = vmul.f32 %v1758, %v1823
      %v1832 = vpack.c.bf16 %v1825, %v1824
      %v1833 = vpack.c.bf16 %v1827, %v1826
      %v1834 = vpack.c.bf16 %v1829, %v1828
      %v1835 = vpack.c.bf16 %v1831, %v1830
      %v1836 = vld [vmem:[%s12] sm:$0xf]
      %v1837 = vld [vmem:[%s12 + $0x4] sm:$0xf]
      %v1838 = vld [vmem:[%s12 + $0x8] sm:$0xf]
      %v1839 = vld [vmem:[%s12 + $0xc] sm:$0xf]
      %v1840 = vld [vmem:[%s12 + $0x10] sm:$0xf]
      %v1841 = vld [vmem:[%s12 + $0x14] sm:$0xf]
      %v1842 = vld [vmem:[%s12 + $0x18] sm:$0xf]
      %v1843 = vld [vmem:[%s12 + $0x1c] sm:$0xf]
      %v1844 = vld [vmem:[%s13] sm:$0x1]
      %v1846 = vperm.slane %v1844, 0
      %v1856 = vunpack.c.l.b16 %v1836
      %v1857 = vunpack.c.l.b16 %v1837
      %v1858 = vunpack.c.l.b16 %v1838
      %v1859 = vunpack.c.l.b16 %v1839
      %v1860 = vunpack.c.l.b16 %v1840
      %v1861 = vunpack.c.l.b16 %v1841
      %v1862 = vunpack.c.l.b16 %v1842
      %v1863 = vunpack.c.l.b16 %v1843
      %v1864 = vpack.c.b16 %v1857, %v1856
      %v1865 = vpack.c.b16 %v1859, %v1858
      %v1866 = vpack.c.b16 %v1861, %v1860
      %v1867 = vpack.c.b16 %v1863, %v1862
      %vm1872 = vcmask 523264
      %v1874 = vsel %vm1872, %v1832, 0
      %v1877 = vsel %vm1872, %v1833, 0
      %v1880 = vsel %vm1872, %v1834, 0
      %v1883 = vsel %vm1872, %v1835, 0
      %1885 = vmatpush.bf16.msra.mxu0 0
      %1886 = vmatpush.bf16.msra.mxu0 0
      %1887 = vmatpush.bf16.msra.mxu0 0
      %1888 = vmatpush.bf16.msra.mxu0 0
      %1889 = vmatpush.bf16.msra.mxu0 %v1867
      %1890 = vmatpush.bf16.msra.mxu0 %v1866
      %1891 = vmatpush.bf16.msra.mxu0 %v1865
      %1892 = vmatpush.bf16.msra.mxu0 %v1864
      %1893 = vmatmul.bf16.gmra.mxu0 %v1874
      %v1894 = vpop.f32.mrf.mxu0
      %v1895 = vadd.f32 %v1846, %v1894
      %v1896 = vpop.f32.mrf.mxu0
      %v1897 = vadd.f32 %v1846, %v1896
      %1898 = vmatmul.bf16.gmra.mxu0 %v1877
      %v1899 = vpop.f32.mrf.mxu0
      %v1900 = vadd.f32 %v1846, %v1899
      %v1901 = vpop.f32.mrf.mxu0
      %v1902 = vadd.f32 %v1846, %v1901
      %1903 = vmatmul.bf16.gmra.mxu0 %v1880
      %v1904 = vpop.f32.mrf.mxu0
      %v1905 = vadd.f32 %v1846, %v1904
      %v1906 = vpop.f32.mrf.mxu0
      %v1907 = vadd.f32 %v1846, %v1906
      %1908 = vmatmul.bf16.gmra.mxu0 %v1883
      %v1909 = vpop.f32.mrf.mxu0
      %v1910 = vadd.f32 %v1846, %v1909
      %v1911 = vpop.f32.mrf.mxu0
      %v1912 = vadd.f32 %v1846, %v1911
      %1913 = vdwg.mxu0
      %v1914 = vadd.f32 %v1495, %v1895
      %v1915 = vadd.f32 %v1496, %v1897
      %v1916 = vadd.f32 %v1497, %v1900
      %v1917 = vadd.f32 %v1498, %v1902
      %v1918 = vadd.f32 %v1499, %v1905
      %v1919 = vadd.f32 %v1500, %v1907
      %v1920 = vadd.f32 %v1501, %v1910
      %v1921 = vadd.f32 %v1502, %v1912
      %v1922 = vpack.c.bf16 %v1914, %v1914
      %v1923 = vpack.c.bf16 %v1915, %v1915
      %v1924 = vpack.c.bf16 %v1916, %v1916
      %v1925 = vpack.c.bf16 %v1917, %v1917
      %v1926 = vpack.c.bf16 %v1918, %v1918
      %v1927 = vpack.c.bf16 %v1919, %v1919
      %v1928 = vpack.c.bf16 %v1920, %v1920
      %v1929 = vpack.c.bf16 %v1921, %v1921
      %vm1930 = vcmask 125952
      %1931 = vst.msk [vmem:[%s469] sm:$0xf] %vm1930, %v1922
      %1932 = vst.msk [vmem:[%s469 + $0x4] sm:$0xf] %vm1930, %v1923
      %1933 = vst.msk [vmem:[%s469 + $0x8] sm:$0xf] %vm1930, %v1924
      %1934 = vst.msk [vmem:[%s469 + $0xc] sm:$0xf] %vm1930, %v1925
      %1935 = vst.msk [vmem:[%s469 + $0x10] sm:$0xf] %vm1930, %v1926
      %1936 = vst.msk [vmem:[%s469 + $0x14] sm:$0xf] %vm1930, %v1927
      %1937 = vst.msk [vmem:[%s469 + $0x18] sm:$0xf] %vm1930, %v1928
      %1938 = vst.msk [vmem:[%s469 + $0x1c] sm:$0xf] %vm1930, %v1929
      %s1939 = smul.u32 8, %s25
      %p1940 = scmp.lt.s32.totalorder %s1939, 15
      %s1941 = scalar_select %p1940, %s1939, 15
      %s1942 = smul.addr %s1941, 4
      %s1943 = scalar_lea.vmem %s14, %s1942
      // Predicated region
      $region77: #{basic_block_up_forward.3} parent=75 // pred_check
        %p1944 = pneg %p342
      $region78: #{basic_block_up_forward.3} parent=75 // pred_check_branch
        %1946 = sbr.rel (%p1944) target = $region80
      $region79: #{basic_block_up_forward.3} parent=75 // pred_region
        %s1947 = smul.u32 8, %s25
      $region80: #{basic_block_up_forward.3} parent=75 // pred_fallthru
        _
    $region76: #{basic_block_up_forward.3} parent=5 // pred_fallthru
      _
    %p1948 = scmp.le.s32.totalorder 2, %s20
    // Predicated region
    $region81: #{basic_block_up_forward.3} parent=5 // pred_check
      %p1949 = pneg %p1948
    $region82: #{basic_block_up_forward.3} parent=5 // pred_check_branch
      %1951 = sbr.rel (%p1949) target = $region84
    $region83: #{basic_block_up_forward.3} parent=5 // pred_region
      %s1952 = ssub.s32 %s20, 2
      // Predicated region
      $region85: #{basic_block_up_forward.3} parent=83 // pred_check
        %p1953 = pneg %p348
      $region86: #{basic_block_up_forward.3} parent=83 // pred_check_branch
        %1955 = sbr.rel (%p1953) target = $region88
      $region87: #{basic_block_up_forward.3} parent=83 // pred_region
        %s1956 = smul.u32 8, %s26
        %p1957 = scmp.lt.s32.totalorder %s1956, 15
        %s1958 = scalar_select %p1957, %s1956, 15
        %s1959 = smul.addr %s1958, 4
        %s1960 = scalar_lea.vmem %s14, %s1959
      $region88: #{basic_block_up_forward.3} parent=83 // pred_fallthru
        _
    $region84: #{basic_block_up_forward.3} parent=5 // pred_fallthru
      _
  $region6: #{basic_block_up_forward.3} parent=0 // loop_footer
    %s24 = sadd.s32 1, %s20
  $region7: #{basic_block_up_forward.3} parent=0 // loop_footer_branch
    %19 = sbr.rel target = $region3
  $region8: #{basic_block_up_forward.3} parent=0 // loop_exit
    _

// kernel: basic_block_up_forward.4
$region0: #{basic_block_up_forward.4}
  #allocation0 [shape = 'u32[]', space=smem, size = 0x4, offset = 0x4, fixed_abs, tag = 'smem constant byte address 0x4 - core index']
  #allocation1 [shape = 'u32[72,128]{1,0:T(1,128)}', space=vmem, size = 0x9000, scoped, tag = 'internal scratch']
  %s0 = inlined_call_operand.vmem [shape: bf16[128,16], index: 0, kind: input, shape index: {}]
  %s1 = inlined_call_operand.vmem [shape: f32[2,16,16], index: 1, kind: input, shape index: {}]
  %s2 = inlined_call_operand.vmem [shape: f32[1,16], index: 2, kind: input, shape index: {}]
  %s3 = inlined_call_operand.vmem [shape: f32[1,16], index: 3, kind: input, shape index: {}]
  %s4 = inlined_call_operand.vmem [shape: bf16[16,48], index: 4, kind: input, shape index: {}]
  %s5 = inlined_call_operand.vmem [shape: f32[1,48], index: 5, kind: input, shape index: {}]
  %s6 = inlined_call_operand.vmem [shape: bf16[16,16], index: 6, kind: input, shape index: {}]
  %s7 = inlined_call_operand.vmem [shape: f32[1,16], index: 7, kind: input, shape index: {}]
  %s8 = inlined_call_operand.vmem [shape: f32[1,16], index: 8, kind: input, shape index: {}]
  %s9 = inlined_call_operand.vmem [shape: f32[1,16], index: 9, kind: input, shape index: {}]
  %s10 = inlined_call_operand.vmem [shape: bf16[16,64], index: 10, kind: input, shape index: {}]
  %s11 = inlined_call_operand.vmem [shape: f32[1,64], index: 11, kind: input, shape index: {}]
  %s12 = inlined_call_operand.vmem [shape: bf16[64,16], index: 12, kind: input, shape index: {}]
  %s13 = inlined_call_operand.vmem [shape: f32[1,16], index: 13, kind: input, shape index: {}]
  %s14 = inlined_call_operand.vmem [shape: f32[4,16,16], index: 14, kind: input, shape index: {}]
  %s15 = inlined_call_operand.vmem [shape: bf16[128,16], index: 15, kind: output, shape index: {}]
  %s16 = sld [smem:[#allocation0]]
  $region93: #{basic_block_up_forward.4} parent=0
    _
  %s18 = ssub.s32 1, %s16
  %s19 = scalar_select 0, %s18, %s16
  loop: start=0, step=1, limit=4
  $region2: #{basic_block_up_forward.4} parent=0 // loop_pre_header
    _
  $region3: #{basic_block_up_forward.4} parent=0 // loop_header
    %s21 = sphi 0, %s25
    %p22 = scmp.ge.s32.totalorder %s21, 4
    %s31 = sphi 0, %s33
    %s34 = sphi 0, %s31
    %s35 = sphi 0, %s34
    %s51 = sphi 0, %s35
    %s55 = sphi 0, %s55
    %s57 = sphi 0, %s55
    %s58 = sphi 0, %s57
    %s72 = sphi 0, %s58
    %s76 = sphi 0, %s76
    %s78 = sphi 0, %s76
    %s79 = sphi 0, %s78
    %s93 = sphi 0, %s79
    %s97 = sphi 0, %s97
    %s99 = sphi 0, %s97
    %s100 = sphi 0, %s99
    %s114 = sphi 0, %s100
    %s118 = sphi 0, %s118
    %s120 = sphi 0, %s118
    %s121 = sphi 0, %s120
    %s135 = sphi 0, %s121
    %s139 = sphi 0, %s139
    %s141 = sphi 0, %s139
    %s142 = sphi 0, %s141
    %s156 = sphi 0, %s142
    %s160 = sphi 0, %s160
    %s162 = sphi 0, %s160
    %s163 = sphi 0, %s162
    %s177 = sphi 0, %s163
    %s181 = sphi 0, %s181
    %s183 = sphi 0, %s181
    %s184 = sphi 0, %s183
    %s198 = sphi 0, %s184
    %s202 = sphi 0, %s202
    %s204 = sphi 0, %s202
    %s205 = sphi 0, %s204
    %s219 = sphi 0, %s205
    %s223 = sphi 0, %s223
    %s225 = sphi 0, %s223
    %s226 = sphi 0, %s225
    %s240 = sphi 0, %s226
    %s244 = sphi 0, %s244
    %s246 = sphi 0, %s244
    %s247 = sphi 0, %s246
    %s261 = sphi 0, %s247
    %s265 = sphi 0, %s265
    %s267 = sphi 0, %s265
    %s268 = sphi 0, %s267
    %s282 = sphi 0, %s268
    %s286 = sphi 0, %s286
    %s288 = sphi 0, %s286
    %s289 = sphi 0, %s288
    %s303 = sphi 0, %s289
    %s307 = sphi 0, %s307
    %s309 = sphi 0, %s307
    %s310 = sphi 0, %s309
    %s324 = sphi 0, %s310
    %s328 = sphi 0, %s328
    %s330 = sphi 0, %s328
    %s331 = sphi 0, %s330
    %s345 = sphi 0, %s331
    %s351 = sphi 0, %s353
    %s354 = sphi 0, %s351
    %s355 = sphi 0, %s354
    %s371 = sphi 0, %s355
  $region4: #{basic_block_up_forward.4} parent=0 // loop_header_branch
    %24 = sbr.rel (%p22) target = $region8
  $region5: #{basic_block_up_forward.4} parent=0 // loop_body
    %s26 = ssub.s32 %s21, 1
    %s27 = ssub.s32 %s21, 2
    %s28 = sadd.s32 %s21, 1
    %s29 = ssub.s32 %s21, %s28
    %p30 = scmp.eq.s32.totalorder %s29, 0
    %s32 = sadd.s32 %s31, 1
    %s33 = scalar_select %p30, %s31, %s32
    %p36 = pneg %p30
    %p37 = scmp.eq.s32.totalorder %s21, 1
    %p38 = por %p36, %p37
    %p39 = scmp.ne.s32.totalorder %s31, %s34
    %p40 = scmp.eq.s32.totalorder %s21, 0
    %p41 = por %p39, %p40
    %p42 = scmp.ne.s32.totalorder %s31, %s34
    %p43 = scmp.eq.s32.totalorder %s26, 1
    %p44 = por %p42, %p43
    %p45 = scmp.ne.s32.totalorder %s34, %s35
    %p46 = scmp.eq.s32.totalorder %s26, 0
    %p47 = por %p45, %p46
    %p48 = scmp.ne.s32.totalorder %s34, %s35
    %p49 = scmp.eq.s32.totalorder %s27, 1
    %p50 = por %p48, %p49
    %p52 = scmp.ne.s32.totalorder %s35, %s51
    %p53 = scmp.eq.s32.totalorder %s27, 0
    %p54 = por %p52, %p53
    %s56 = sadd.s32 %s55, 1
    %p59 = scmp.eq.s32.totalorder %s21, 1
    %p60 = scmp.ne.s32.totalorder %s55, %s57
    %p61 = scmp.eq.s32.totalorder %s21, 0
    %p62 = por %p60, %p61
    %p63 = scmp.ne.s32.totalorder %s55, %s57
    %p64 = scmp.eq.s32.totalorder %s26, 1
    %p65 = por %p63, %p64
    %p66 = scmp.ne.s32.totalorder %s57, %s58
    %p67 = scmp.eq.s32.totalorder %s26, 0
    %p68 = por %p66, %p67
    %p69 = scmp.ne.s32.totalorder %s57, %s58
    %p70 = scmp.eq.s32.totalorder %s27, 1
    %p71 = por %p69, %p70
    %p73 = scmp.ne.s32.totalorder %s58, %s72
    %p74 = scmp.eq.s32.totalorder %s27, 0
    %p75 = por %p73, %p74
    %s77 = sadd.s32 %s76, 1
    %p80 = scmp.eq.s32.totalorder %s21, 1
    %p81 = scmp.ne.s32.totalorder %s76, %s78
    %p82 = scmp.eq.s32.totalorder %s21, 0
    %p83 = por %p81, %p82
    %p84 = scmp.ne.s32.totalorder %s76, %s78
    %p85 = scmp.eq.s32.totalorder %s26, 1
    %p86 = por %p84, %p85
    %p87 = scmp.ne.s32.totalorder %s78, %s79
    %p88 = scmp.eq.s32.totalorder %s26, 0
    %p89 = por %p87, %p88
    %p90 = scmp.ne.s32.totalorder %s78, %s79
    %p91 = scmp.eq.s32.totalorder %s27, 1
    %p92 = por %p90, %p91
    %p94 = scmp.ne.s32.totalorder %s79, %s93
    %p95 = scmp.eq.s32.totalorder %s27, 0
    %p96 = por %p94, %p95
    %s98 = sadd.s32 %s97, 1
    %p101 = scmp.eq.s32.totalorder %s21, 1
    %p102 = scmp.ne.s32.totalorder %s97, %s99
    %p103 = scmp.eq.s32.totalorder %s21, 0
    %p104 = por %p102, %p103
    %p105 = scmp.ne.s32.totalorder %s97, %s99
    %p106 = scmp.eq.s32.totalorder %s26, 1
    %p107 = por %p105, %p106
    %p108 = scmp.ne.s32.totalorder %s99, %s100
    %p109 = scmp.eq.s32.totalorder %s26, 0
    %p110 = por %p108, %p109
    %p111 = scmp.ne.s32.totalorder %s99, %s100
    %p112 = scmp.eq.s32.totalorder %s27, 1
    %p113 = por %p111, %p112
    %p115 = scmp.ne.s32.totalorder %s100, %s114
    %p116 = scmp.eq.s32.totalorder %s27, 0
    %p117 = por %p115, %p116
    %s119 = sadd.s32 %s118, 1
    %p122 = scmp.eq.s32.totalorder %s21, 1
    %p123 = scmp.ne.s32.totalorder %s118, %s120
    %p124 = scmp.eq.s32.totalorder %s21, 0
    %p125 = por %p123, %p124
    %p126 = scmp.ne.s32.totalorder %s118, %s120
    %p127 = scmp.eq.s32.totalorder %s26, 1
    %p128 = por %p126, %p127
    %p129 = scmp.ne.s32.totalorder %s120, %s121
    %p130 = scmp.eq.s32.totalorder %s26, 0
    %p131 = por %p129, %p130
    %p132 = scmp.ne.s32.totalorder %s120, %s121
    %p133 = scmp.eq.s32.totalorder %s27, 1
    %p134 = por %p132, %p133
    %p136 = scmp.ne.s32.totalorder %s121, %s135
    %p137 = scmp.eq.s32.totalorder %s27, 0
    %p138 = por %p136, %p137
    %s140 = sadd.s32 %s139, 1
    %p143 = scmp.eq.s32.totalorder %s21, 1
    %p144 = scmp.ne.s32.totalorder %s139, %s141
    %p145 = scmp.eq.s32.totalorder %s21, 0
    %p146 = por %p144, %p145
    %p147 = scmp.ne.s32.totalorder %s139, %s141
    %p148 = scmp.eq.s32.totalorder %s26, 1
    %p149 = por %p147, %p148
    %p150 = scmp.ne.s32.totalorder %s141, %s142
    %p151 = scmp.eq.s32.totalorder %s26, 0
    %p152 = por %p150, %p151
    %p153 = scmp.ne.s32.totalorder %s141, %s142
    %p154 = scmp.eq.s32.totalorder %s27, 1
    %p155 = por %p153, %p154
    %p157 = scmp.ne.s32.totalorder %s142, %s156
    %p158 = scmp.eq.s32.totalorder %s27, 0
    %p159 = por %p157, %p158
    %s161 = sadd.s32 %s160, 1
    %p164 = scmp.eq.s32.totalorder %s21, 1
    %p165 = scmp.ne.s32.totalorder %s160, %s162
    %p166 = scmp.eq.s32.totalorder %s21, 0
    %p167 = por %p165, %p166
    %p168 = scmp.ne.s32.totalorder %s160, %s162
    %p169 = scmp.eq.s32.totalorder %s26, 1
    %p170 = por %p168, %p169
    %p171 = scmp.ne.s32.totalorder %s162, %s163
    %p172 = scmp.eq.s32.totalorder %s26, 0
    %p173 = por %p171, %p172
    %p174 = scmp.ne.s32.totalorder %s162, %s163
    %p175 = scmp.eq.s32.totalorder %s27, 1
    %p176 = por %p174, %p175
    %p178 = scmp.ne.s32.totalorder %s163, %s177
    %p179 = scmp.eq.s32.totalorder %s27, 0
    %p180 = por %p178, %p179
    %s182 = sadd.s32 %s181, 1
    %p185 = scmp.eq.s32.totalorder %s21, 1
    %p186 = scmp.ne.s32.totalorder %s181, %s183
    %p187 = scmp.eq.s32.totalorder %s21, 0
    %p188 = por %p186, %p187
    %p189 = scmp.ne.s32.totalorder %s181, %s183
    %p190 = scmp.eq.s32.totalorder %s26, 1
    %p191 = por %p189, %p190
    %p192 = scmp.ne.s32.totalorder %s183, %s184
    %p193 = scmp.eq.s32.totalorder %s26, 0
    %p194 = por %p192, %p193
    %p195 = scmp.ne.s32.totalorder %s183, %s184
    %p196 = scmp.eq.s32.totalorder %s27, 1
    %p197 = por %p195, %p196
    %p199 = scmp.ne.s32.totalorder %s184, %s198
    %p200 = scmp.eq.s32.totalorder %s27, 0
    %p201 = por %p199, %p200
    %s203 = sadd.s32 %s202, 1
    %p206 = scmp.eq.s32.totalorder %s21, 1
    %p207 = scmp.ne.s32.totalorder %s202, %s204
    %p208 = scmp.eq.s32.totalorder %s21, 0
    %p209 = por %p207, %p208
    %p210 = scmp.ne.s32.totalorder %s202, %s204
    %p211 = scmp.eq.s32.totalorder %s26, 1
    %p212 = por %p210, %p211
    %p213 = scmp.ne.s32.totalorder %s204, %s205
    %p214 = scmp.eq.s32.totalorder %s26, 0
    %p215 = por %p213, %p214
    %p216 = scmp.ne.s32.totalorder %s204, %s205
    %p217 = scmp.eq.s32.totalorder %s27, 1
    %p218 = por %p216, %p217
    %p220 = scmp.ne.s32.totalorder %s205, %s219
    %p221 = scmp.eq.s32.totalorder %s27, 0
    %p222 = por %p220, %p221
    %s224 = sadd.s32 %s223, 1
    %p227 = scmp.eq.s32.totalorder %s21, 1
    %p228 = scmp.ne.s32.totalorder %s223, %s225
    %p229 = scmp.eq.s32.totalorder %s21, 0
    %p230 = por %p228, %p229
    %p231 = scmp.ne.s32.totalorder %s223, %s225
    %p232 = scmp.eq.s32.totalorder %s26, 1
    %p233 = por %p231, %p232
    %p234 = scmp.ne.s32.totalorder %s225, %s226
    %p235 = scmp.eq.s32.totalorder %s26, 0
    %p236 = por %p234, %p235
    %p237 = scmp.ne.s32.totalorder %s225, %s226
    %p238 = scmp.eq.s32.totalorder %s27, 1
    %p239 = por %p237, %p238
    %p241 = scmp.ne.s32.totalorder %s226, %s240
    %p242 = scmp.eq.s32.totalorder %s27, 0
    %p243 = por %p241, %p242
    %s245 = sadd.s32 %s244, 1
    %p248 = scmp.eq.s32.totalorder %s21, 1
    %p249 = scmp.ne.s32.totalorder %s244, %s246
    %p250 = scmp.eq.s32.totalorder %s21, 0
    %p251 = por %p249, %p250
    %p252 = scmp.ne.s32.totalorder %s244, %s246
    %p253 = scmp.eq.s32.totalorder %s26, 1
    %p254 = por %p252, %p253
    %p255 = scmp.ne.s32.totalorder %s246, %s247
    %p256 = scmp.eq.s32.totalorder %s26, 0
    %p257 = por %p255, %p256
    %p258 = scmp.ne.s32.totalorder %s246, %s247
    %p259 = scmp.eq.s32.totalorder %s27, 1
    %p260 = por %p258, %p259
    %p262 = scmp.ne.s32.totalorder %s247, %s261
    %p263 = scmp.eq.s32.totalorder %s27, 0
    %p264 = por %p262, %p263
    %s266 = sadd.s32 %s265, 1
    %p269 = scmp.eq.s32.totalorder %s21, 1
    %p270 = scmp.ne.s32.totalorder %s265, %s267
    %p271 = scmp.eq.s32.totalorder %s21, 0
    %p272 = por %p270, %p271
    %p273 = scmp.ne.s32.totalorder %s265, %s267
    %p274 = scmp.eq.s32.totalorder %s26, 1
    %p275 = por %p273, %p274
    %p276 = scmp.ne.s32.totalorder %s267, %s268
    %p277 = scmp.eq.s32.totalorder %s26, 0
    %p278 = por %p276, %p277
    %p279 = scmp.ne.s32.totalorder %s267, %s268
    %p280 = scmp.eq.s32.totalorder %s27, 1
    %p281 = por %p279, %p280
    %p283 = scmp.ne.s32.totalorder %s268, %s282
    %p284 = scmp.eq.s32.totalorder %s27, 0
    %p285 = por %p283, %p284
    %s287 = sadd.s32 %s286, 1
    %p290 = scmp.eq.s32.totalorder %s21, 1
    %p291 = scmp.ne.s32.totalorder %s286, %s288
    %p292 = scmp.eq.s32.totalorder %s21, 0
    %p293 = por %p291, %p292
    %p294 = scmp.ne.s32.totalorder %s286, %s288
    %p295 = scmp.eq.s32.totalorder %s26, 1
    %p296 = por %p294, %p295
    %p297 = scmp.ne.s32.totalorder %s288, %s289
    %p298 = scmp.eq.s32.totalorder %s26, 0
    %p299 = por %p297, %p298
    %p300 = scmp.ne.s32.totalorder %s288, %s289
    %p301 = scmp.eq.s32.totalorder %s27, 1
    %p302 = por %p300, %p301
    %p304 = scmp.ne.s32.totalorder %s289, %s303
    %p305 = scmp.eq.s32.totalorder %s27, 0
    %p306 = por %p304, %p305
    %s308 = sadd.s32 %s307, 1
    %p311 = scmp.eq.s32.totalorder %s21, 1
    %p312 = scmp.ne.s32.totalorder %s307, %s309
    %p313 = scmp.eq.s32.totalorder %s21, 0
    %p314 = por %p312, %p313
    %p315 = scmp.ne.s32.totalorder %s307, %s309
    %p316 = scmp.eq.s32.totalorder %s26, 1
    %p317 = por %p315, %p316
    %p318 = scmp.ne.s32.totalorder %s309, %s310
    %p319 = scmp.eq.s32.totalorder %s26, 0
    %p320 = por %p318, %p319
    %p321 = scmp.ne.s32.totalorder %s309, %s310
    %p322 = scmp.eq.s32.totalorder %s27, 1
    %p323 = por %p321, %p322
    %p325 = scmp.ne.s32.totalorder %s310, %s324
    %p326 = scmp.eq.s32.totalorder %s27, 0
    %p327 = por %p325, %p326
    %s329 = sadd.s32 %s328, 1
    %p332 = scmp.eq.s32.totalorder %s21, 1
    %p333 = scmp.ne.s32.totalorder %s328, %s330
    %p334 = scmp.eq.s32.totalorder %s21, 0
    %p335 = por %p333, %p334
    %p336 = scmp.ne.s32.totalorder %s328, %s330
    %p337 = scmp.eq.s32.totalorder %s26, 1
    %p338 = por %p336, %p337
    %p339 = scmp.ne.s32.totalorder %s330, %s331
    %p340 = scmp.eq.s32.totalorder %s26, 0
    %p341 = por %p339, %p340
    %p342 = scmp.ne.s32.totalorder %s330, %s331
    %p343 = scmp.eq.s32.totalorder %s27, 1
    %p344 = por %p342, %p343
    %p346 = scmp.ne.s32.totalorder %s331, %s345
    %p347 = scmp.eq.s32.totalorder %s27, 0
    %p348 = por %p346, %p347
    %s349 = ssub.s32 %s21, %s28
    %p350 = scmp.eq.s32.totalorder %s349, 0
    %s352 = sadd.s32 %s351, 1
    %s353 = scalar_select %p350, %s351, %s352
    %p356 = pneg %p350
    %p357 = scmp.eq.s32.totalorder %s21, 1
    %p358 = por %p356, %p357
    %p359 = scmp.ne.s32.totalorder %s351, %s354
    %p360 = scmp.eq.s32.totalorder %s21, 0
    %p361 = por %p359, %p360
    %p362 = scmp.ne.s32.totalorder %s351, %s354
    %p363 = scmp.eq.s32.totalorder %s26, 1
    %p364 = por %p362, %p363
    %p365 = scmp.ne.s32.totalorder %s354, %s355
    %p366 = scmp.eq.s32.totalorder %s26, 0
    %p367 = por %p365, %p366
    %p368 = scmp.ne.s32.totalorder %s354, %s355
    %p369 = scmp.eq.s32.totalorder %s27, 1
    %p370 = por %p368, %p369
    %p372 = scmp.ne.s32.totalorder %s355, %s371
    %p373 = scmp.eq.s32.totalorder %s27, 0
    %p374 = por %p372, %p373
    %p375 = scmp.le.s32.totalorder 1, %s21
    %p376 = scmp.lt.s32.totalorder %s21, 3
    %p377 = pnand %p375, %p376
    %p378 = pneg %p377
    // Predicated region
    $region9: #{basic_block_up_forward.4} parent=5 // pred_check
      _
    $region10: #{basic_block_up_forward.4} parent=5 // pred_check_branch
      %380 = sbr.rel (%p377) target = $region12
    $region11: #{basic_block_up_forward.4} parent=5 // pred_region
      %s381 = ssub.s32 %s21, 1
      // Predicated region
      $region13: #{basic_block_up_forward.4} parent=11 // pred_check
        %p382 = pneg %p68
      $region14: #{basic_block_up_forward.4} parent=11 // pred_check_branch
        %384 = sbr.rel (%p382) target = $region16
      $region15: #{basic_block_up_forward.4} parent=11 // pred_region
        _
      $region16: #{basic_block_up_forward.4} parent=11 // pred_fallthru
        _
      // Predicated region
      $region17: #{basic_block_up_forward.4} parent=11 // pred_check
        %p385 = pneg %p89
      $region18: #{basic_block_up_forward.4} parent=11 // pred_check_branch
        %387 = sbr.rel (%p385) target = $region20
      $region19: #{basic_block_up_forward.4} parent=11 // pred_region
        _
      $region20: #{basic_block_up_forward.4} parent=11 // pred_fallthru
        _
      // Predicated region
      $region21: #{basic_block_up_forward.4} parent=11 // pred_check
        %p388 = pneg %p110
      $region22: #{basic_block_up_forward.4} parent=11 // pred_check_branch
        %390 = sbr.rel (%p388) target = $region24
      $region23: #{basic_block_up_forward.4} parent=11 // pred_region
        _
      $region24: #{basic_block_up_forward.4} parent=11 // pred_fallthru
        _
      // Predicated region
      $region25: #{basic_block_up_forward.4} parent=11 // pred_check
        %p391 = pneg %p131
      $region26: #{basic_block_up_forward.4} parent=11 // pred_check_branch
        %393 = sbr.rel (%p391) target = $region28
      $region27: #{basic_block_up_forward.4} parent=11 // pred_region
        _
      $region28: #{basic_block_up_forward.4} parent=11 // pred_fallthru
        _
      // Predicated region
      $region29: #{basic_block_up_forward.4} parent=11 // pred_check
        %p394 = pneg %p152
      $region30: #{basic_block_up_forward.4} parent=11 // pred_check_branch
        %396 = sbr.rel (%p394) target = $region32
      $region31: #{basic_block_up_forward.4} parent=11 // pred_region
        _
      $region32: #{basic_block_up_forward.4} parent=11 // pred_fallthru
        _
      // Predicated region
      $region33: #{basic_block_up_forward.4} parent=11 // pred_check
        %p397 = pneg %p173
      $region34: #{basic_block_up_forward.4} parent=11 // pred_check_branch
        %399 = sbr.rel (%p397) target = $region36
      $region35: #{basic_block_up_forward.4} parent=11 // pred_region
        _
      $region36: #{basic_block_up_forward.4} parent=11 // pred_fallthru
        _
      // Predicated region
      $region37: #{basic_block_up_forward.4} parent=11 // pred_check
        %p400 = pneg %p194
      $region38: #{basic_block_up_forward.4} parent=11 // pred_check_branch
        %402 = sbr.rel (%p400) target = $region40
      $region39: #{basic_block_up_forward.4} parent=11 // pred_region
        _
      $region40: #{basic_block_up_forward.4} parent=11 // pred_fallthru
        _
      // Predicated region
      $region41: #{basic_block_up_forward.4} parent=11 // pred_check
        %p403 = pneg %p215
      $region42: #{basic_block_up_forward.4} parent=11 // pred_check_branch
        %405 = sbr.rel (%p403) target = $region44
      $region43: #{basic_block_up_forward.4} parent=11 // pred_region
        _
      $region44: #{basic_block_up_forward.4} parent=11 // pred_fallthru
        _
      // Predicated region
      $region45: #{basic_block_up_forward.4} parent=11 // pred_check
        %p406 = pneg %p236
      $region46: #{basic_block_up_forward.4} parent=11 // pred_check_branch
        %408 = sbr.rel (%p406) target = $region48
      $region47: #{basic_block_up_forward.4} parent=11 // pred_region
        _
      $region48: #{basic_block_up_forward.4} parent=11 // pred_fallthru
        _
      // Predicated region
      $region49: #{basic_block_up_forward.4} parent=11 // pred_check
        %p409 = pneg %p257
      $region50: #{basic_block_up_forward.4} parent=11 // pred_check_branch
        %411 = sbr.rel (%p409) target = $region52
      $region51: #{basic_block_up_forward.4} parent=11 // pred_region
        _
      $region52: #{basic_block_up_forward.4} parent=11 // pred_fallthru
        _
      // Predicated region
      $region53: #{basic_block_up_forward.4} parent=11 // pred_check
        %p412 = pneg %p278
      $region54: #{basic_block_up_forward.4} parent=11 // pred_check_branch
        %414 = sbr.rel (%p412) target = $region56
      $region55: #{basic_block_up_forward.4} parent=11 // pred_region
        _
      $region56: #{basic_block_up_forward.4} parent=11 // pred_fallthru
        _
      // Predicated region
      $region57: #{basic_block_up_forward.4} parent=11 // pred_check
        %p415 = pneg %p299
      $region58: #{basic_block_up_forward.4} parent=11 // pred_check_branch
        %417 = sbr.rel (%p415) target = $region60
      $region59: #{basic_block_up_forward.4} parent=11 // pred_region
        _
      $region60: #{basic_block_up_forward.4} parent=11 // pred_fallthru
        _
      // Predicated region
      $region61: #{basic_block_up_forward.4} parent=11 // pred_check
        %p418 = pneg %p320
      $region62: #{basic_block_up_forward.4} parent=11 // pred_check_branch
        %420 = sbr.rel (%p418) target = $region64
      $region63: #{basic_block_up_forward.4} parent=11 // pred_region
        _
      $region64: #{basic_block_up_forward.4} parent=11 // pred_fallthru
        _
      // Predicated region
      $region65: #{basic_block_up_forward.4} parent=11 // pred_check
        %p421 = pneg %p341
      $region66: #{basic_block_up_forward.4} parent=11 // pred_check_branch
        %423 = sbr.rel (%p421) target = $region68
      $region67: #{basic_block_up_forward.4} parent=11 // pred_region
        _
      $region68: #{basic_block_up_forward.4} parent=11 // pred_fallthru
        _
    $region12: #{basic_block_up_forward.4} parent=5 // pred_fallthru
      _
    %p424 = scmp.lt.s32.totalorder %s21, 2
    // Predicated region
    $region69: #{basic_block_up_forward.4} parent=5 // pred_check
      %p425 = pneg %p424
    $region70: #{basic_block_up_forward.4} parent=5 // pred_check_branch
      %427 = sbr.rel (%p425) target = $region72
    $region71: #{basic_block_up_forward.4} parent=5 // pred_region
      // Predicated region
      $region73: #{basic_block_up_forward.4} parent=71 // pred_check
        %p428 = pneg %p41
      $region74: #{basic_block_up_forward.4} parent=71 // pred_check_branch
        %430 = sbr.rel (%p428) target = $region76
      $region75: #{basic_block_up_forward.4} parent=71 // pred_region
        %s431 = smul.u32 8, %s21
        %p432 = scmp.lt.s32.totalorder %s431, 15
        %s433 = scalar_select %p432, %s431, 15
        %s434 = smul.addr %s433, 4
        %s435 = scalar_lea.vmem %s0, %s434
        %s436 = smul.u32 8, %s21
      $region76: #{basic_block_up_forward.4} parent=71 // pred_fallthru
        _
    $region72: #{basic_block_up_forward.4} parent=5 // pred_fallthru
      _
    %p437 = scmp.le.s32.totalorder 1, %s21
    %p438 = scmp.lt.s32.totalorder %s21, 3
    %p439 = pnand %p437, %p438
    %p440 = pneg %p439
    // Predicated region
    $region77: #{basic_block_up_forward.4} parent=5 // pred_check
      _
    $region78: #{basic_block_up_forward.4} parent=5 // pred_check_branch
      %442 = sbr.rel (%p439) target = $region80
    $region79: #{basic_block_up_forward.4} parent=5 // pred_region
      %s443 = ssub.s32 %s21, 1
      %s444 = smul.u32 8, %s26
      %p445 = scmp.lt.s32.totalorder %s444, 15
      %s446 = scalar_select %p445, %s444, 15
      %s447 = smul.addr %s446, 4
      %s448 = scalar_lea.vmem %s0, %s447
      %p449 = pneg %p47
      %p450 = pneg %p44
      %p451 = pneg %p68
      %p452 = pneg %p65
      %p453 = pneg %p89
      %p454 = pneg %p86
      %p455 = pneg %p110
      %p456 = pneg %p107
      %p457 = pneg %p131
      %p458 = pneg %p128
      %p459 = pneg %p152
      %p460 = pneg %p149
      %p461 = pneg %p173
      %p462 = pneg %p170
      %p463 = pneg %p194
      %p464 = pneg %p191
      %p465 = pneg %p215
      %p466 = pneg %p212
      %p467 = pneg %p236
      %p468 = pneg %p233
      %p469 = pneg %p257
      %p470 = pneg %p254
      %p471 = pneg %p278
      %p472 = pneg %p275
      %p473 = pneg %p299
      %p474 = pneg %p296
      %p475 = pneg %p320
      %p476 = pneg %p317
      %p477 = pneg %p341
      %p478 = pneg %p338
      %p479 = pneg %p367
      %p480 = pneg %p364
      %s481 = smul.u32 8, %s26
      %p482 = scmp.lt.s32.totalorder %s481, 15
      %s483 = scalar_select %p482, %s481, 15
      %s484 = smul.addr %s483, 4
      %s485 = scalar_lea.vmem %s15, %s484
      %s486 = smul.u32 8, %s26
      %p487 = scmp.lt.s32.totalorder %s486, 15
      %s488 = scalar_select %p487, %s486, 15
      %s489 = smul.addr %s488, 4
      %s490 = scalar_lea.vmem %s0, %s489
      %s491 = smul.u32 8, %s26
      %s492 = smul.u32 8, %s26
      %p493 = scmp.lt.s32.totalorder %s492, 15
      %s494 = scalar_select %p493, %s492, 15
      %s495 = smul.addr %s494, 4
      %s496 = scalar_lea.vmem %s15, %s495
      %s497 = smul.u32 8, %s26
      %v499 = vld [vmem:[%s14] sm:$0xff]
      %v500 = vld [vmem:[%s14 + $0x8] sm:$0xff]
      %v501 = vld [vmem:[%s14 + $0x10] sm:$0xff]
      %v502 = vld [vmem:[%s14 + $0x18] sm:$0xff]
      %v503 = vld [vmem:[%s14 + $0x20] sm:$0xff]
      %v504 = vld [vmem:[%s14 + $0x28] sm:$0xff]
      %v505 = vld [vmem:[%s14 + $0x30] sm:$0xff]
      %v506 = vld [vmem:[%s14 + $0x38] sm:$0xff]
      %v507 = vld [vmem:[%s490] sm:$0xf]
      %v508 = vld [vmem:[%s490 + $0x4] sm:$0xf]
      %v509 = vld [vmem:[%s490 + $0x8] sm:$0xf]
      %v510 = vld [vmem:[%s490 + $0xc] sm:$0xf]
      %v511 = vld [vmem:[%s490 + $0x10] sm:$0xf]
      %v512 = vld [vmem:[%s490 + $0x14] sm:$0xf]
      %v513 = vld [vmem:[%s490 + $0x18] sm:$0xf]
      %v514 = vld [vmem:[%s490 + $0x1c] sm:$0xf]
      %v515 = vunpack.c.l.bf16 %v507
      %v516 = vunpack.c.l.bf16 %v508
      %v517 = vunpack.c.l.bf16 %v509
      %v518 = vunpack.c.l.bf16 %v510
      %v519 = vunpack.c.l.bf16 %v511
      %v520 = vunpack.c.l.bf16 %v512
      %v521 = vunpack.c.l.bf16 %v513
      %v522 = vunpack.c.l.bf16 %v514
      %v523 = vld [vmem:[%s2] sm:$0x1]
      %v524 = vld [vmem:[%s3] sm:$0x1]
      %vm525 = vcmask 130048
      %v526 = vsel %vm525, %v515, 0.0
      %527 = vadd.xlane.f32.xlu0 %v526
      %v528 = vpop.xlane.xlu0 %527
      %v529 = vsel %vm525, %v516, 0.0
      %530 = vadd.xlane.f32.xlu0 %v529
      %v531 = vpop.xlane.xlu0 %530
      %v532 = vsel %vm525, %v517, 0.0
      %533 = vadd.xlane.f32.xlu0 %v532
      %v534 = vpop.xlane.xlu0 %533
      %v535 = vsel %vm525, %v518, 0.0
      %536 = vadd.xlane.f32.xlu0 %v535
      %v537 = vpop.xlane.xlu0 %536
      %v538 = vsel %vm525, %v519, 0.0
      %539 = vadd.xlane.f32.xlu0 %v538
      %v540 = vpop.xlane.xlu0 %539
      %v541 = vsel %vm525, %v520, 0.0
      %542 = vadd.xlane.f32.xlu0 %v541
      %v543 = vpop.xlane.xlu0 %542
      %v544 = vsel %vm525, %v521, 0.0
      %545 = vadd.xlane.f32.xlu0 %v544
      %v546 = vpop.xlane.xlu0 %545
      %v547 = vsel %vm525, %v522, 0.0
      %548 = vadd.xlane.f32.xlu0 %v547
      %v549 = vpop.xlane.xlu0 %548
      %v550 = vrcp.pop 16.0
      %v551 = vmul.f32 16.0, %v550
      %v552 = vsub.f32 1.0, %v551
      %v553 = vmul.f32 %v550, %v552
      %v554 = vadd.f32 %v550, %v553
      %vm555 = vweird.f32 %v550
      %v556 = vsel %vm555, %v550, %v554
      %v557 = vmul.f32 %v528, %v556
      %v558 = vmul.f32 %v531, %v556
      %v559 = vmul.f32 %v534, %v556
      %v560 = vmul.f32 %v537, %v556
      %v561 = vmul.f32 %v540, %v556
      %v562 = vmul.f32 %v543, %v556
      %v563 = vmul.f32 %v546, %v556
      %v564 = vmul.f32 %v549, %v556
      %v565 = vsub.f32 %v515, %v557
      %v566 = vsub.f32 %v516, %v558
      %v567 = vsub.f32 %v517, %v559
      %v568 = vsub.f32 %v518, %v560
      %v569 = vsub.f32 %v519, %v561
      %v570 = vsub.f32 %v520, %v562
      %v571 = vsub.f32 %v521, %v563
      %v572 = vsub.f32 %v522, %v564
      %v573 = vmul.f32 %v565, %v565
      %v574 = vmul.f32 %v566, %v566
      %v575 = vmul.f32 %v567, %v567
      %v576 = vmul.f32 %v568, %v568
      %v577 = vmul.f32 %v569, %v569
      %v578 = vmul.f32 %v570, %v570
      %v579 = vmul.f32 %v571, %v571
      %v580 = vmul.f32 %v572, %v572
      %v581 = vsel %vm525, %v573, 0.0
      %582 = vadd.xlane.f32.xlu0 %v581
      %v583 = vpop.xlane.xlu0 %582
      %v584 = vsel %vm525, %v574, 0.0
      %585 = vadd.xlane.f32.xlu0 %v584
      %v586 = vpop.xlane.xlu0 %585
      %v587 = vsel %vm525, %v575, 0.0
      %588 = vadd.xlane.f32.xlu0 %v587
      %v589 = vpop.xlane.xlu0 %588
      %v590 = vsel %vm525, %v576, 0.0
      %591 = vadd.xlane.f32.xlu0 %v590
      %v592 = vpop.xlane.xlu0 %591
      %v593 = vsel %vm525, %v577, 0.0
      %594 = vadd.xlane.f32.xlu0 %v593
      %v595 = vpop.xlane.xlu0 %594
      %v596 = vsel %vm525, %v578, 0.0
      %597 = vadd.xlane.f32.xlu0 %v596
      %v598 = vpop.xlane.xlu0 %597
      %v599 = vsel %vm525, %v579, 0.0
      %600 = vadd.xlane.f32.xlu0 %v599
      %v601 = vpop.xlane.xlu0 %600
      %v602 = vsel %vm525, %v580, 0.0
      %603 = vadd.xlane.f32.xlu0 %v602
      %v604 = vpop.xlane.xlu0 %603
      %v605 = vmul.f32 %v583, %v556
      %v606 = vmul.f32 %v586, %v556
      %v607 = vmul.f32 %v589, %v556
      %v608 = vmul.f32 %v592, %v556
      %v609 = vmul.f32 %v595, %v556
      %v610 = vmul.f32 %v598, %v556
      %v611 = vmul.f32 %v601, %v556
      %v612 = vmul.f32 %v604, %v556
      %v613 = vadd.f32 %v605, 1e-05
      %v614 = vadd.f32 %v606, 1e-05
      %v615 = vadd.f32 %v607, 1e-05
      %v616 = vadd.f32 %v608, 1e-05
      %v617 = vadd.f32 %v609, 1e-05
      %v618 = vadd.f32 %v610, 1e-05
      %v619 = vadd.f32 %v611, 1e-05
      %v620 = vadd.f32 %v612, 1e-05
      %v621 = vrsqrt.pop %v613
      %v622 = vmul.f32 %v621, %v613
      %v623 = vmul.f32 %v622, %v621
      %v624 = vmul.f32 0.5, %v623
      %v625 = vsub.f32 1.5, %v624
      %v626 = vmul.f32 %v621, %v625
      %vm627 = vweird.f32 %v613
      %vm628 = vweird.f32 %v621
      %vm629 = vmor %vm627, %vm628
      %v630 = vsel %vm629, %v621, %v626
      %v631 = vrsqrt.pop %v614
      %v632 = vmul.f32 %v631, %v614
      %v633 = vmul.f32 %v632, %v631
      %v634 = vmul.f32 0.5, %v633
      %v635 = vsub.f32 1.5, %v634
      %v636 = vmul.f32 %v631, %v635
      %vm637 = vweird.f32 %v614
      %vm638 = vweird.f32 %v631
      %vm639 = vmor %vm637, %vm638
      %v640 = vsel %vm639, %v631, %v636
      %v641 = vrsqrt.pop %v615
      %v642 = vmul.f32 %v641, %v615
      %v643 = vmul.f32 %v642, %v641
      %v644 = vmul.f32 0.5, %v643
      %v645 = vsub.f32 1.5, %v644
      %v646 = vmul.f32 %v641, %v645
      %vm647 = vweird.f32 %v615
      %vm648 = vweird.f32 %v641
      %vm649 = vmor %vm647, %vm648
      %v650 = vsel %vm649, %v641, %v646
      %v651 = vrsqrt.pop %v616
      %v652 = vmul.f32 %v651, %v616
      %v653 = vmul.f32 %v652, %v651
      %v654 = vmul.f32 0.5, %v653
      %v655 = vsub.f32 1.5, %v654
      %v656 = vmul.f32 %v651, %v655
      %vm657 = vweird.f32 %v616
      %vm658 = vweird.f32 %v651
      %vm659 = vmor %vm657, %vm658
      %v660 = vsel %vm659, %v651, %v656
      %v661 = vrsqrt.pop %v617
      %v662 = vmul.f32 %v661, %v617
      %v663 = vmul.f32 %v662, %v661
      %v664 = vmul.f32 0.5, %v663
      %v665 = vsub.f32 1.5, %v664
      %v666 = vmul.f32 %v661, %v665
      %vm667 = vweird.f32 %v617
      %vm668 = vweird.f32 %v661
      %vm669 = vmor %vm667, %vm668
      %v670 = vsel %vm669, %v661, %v666
      %v671 = vrsqrt.pop %v618
      %v672 = vmul.f32 %v671, %v618
      %v673 = vmul.f32 %v672, %v671
      %v674 = vmul.f32 0.5, %v673
      %v675 = vsub.f32 1.5, %v674
      %v676 = vmul.f32 %v671, %v675
      %vm677 = vweird.f32 %v618
      %vm678 = vweird.f32 %v671
      %vm679 = vmor %vm677, %vm678
      %v680 = vsel %vm679, %v671, %v676
      %v681 = vrsqrt.pop %v619
      %v682 = vmul.f32 %v681, %v619
      %v683 = vmul.f32 %v682, %v681
      %v684 = vmul.f32 0.5, %v683
      %v685 = vsub.f32 1.5, %v684
      %v686 = vmul.f32 %v681, %v685
      %vm687 = vweird.f32 %v619
      %vm688 = vweird.f32 %v681
      %vm689 = vmor %vm687, %vm688
      %v690 = vsel %vm689, %v681, %v686
      %v691 = vrsqrt.pop %v620
      %v692 = vmul.f32 %v691, %v620
      %v693 = vmul.f32 %v692, %v691
      %v694 = vmul.f32 0.5, %v693
      %v695 = vsub.f32 1.5, %v694
      %v696 = vmul.f32 %v691, %v695
      %vm697 = vweird.f32 %v620
      %vm698 = vweird.f32 %v691
      %vm699 = vmor %vm697, %vm698
      %v700 = vsel %vm699, %v691, %v696
      %v701 = vmul.f32 %v565, %v630
      %v702 = vmul.f32 %v566, %v640
      %v703 = vmul.f32 %v567, %v650
      %v704 = vmul.f32 %v568, %v660
      %v705 = vmul.f32 %v569, %v670
      %v706 = vmul.f32 %v570, %v680
      %v707 = vmul.f32 %v571, %v690
      %v708 = vmul.f32 %v572, %v700
      %v710 = vperm.slane %v523, 0
      %v712 = vmul.f32 %v701, %v710
      %v713 = vmul.f32 %v702, %v710
      %v714 = vmul.f32 %v703, %v710
      %v715 = vmul.f32 %v704, %v710
      %v716 = vmul.f32 %v705, %v710
      %v717 = vmul.f32 %v706, %v710
      %v718 = vmul.f32 %v707, %v710
      %v719 = vmul.f32 %v708, %v710
      %v721 = vperm.slane %v524, 0
      %v723 = vadd.f32 %v712, %v721
      %v724 = vadd.f32 %v713, %v721
      %v725 = vadd.f32 %v714, %v721
      %v726 = vadd.f32 %v715, %v721
      %v727 = vadd.f32 %v716, %v721
      %v728 = vadd.f32 %v717, %v721
      %v729 = vadd.f32 %v718, %v721
      %v730 = vadd.f32 %v719, %v721
      %v731 = vpack.c.bf16 %v724, %v723
      %v732 = vpack.c.bf16 %v726, %v725
      %v733 = vpack.c.bf16 %v728, %v727
      %v734 = vpack.c.bf16 %v730, %v729
      %v735 = vld [vmem:[%s4] sm:$0xf]
      %v736 = vld [vmem:[%s4 + $0x4] sm:$0xf]
      %v737 = vld [vmem:[%s5] sm:$0x1]
      %v739 = vperm.slane %v737, 0
      %v743 = vunpack.c.l.b16 %v735
      %v744 = vunpack.c.l.b16 %v736
      %v745 = vpack.c.b16 %v744, %v743
      %v748 = vsel %vm525, %v731, 0
      %v751 = vsel %vm525, %v732, 0
      %v754 = vsel %vm525, %v733, 0
      %v757 = vsel %vm525, %v734, 0
      %759 = vmatpush.bf16.msra.mxu0 0
      %760 = vmatpush.bf16.msra.mxu0 0
      %761 = vmatpush.bf16.msra.mxu0 0
      %762 = vmatpush.bf16.msra.mxu0 0
      %763 = vmatpush.bf16.msra.mxu0 0
      %764 = vmatpush.bf16.msra.mxu0 0
      %765 = vmatpush.bf16.msra.mxu0 0
      %766 = vmatpush.bf16.msra.mxu0 %v745
      %767 = vmatmul.bf16.gmra.mxu0 %v748
      %v768 = vpop.f32.mrf.mxu0
      %v769 = vadd.f32 %v739, %v768
      %v770 = vpop.f32.mrf.mxu0
      %v771 = vadd.f32 %v739, %v770
      %772 = vmatmul.bf16.gmra.mxu0 %v751
      %v773 = vpop.f32.mrf.mxu0
      %v774 = vadd.f32 %v739, %v773
      %v775 = vpop.f32.mrf.mxu0
      %v776 = vadd.f32 %v739, %v775
      %777 = vmatmul.bf16.gmra.mxu0 %v754
      %v778 = vpop.f32.mrf.mxu0
      %v779 = vadd.f32 %v739, %v778
      %v780 = vpop.f32.mrf.mxu0
      %v781 = vadd.f32 %v739, %v780
      %782 = vmatmul.bf16.gmra.mxu0 %v757
      %v783 = vpop.f32.mrf.mxu0
      %v784 = vadd.f32 %v739, %v783
      %v785 = vpop.f32.mrf.mxu0
      %v786 = vadd.f32 %v739, %v785
      %787 = vdwg.mxu0
      %v788 = vld [vmem:[%s1] sm:$0xff]
      %v789 = vld [vmem:[%s1 + $0x8] sm:$0xff]
      %v790 = vld [vmem:[%s1 + $0x10] sm:$0xff]
      %v791 = vld [vmem:[%s1 + $0x18] sm:$0xff]
      %v792 = vmul.f32 %v769, 0.35355338
      %v793 = vmul.f32 %v771, 0.35355338
      %v794 = vmul.f32 %v774, 0.35355338
      %v795 = vmul.f32 %v776, 0.35355338
      %v796 = vmul.f32 %v779, 0.35355338
      %v797 = vmul.f32 %v781, 0.35355338
      %v798 = vmul.f32 %v784, 0.35355338
      %v799 = vmul.f32 %v786, 0.35355338
      %v800 = vpack.c.bf16 %v792, %v792
      %v801 = vpack.c.bf16 %v793, %v793
      %v802 = vpack.c.bf16 %v794, %v794
      %v803 = vpack.c.bf16 %v795, %v795
      %v804 = vpack.c.bf16 %v796, %v796
      %v805 = vpack.c.bf16 %v797, %v797
      %v806 = vpack.c.bf16 %v798, %v798
      %v807 = vpack.c.bf16 %v799, %v799
      %v808 = vpack.c.bf16 %v769, %v769
      %v809 = vpack.c.bf16 %v771, %v771
      %v810 = vpack.c.bf16 %v774, %v774
      %v811 = vpack.c.bf16 %v776, %v776
      %v812 = vpack.c.bf16 %v779, %v779
      %v813 = vpack.c.bf16 %v781, %v781
      %v814 = vpack.c.bf16 %v784, %v784
      %v815 = vpack.c.bf16 %v786, %v786
      %v818 = vunpack.c.l.b16 %v800
      %v819 = vunpack.c.l.b16 %v801
      %v820 = vpack.c.b16 %v819, %v818
      %v823 = vunpack.c.l.b16 %v808
      %v824 = vunpack.c.l.b16 %v809
      %v825 = vpack.c.b16 %v824, %v823
      %826 = vrot.lane.b32.xlu0 %v825, 112
      %v827 = vpop.permute.xlu0 %826
      %vm828 = vcmask 64512
      %v830 = vsel %vm828, %v820, 0
      %v833 = vsel %vm828, %v827, 0
      %835 = vmatpush.bf16.xpose.msra.mxu0 0
      %836 = vmatpush.bf16.xpose.msra.mxu0 0
      %837 = vmatpush.bf16.xpose.msra.mxu0 0
      %838 = vmatpush.bf16.xpose.msra.mxu0 0
      %839 = vmatpush.bf16.xpose.msra.mxu0 0
      %840 = vmatpush.bf16.xpose.msra.mxu0 0
      %841 = vmatpush.bf16.xpose.msra.mxu0 0
      %842 = vmatpush.bf16.xpose.msra.mxu0 %v833
      %843 = vmatmul.bf16.gmra.mxu0 %v830
      %v844 = vpop.f32.mrf.mxu0
      %v845 = vadd.f32 %v788, %v844
      %v846 = vpop.f32.mrf.mxu0
      %v847 = vadd.f32 %v789, %v846
      %848 = vdwg.mxu0
      %v851 = vunpack.c.l.b16 %v802
      %v852 = vunpack.c.l.b16 %v803
      %v853 = vpack.c.b16 %v852, %v851
      %v856 = vunpack.c.l.b16 %v810
      %v857 = vunpack.c.l.b16 %v811
      %v858 = vpack.c.b16 %v857, %v856
      %859 = vrot.lane.b32.xlu0 %v858, 112
      %v860 = vpop.permute.xlu0 %859
      %v862 = vsel %vm828, %v853, 0
      %v865 = vsel %vm828, %v860, 0
      %867 = vmatpush.bf16.xpose.msra.mxu0 0
      %868 = vmatpush.bf16.xpose.msra.mxu0 0
      %869 = vmatpush.bf16.xpose.msra.mxu0 0
      %870 = vmatpush.bf16.xpose.msra.mxu0 0
      %871 = vmatpush.bf16.xpose.msra.mxu0 0
      %872 = vmatpush.bf16.xpose.msra.mxu0 0
      %873 = vmatpush.bf16.xpose.msra.mxu0 0
      %874 = vmatpush.bf16.xpose.msra.mxu0 %v865
      %875 = vmatmul.bf16.gmra.mxu0 %v862
      %v876 = vpop.f32.mrf.mxu0
      %v877 = vadd.f32 %v788, %v876
      %v878 = vpop.f32.mrf.mxu0
      %v879 = vadd.f32 %v789, %v878
      %880 = vdwg.mxu0
      %v883 = vunpack.c.l.b16 %v804
      %v884 = vunpack.c.l.b16 %v805
      %v885 = vpack.c.b16 %v884, %v883
      %v888 = vunpack.c.l.b16 %v812
      %v889 = vunpack.c.l.b16 %v813
      %v890 = vpack.c.b16 %v889, %v888
      %891 = vrot.lane.b32.xlu0 %v890, 112
      %v892 = vpop.permute.xlu0 %891
      %v894 = vsel %vm828, %v885, 0
      %v897 = vsel %vm828, %v892, 0
      %899 = vmatpush.bf16.xpose.msra.mxu0 0
      %900 = vmatpush.bf16.xpose.msra.mxu0 0
      %901 = vmatpush.bf16.xpose.msra.mxu0 0
      %902 = vmatpush.bf16.xpose.msra.mxu0 0
      %903 = vmatpush.bf16.xpose.msra.mxu0 0
      %904 = vmatpush.bf16.xpose.msra.mxu0 0
      %905 = vmatpush.bf16.xpose.msra.mxu0 0
      %906 = vmatpush.bf16.xpose.msra.mxu0 %v897
      %907 = vmatmul.bf16.gmra.mxu0 %v894
      %v908 = vpop.f32.mrf.mxu0
      %v909 = vadd.f32 %v788, %v908
      %v910 = vpop.f32.mrf.mxu0
      %v911 = vadd.f32 %v789, %v910
      %912 = vdwg.mxu0
      %v915 = vunpack.c.l.b16 %v806
      %v916 = vunpack.c.l.b16 %v807
      %v917 = vpack.c.b16 %v916, %v915
      %v920 = vunpack.c.l.b16 %v814
      %v921 = vunpack.c.l.b16 %v815
      %v922 = vpack.c.b16 %v921, %v920
      %923 = vrot.lane.b32.xlu0 %v922, 112
      %v924 = vpop.permute.xlu0 %923
      %v926 = vsel %vm828, %v917, 0
      %v929 = vsel %vm828, %v924, 0
      %931 = vmatpush.bf16.xpose.msra.mxu0 0
      %932 = vmatpush.bf16.xpose.msra.mxu0 0
      %933 = vmatpush.bf16.xpose.msra.mxu0 0
      %934 = vmatpush.bf16.xpose.msra.mxu0 0
      %935 = vmatpush.bf16.xpose.msra.mxu0 0
      %936 = vmatpush.bf16.xpose.msra.mxu0 0
      %937 = vmatpush.bf16.xpose.msra.mxu0 0
      %938 = vmatpush.bf16.xpose.msra.mxu0 %v929
      %939 = vmatmul.bf16.gmra.mxu0 %v926
      %v940 = vpop.f32.mrf.mxu0
      %v941 = vadd.f32 %v788, %v940
      %v942 = vpop.f32.mrf.mxu0
      %v943 = vadd.f32 %v789, %v942
      %944 = vdwg.mxu0
      %v945 = vadd.f32 %v845, %v499
      %v946 = vadd.f32 %v847, %v500
      %v947 = vadd.f32 %v877, %v501
      %v948 = vadd.f32 %v879, %v502
      %v949 = vadd.f32 %v909, %v503
      %v950 = vadd.f32 %v911, %v504
      %v951 = vadd.f32 %v941, %v505
      %v952 = vadd.f32 %v943, %v506
      %v953 = vsel %vm525, %v945, -inf
      %954 = vmax.xlane.f32.xlu0 %v953
      %v955 = vpop.xlane.xlu0 %954
      %v956 = vsel %vm525, %v946, -inf
      %957 = vmax.xlane.f32.xlu0 %v956
      %v958 = vpop.xlane.xlu0 %957
      %v959 = vsel %vm525, %v947, -inf
      %960 = vmax.xlane.f32.xlu0 %v959
      %v961 = vpop.xlane.xlu0 %960
      %v962 = vsel %vm525, %v948, -inf
      %963 = vmax.xlane.f32.xlu0 %v962
      %v964 = vpop.xlane.xlu0 %963
      %v965 = vsel %vm525, %v949, -inf
      %966 = vmax.xlane.f32.xlu0 %v965
      %v967 = vpop.xlane.xlu0 %966
      %v968 = vsel %vm525, %v950, -inf
      %969 = vmax.xlane.f32.xlu0 %v968
      %v970 = vpop.xlane.xlu0 %969
      %v971 = vsel %vm525, %v951, -inf
      %972 = vmax.xlane.f32.xlu0 %v971
      %v973 = vpop.xlane.xlu0 %972
      %v974 = vsel %vm525, %v952, -inf
      %975 = vmax.xlane.f32.xlu0 %v974
      %v976 = vpop.xlane.xlu0 %975
      %v977 = vsub.f32 %v945, %v955
      %v978 = vsub.f32 %v946, %v958
      %v979 = vsub.f32 %v947, %v961
      %v980 = vsub.f32 %v948, %v964
      %v981 = vsub.f32 %v949, %v967
      %v982 = vsub.f32 %v950, %v970
      %v983 = vsub.f32 %v951, %v973
      %v984 = vsub.f32 %v952, %v976
      %v985 = vmul.f32 %v977, 1.442695
      %v986 = vpow.pop %v985
      %v987 = vmul.f32 %v978, 1.442695
      %v988 = vpow.pop %v987
      %v989 = vmul.f32 %v979, 1.442695
      %v990 = vpow.pop %v989
      %v991 = vmul.f32 %v980, 1.442695
      %v992 = vpow.pop %v991
      %v993 = vmul.f32 %v981, 1.442695
      %v994 = vpow.pop %v993
      %v995 = vmul.f32 %v982, 1.442695
      %v996 = vpow.pop %v995
      %v997 = vmul.f32 %v983, 1.442695
      %v998 = vpow.pop %v997
      %v999 = vmul.f32 %v984, 1.442695
      %v1000 = vpow.pop %v999
      %v1001 = vsel %vm525, %v986, 0.0
      %1002 = vadd.xlane.f32.xlu0 %v1001
      %v1003 = vpop.xlane.xlu0 %1002
      %v1004 = vsel %vm525, %v988, 0.0
      %1005 = vadd.xlane.f32.xlu0 %v1004
      %v1006 = vpop.xlane.xlu0 %1005
      %v1007 = vsel %vm525, %v990, 0.0
      %1008 = vadd.xlane.f32.xlu0 %v1007
      %v1009 = vpop.xlane.xlu0 %1008
      %v1010 = vsel %vm525, %v992, 0.0
      %1011 = vadd.xlane.f32.xlu0 %v1010
      %v1012 = vpop.xlane.xlu0 %1011
      %v1013 = vsel %vm525, %v994, 0.0
      %1014 = vadd.xlane.f32.xlu0 %v1013
      %v1015 = vpop.xlane.xlu0 %1014
      %v1016 = vsel %vm525, %v996, 0.0
      %1017 = vadd.xlane.f32.xlu0 %v1016
      %v1018 = vpop.xlane.xlu0 %1017
      %v1019 = vsel %vm525, %v998, 0.0
      %1020 = vadd.xlane.f32.xlu0 %v1019
      %v1021 = vpop.xlane.xlu0 %1020
      %v1022 = vsel %vm525, %v1000, 0.0
      %1023 = vadd.xlane.f32.xlu0 %v1022
      %v1024 = vpop.xlane.xlu0 %1023
      %v1025 = vrcp.pop %v1003
      %v1026 = vrcp.pop %v1006
      %v1027 = vrcp.pop %v1009
      %v1028 = vrcp.pop %v1012
      %v1029 = vrcp.pop %v1015
      %v1030 = vrcp.pop %v1018
      %v1031 = vrcp.pop %v1021
      %v1032 = vrcp.pop %v1024
      %v1033 = vmul.f32 %v986, %v1025
      %v1034 = vmul.f32 %v988, %v1026
      %v1035 = vmul.f32 %v990, %v1027
      %v1036 = vmul.f32 %v992, %v1028
      %v1037 = vmul.f32 %v994, %v1029
      %v1038 = vmul.f32 %v996, %v1030
      %v1039 = vmul.f32 %v998, %v1031
      %v1040 = vmul.f32 %v1000, %v1032
      %v1041 = vpack.c.bf16 %v1033, %v1033
      %v1042 = vpack.c.bf16 %v1034, %v1034
      %v1043 = vpack.c.bf16 %v1035, %v1035
      %v1044 = vpack.c.bf16 %v1036, %v1036
      %v1045 = vpack.c.bf16 %v1037, %v1037
      %v1046 = vpack.c.bf16 %v1038, %v1038
      %v1047 = vpack.c.bf16 %v1039, %v1039
      %v1048 = vpack.c.bf16 %v1040, %v1040
      %v1051 = vunpack.c.l.b16 %v1041
      %v1052 = vunpack.c.l.b16 %v1042
      %v1053 = vpack.c.b16 %v1052, %v1051
      %1054 = vrot.lane.b32.xlu0 %v825, 96
      %v1055 = vpop.permute.xlu0 %1054
      %v1058 = vsel %vm525, %v1053, 0
      %1060 = vmatpush.bf16.msra.mxu0 0
      %1061 = vmatpush.bf16.msra.mxu0 0
      %1062 = vmatpush.bf16.msra.mxu0 0
      %1063 = vmatpush.bf16.msra.mxu0 0
      %1064 = vmatpush.bf16.msra.mxu0 0
      %1065 = vmatpush.bf16.msra.mxu0 0
      %1066 = vmatpush.bf16.msra.mxu0 0
      %1067 = vmatpush.bf16.msra.mxu0 %v1055
      %1068 = vmatmul.bf16.gmra.mxu0 %v1058
      %v1069 = vpop.f32.mrf.mxu0
      %v1070 = vadd.f32 0.0, %v1069
      %v1071 = vpop.f32.mrf.mxu0
      %v1072 = vadd.f32 0.0, %v1071
      %1073 = vdwg.mxu0
      %v1076 = vunpack.c.l.b16 %v1043
      %v1077 = vunpack.c.l.b16 %v1044
      %v1078 = vpack.c.b16 %v1077, %v1076
      %1079 = vrot.lane.b32.xlu0 %v858, 96
      %v1080 = vpop.permute.xlu0 %1079
      %v1083 = vsel %vm525, %v1078, 0
      %1085 = vmatpush.bf16.msra.mxu0 0
      %1086 = vmatpush.bf16.msra.mxu0 0
      %1087 = vmatpush.bf16.msra.mxu0 0
      %1088 = vmatpush.bf16.msra.mxu0 0
      %1089 = vmatpush.bf16.msra.mxu0 0
      %1090 = vmatpush.bf16.msra.mxu0 0
      %1091 = vmatpush.bf16.msra.mxu0 0
      %1092 = vmatpush.bf16.msra.mxu0 %v1080
      %1093 = vmatmul.bf16.gmra.mxu0 %v1083
      %v1094 = vpop.f32.mrf.mxu0
      %v1095 = vadd.f32 0.0, %v1094
      %v1096 = vpop.f32.mrf.mxu0
      %v1097 = vadd.f32 0.0, %v1096
      %1098 = vdwg.mxu0
      %v1101 = vunpack.c.l.b16 %v1045
      %v1102 = vunpack.c.l.b16 %v1046
      %v1103 = vpack.c.b16 %v1102, %v1101
      %1104 = vrot.lane.b32.xlu0 %v890, 96
      %v1105 = vpop.permute.xlu0 %1104
      %v1108 = vsel %vm525, %v1103, 0
      %1110 = vmatpush.bf16.msra.mxu0 0
      %1111 = vmatpush.bf16.msra.mxu0 0
      %1112 = vmatpush.bf16.msra.mxu0 0
      %1113 = vmatpush.bf16.msra.mxu0 0
      %1114 = vmatpush.bf16.msra.mxu0 0
      %1115 = vmatpush.bf16.msra.mxu0 0
      %1116 = vmatpush.bf16.msra.mxu0 0
      %1117 = vmatpush.bf16.msra.mxu0 %v1105
      %1118 = vmatmul.bf16.gmra.mxu0 %v1108
      %v1119 = vpop.f32.mrf.mxu0
      %v1120 = vadd.f32 0.0, %v1119
      %v1121 = vpop.f32.mrf.mxu0
      %v1122 = vadd.f32 0.0, %v1121
      %1123 = vdwg.mxu0
      %v1126 = vunpack.c.l.b16 %v1047
      %v1127 = vunpack.c.l.b16 %v1048
      %v1128 = vpack.c.b16 %v1127, %v1126
      %1129 = vrot.lane.b32.xlu0 %v922, 96
      %v1130 = vpop.permute.xlu0 %1129
      %v1133 = vsel %vm525, %v1128, 0
      %1135 = vmatpush.bf16.msra.mxu0 0
      %1136 = vmatpush.bf16.msra.mxu0 0
      %1137 = vmatpush.bf16.msra.mxu0 0
      %1138 = vmatpush.bf16.msra.mxu0 0
      %1139 = vmatpush.bf16.msra.mxu0 0
      %1140 = vmatpush.bf16.msra.mxu0 0
      %1141 = vmatpush.bf16.msra.mxu0 0
      %1142 = vmatpush.bf16.msra.mxu0 %v1130
      %1143 = vmatmul.bf16.gmra.mxu0 %v1133
      %v1144 = vpop.f32.mrf.mxu0
      %v1145 = vadd.f32 0.0, %v1144
      %v1146 = vpop.f32.mrf.mxu0
      %v1147 = vadd.f32 0.0, %v1146
      %1148 = vdwg.mxu0
      %1149 = vrot.lane.b32.xlu0 %v820, 120
      %v1150 = vpop.permute.xlu0 %1149
      %1151 = vrot.lane.b32.xlu0 %v825, 104
      %v1152 = vpop.permute.xlu0 %1151
      %v1154 = vsel %vm828, %v1150, 0
      %v1157 = vsel %vm828, %v1152, 0
      %1159 = vmatpush.bf16.xpose.msra.mxu0 0
      %1160 = vmatpush.bf16.xpose.msra.mxu0 0
      %1161 = vmatpush.bf16.xpose.msra.mxu0 0
      %1162 = vmatpush.bf16.xpose.msra.mxu0 0
      %1163 = vmatpush.bf16.xpose.msra.mxu0 0
      %1164 = vmatpush.bf16.xpose.msra.mxu0 0
      %1165 = vmatpush.bf16.xpose.msra.mxu0 0
      %1166 = vmatpush.bf16.xpose.msra.mxu0 %v1157
      %1167 = vmatmul.bf16.gmra.mxu0 %v1154
      %v1168 = vpop.f32.mrf.mxu0
      %v1169 = vadd.f32 %v790, %v1168
      %v1170 = vpop.f32.mrf.mxu0
      %v1171 = vadd.f32 %v791, %v1170
      %1172 = vdwg.mxu0
      %1173 = vrot.lane.b32.xlu0 %v853, 120
      %v1174 = vpop.permute.xlu0 %1173
      %1175 = vrot.lane.b32.xlu0 %v858, 104
      %v1176 = vpop.permute.xlu0 %1175
      %v1178 = vsel %vm828, %v1174, 0
      %v1181 = vsel %vm828, %v1176, 0
      %1183 = vmatpush.bf16.xpose.msra.mxu0 0
      %1184 = vmatpush.bf16.xpose.msra.mxu0 0
      %1185 = vmatpush.bf16.xpose.msra.mxu0 0
      %1186 = vmatpush.bf16.xpose.msra.mxu0 0
      %1187 = vmatpush.bf16.xpose.msra.mxu0 0
      %1188 = vmatpush.bf16.xpose.msra.mxu0 0
      %1189 = vmatpush.bf16.xpose.msra.mxu0 0
      %1190 = vmatpush.bf16.xpose.msra.mxu0 %v1181
      %1191 = vmatmul.bf16.gmra.mxu0 %v1178
      %v1192 = vpop.f32.mrf.mxu0
      %v1193 = vadd.f32 %v790, %v1192
      %v1194 = vpop.f32.mrf.mxu0
      %v1195 = vadd.f32 %v791, %v1194
      %1196 = vdwg.mxu0
      %1197 = vrot.lane.b32.xlu0 %v885, 120
      %v1198 = vpop.permute.xlu0 %1197
      %1199 = vrot.lane.b32.xlu0 %v890, 104
      %v1200 = vpop.permute.xlu0 %1199
      %v1202 = vsel %vm828, %v1198, 0
      %v1205 = vsel %vm828, %v1200, 0
      %1207 = vmatpush.bf16.xpose.msra.mxu0 0
      %1208 = vmatpush.bf16.xpose.msra.mxu0 0
      %1209 = vmatpush.bf16.xpose.msra.mxu0 0
      %1210 = vmatpush.bf16.xpose.msra.mxu0 0
      %1211 = vmatpush.bf16.xpose.msra.mxu0 0
      %1212 = vmatpush.bf16.xpose.msra.mxu0 0
      %1213 = vmatpush.bf16.xpose.msra.mxu0 0
      %1214 = vmatpush.bf16.xpose.msra.mxu0 %v1205
      %1215 = vmatmul.bf16.gmra.mxu0 %v1202
      %v1216 = vpop.f32.mrf.mxu0
      %v1217 = vadd.f32 %v790, %v1216
      %v1218 = vpop.f32.mrf.mxu0
      %v1219 = vadd.f32 %v791, %v1218
      %1220 = vdwg.mxu0
      %1221 = vrot.lane.b32.xlu0 %v917, 120
      %v1222 = vpop.permute.xlu0 %1221
      %1223 = vrot.lane.b32.xlu0 %v922, 104
      %v1224 = vpop.permute.xlu0 %1223
      %v1226 = vsel %vm828, %v1222, 0
      %v1229 = vsel %vm828, %v1224, 0
      %1231 = vmatpush.bf16.xpose.msra.mxu0 0
      %1232 = vmatpush.bf16.xpose.msra.mxu0 0
      %1233 = vmatpush.bf16.xpose.msra.mxu0 0
      %1234 = vmatpush.bf16.xpose.msra.mxu0 0
      %1235 = vmatpush.bf16.xpose.msra.mxu0 0
      %1236 = vmatpush.bf16.xpose.msra.mxu0 0
      %1237 = vmatpush.bf16.xpose.msra.mxu0 0
      %1238 = vmatpush.bf16.xpose.msra.mxu0 %v1229
      %1239 = vmatmul.bf16.gmra.mxu0 %v1226
      %v1240 = vpop.f32.mrf.mxu0
      %v1241 = vadd.f32 %v790, %v1240
      %v1242 = vpop.f32.mrf.mxu0
      %v1243 = vadd.f32 %v791, %v1242
      %1244 = vdwg.mxu0
      %v1245 = vadd.f32 %v1169, %v499
      %v1246 = vadd.f32 %v1171, %v500
      %v1247 = vadd.f32 %v1193, %v501
      %v1248 = vadd.f32 %v1195, %v502
      %v1249 = vadd.f32 %v1217, %v503
      %v1250 = vadd.f32 %v1219, %v504
      %v1251 = vadd.f32 %v1241, %v505
      %v1252 = vadd.f32 %v1243, %v506
      %v1253 = vsel %vm525, %v1245, -inf
      %1254 = vmax.xlane.f32.xlu0 %v1253
      %v1255 = vpop.xlane.xlu0 %1254
      %v1256 = vsel %vm525, %v1246, -inf
      %1257 = vmax.xlane.f32.xlu0 %v1256
      %v1258 = vpop.xlane.xlu0 %1257
      %v1259 = vsel %vm525, %v1247, -inf
      %1260 = vmax.xlane.f32.xlu0 %v1259
      %v1261 = vpop.xlane.xlu0 %1260
      %v1262 = vsel %vm525, %v1248, -inf
      %1263 = vmax.xlane.f32.xlu0 %v1262
      %v1264 = vpop.xlane.xlu0 %1263
      %v1265 = vsel %vm525, %v1249, -inf
      %1266 = vmax.xlane.f32.xlu0 %v1265
      %v1267 = vpop.xlane.xlu0 %1266
      %v1268 = vsel %vm525, %v1250, -inf
      %1269 = vmax.xlane.f32.xlu0 %v1268
      %v1270 = vpop.xlane.xlu0 %1269
      %v1271 = vsel %vm525, %v1251, -inf
      %1272 = vmax.xlane.f32.xlu0 %v1271
      %v1273 = vpop.xlane.xlu0 %1272
      %v1274 = vsel %vm525, %v1252, -inf
      %1275 = vmax.xlane.f32.xlu0 %v1274
      %v1276 = vpop.xlane.xlu0 %1275
      %v1277 = vsub.f32 %v1245, %v1255
      %v1278 = vsub.f32 %v1246, %v1258
      %v1279 = vsub.f32 %v1247, %v1261
      %v1280 = vsub.f32 %v1248, %v1264
      %v1281 = vsub.f32 %v1249, %v1267
      %v1282 = vsub.f32 %v1250, %v1270
      %v1283 = vsub.f32 %v1251, %v1273
      %v1284 = vsub.f32 %v1252, %v1276
      %v1285 = vmul.f32 %v1277, 1.442695
      %v1286 = vpow.pop %v1285
      %v1287 = vmul.f32 %v1278, 1.442695
      %v1288 = vpow.pop %v1287
      %v1289 = vmul.f32 %v1279, 1.442695
      %v1290 = vpow.pop %v1289
      %v1291 = vmul.f32 %v1280, 1.442695
      %v1292 = vpow.pop %v1291
      %v1293 = vmul.f32 %v1281, 1.442695
      %v1294 = vpow.pop %v1293
      %v1295 = vmul.f32 %v1282, 1.442695
      %v1296 = vpow.pop %v1295
      %v1297 = vmul.f32 %v1283, 1.442695
      %v1298 = vpow.pop %v1297
      %v1299 = vmul.f32 %v1284, 1.442695
      %v1300 = vpow.pop %v1299
      %v1301 = vsel %vm525, %v1286, 0.0
      %1302 = vadd.xlane.f32.xlu0 %v1301
      %v1303 = vpop.xlane.xlu0 %1302
      %v1304 = vsel %vm525, %v1288, 0.0
      %1305 = vadd.xlane.f32.xlu0 %v1304
      %v1306 = vpop.xlane.xlu0 %1305
      %v1307 = vsel %vm525, %v1290, 0.0
      %1308 = vadd.xlane.f32.xlu0 %v1307
      %v1309 = vpop.xlane.xlu0 %1308
      %v1310 = vsel %vm525, %v1292, 0.0
      %1311 = vadd.xlane.f32.xlu0 %v1310
      %v1312 = vpop.xlane.xlu0 %1311
      %v1313 = vsel %vm525, %v1294, 0.0
      %1314 = vadd.xlane.f32.xlu0 %v1313
      %v1315 = vpop.xlane.xlu0 %1314
      %v1316 = vsel %vm525, %v1296, 0.0
      %1317 = vadd.xlane.f32.xlu0 %v1316
      %v1318 = vpop.xlane.xlu0 %1317
      %v1319 = vsel %vm525, %v1298, 0.0
      %1320 = vadd.xlane.f32.xlu0 %v1319
      %v1321 = vpop.xlane.xlu0 %1320
      %v1322 = vsel %vm525, %v1300, 0.0
      %1323 = vadd.xlane.f32.xlu0 %v1322
      %v1324 = vpop.xlane.xlu0 %1323
      %v1325 = vrcp.pop %v1303
      %v1326 = vrcp.pop %v1306
      %v1327 = vrcp.pop %v1309
      %v1328 = vrcp.pop %v1312
      %v1329 = vrcp.pop %v1315
      %v1330 = vrcp.pop %v1318
      %v1331 = vrcp.pop %v1321
      %v1332 = vrcp.pop %v1324
      %v1333 = vmul.f32 %v1286, %v1325
      %v1334 = vmul.f32 %v1288, %v1326
      %v1335 = vmul.f32 %v1290, %v1327
      %v1336 = vmul.f32 %v1292, %v1328
      %v1337 = vmul.f32 %v1294, %v1329
      %v1338 = vmul.f32 %v1296, %v1330
      %v1339 = vmul.f32 %v1298, %v1331
      %v1340 = vmul.f32 %v1300, %v1332
      %v1341 = vpack.c.bf16 %v1333, %v1333
      %v1342 = vpack.c.bf16 %v1334, %v1334
      %v1343 = vpack.c.bf16 %v1335, %v1335
      %v1344 = vpack.c.bf16 %v1336, %v1336
      %v1345 = vpack.c.bf16 %v1337, %v1337
      %v1346 = vpack.c.bf16 %v1338, %v1338
      %v1347 = vpack.c.bf16 %v1339, %v1339
      %v1348 = vpack.c.bf16 %v1340, %v1340
      %v1351 = vunpack.c.l.b16 %v1341
      %v1352 = vunpack.c.l.b16 %v1342
      %v1353 = vpack.c.b16 %v1352, %v1351
      %1354 = vrot.lane.b32.xlu0 %v825, 88
      %v1355 = vpop.permute.xlu0 %1354
      %v1358 = vsel %vm525, %v1353, 0
      %1360 = vmatpush.bf16.msra.mxu0 0
      %1361 = vmatpush.bf16.msra.mxu0 0
      %1362 = vmatpush.bf16.msra.mxu0 0
      %1363 = vmatpush.bf16.msra.mxu0 0
      %1364 = vmatpush.bf16.msra.mxu0 0
      %1365 = vmatpush.bf16.msra.mxu0 0
      %1366 = vmatpush.bf16.msra.mxu0 0
      %1367 = vmatpush.bf16.msra.mxu0 %v1355
      %1368 = vmatmul.bf16.gmra.mxu0 %v1358
      %v1369 = vpop.f32.mrf.mxu0
      %v1370 = vadd.f32 0.0, %v1369
      %v1371 = vpop.f32.mrf.mxu0
      %v1372 = vadd.f32 0.0, %v1371
      %1373 = vdwg.mxu0
      %v1376 = vunpack.c.l.b16 %v1343
      %v1377 = vunpack.c.l.b16 %v1344
      %v1378 = vpack.c.b16 %v1377, %v1376
      %1379 = vrot.lane.b32.xlu0 %v858, 88
      %v1380 = vpop.permute.xlu0 %1379
      %v1383 = vsel %vm525, %v1378, 0
      %1385 = vmatpush.bf16.msra.mxu0 0
      %1386 = vmatpush.bf16.msra.mxu0 0
      %1387 = vmatpush.bf16.msra.mxu0 0
      %1388 = vmatpush.bf16.msra.mxu0 0
      %1389 = vmatpush.bf16.msra.mxu0 0
      %1390 = vmatpush.bf16.msra.mxu0 0
      %1391 = vmatpush.bf16.msra.mxu0 0
      %1392 = vmatpush.bf16.msra.mxu0 %v1380
      %1393 = vmatmul.bf16.gmra.mxu0 %v1383
      %v1394 = vpop.f32.mrf.mxu0
      %v1395 = vadd.f32 0.0, %v1394
      %v1396 = vpop.f32.mrf.mxu0
      %v1397 = vadd.f32 0.0, %v1396
      %1398 = vdwg.mxu0
      %v1401 = vunpack.c.l.b16 %v1345
      %v1402 = vunpack.c.l.b16 %v1346
      %v1403 = vpack.c.b16 %v1402, %v1401
      %1404 = vrot.lane.b32.xlu0 %v890, 88
      %v1405 = vpop.permute.xlu0 %1404
      %v1408 = vsel %vm525, %v1403, 0
      %1410 = vmatpush.bf16.msra.mxu0 0
      %1411 = vmatpush.bf16.msra.mxu0 0
      %1412 = vmatpush.bf16.msra.mxu0 0
      %1413 = vmatpush.bf16.msra.mxu0 0
      %1414 = vmatpush.bf16.msra.mxu0 0
      %1415 = vmatpush.bf16.msra.mxu0 0
      %1416 = vmatpush.bf16.msra.mxu0 0
      %1417 = vmatpush.bf16.msra.mxu0 %v1405
      %1418 = vmatmul.bf16.gmra.mxu0 %v1408
      %v1419 = vpop.f32.mrf.mxu0
      %v1420 = vadd.f32 0.0, %v1419
      %v1421 = vpop.f32.mrf.mxu0
      %v1422 = vadd.f32 0.0, %v1421
      %1423 = vdwg.mxu0
      %v1426 = vunpack.c.l.b16 %v1347
      %v1427 = vunpack.c.l.b16 %v1348
      %v1428 = vpack.c.b16 %v1427, %v1426
      %1429 = vrot.lane.b32.xlu0 %v922, 88
      %v1430 = vpop.permute.xlu0 %1429
      %v1433 = vsel %vm525, %v1428, 0
      %1435 = vmatpush.bf16.msra.mxu0 0
      %1436 = vmatpush.bf16.msra.mxu0 0
      %1437 = vmatpush.bf16.msra.mxu0 0
      %1438 = vmatpush.bf16.msra.mxu0 0
      %1439 = vmatpush.bf16.msra.mxu0 0
      %1440 = vmatpush.bf16.msra.mxu0 0
      %1441 = vmatpush.bf16.msra.mxu0 0
      %1442 = vmatpush.bf16.msra.mxu0 %v1430
      %1443 = vmatmul.bf16.gmra.mxu0 %v1433
      %v1444 = vpop.f32.mrf.mxu0
      %v1445 = vadd.f32 0.0, %v1444
      %v1446 = vpop.f32.mrf.mxu0
      %v1447 = vadd.f32 0.0, %v1446
      %1448 = vdwg.mxu0
      %1457 = vrot.lane.b32.xlu0 %v1370, 8
      %v1458 = vpop.permute.xlu0 %1457
      %1459 = vrot.lane.b32.xlu0 %v1372, 8
      %v1460 = vpop.permute.xlu0 %1459
      %1461 = vrot.lane.b32.xlu0 %v1395, 8
      %v1462 = vpop.permute.xlu0 %1461
      %1463 = vrot.lane.b32.xlu0 %v1397, 8
      %v1464 = vpop.permute.xlu0 %1463
      %1465 = vrot.lane.b32.xlu0 %v1420, 8
      %v1466 = vpop.permute.xlu0 %1465
      %1467 = vrot.lane.b32.xlu0 %v1422, 8
      %v1468 = vpop.permute.xlu0 %1467
      %1469 = vrot.lane.b32.xlu0 %v1445, 8
      %v1470 = vpop.permute.xlu0 %1469
      %1471 = vrot.lane.b32.xlu0 %v1447, 8
      %v1472 = vpop.permute.xlu0 %1471
      %v1481 = vsel %vm828, %v1070, %v1458
      %v1482 = vsel %vm828, %v1072, %v1460
      %v1483 = vsel %vm828, %v1095, %v1462
      %v1484 = vsel %vm828, %v1097, %v1464
      %v1485 = vsel %vm828, %v1120, %v1466
      %v1486 = vsel %vm828, %v1122, %v1468
      %v1487 = vsel %vm828, %v1145, %v1470
      %v1488 = vsel %vm828, %v1147, %v1472
      %v1489 = vpack.c.bf16 %v1482, %v1481
      %v1490 = vpack.c.bf16 %v1484, %v1483
      %v1491 = vpack.c.bf16 %v1486, %v1485
      %v1492 = vpack.c.bf16 %v1488, %v1487
      %v1493 = vld [vmem:[%s6] sm:$0xf]
      %v1494 = vld [vmem:[%s6 + $0x4] sm:$0xf]
      %v1495 = vld [vmem:[%s7] sm:$0x1]
      %v1497 = vperm.slane %v1495, 0
      %v1501 = vunpack.c.l.b16 %v1493
      %v1502 = vunpack.c.l.b16 %v1494
      %v1503 = vpack.c.b16 %v1502, %v1501
      %v1506 = vsel %vm525, %v1489, 0
      %v1509 = vsel %vm525, %v1490, 0
      %v1512 = vsel %vm525, %v1491, 0
      %v1515 = vsel %vm525, %v1492, 0
      %1517 = vmatpush.bf16.msra.mxu0 0
      %1518 = vmatpush.bf16.msra.mxu0 0
      %1519 = vmatpush.bf16.msra.mxu0 0
      %1520 = vmatpush.bf16.msra.mxu0 0
      %1521 = vmatpush.bf16.msra.mxu0 0
      %1522 = vmatpush.bf16.msra.mxu0 0
      %1523 = vmatpush.bf16.msra.mxu0 0
      %1524 = vmatpush.bf16.msra.mxu0 %v1503
      %1525 = vmatmul.bf16.gmra.mxu0 %v1506
      %v1526 = vpop.f32.mrf.mxu0
      %v1527 = vadd.f32 %v1497, %v1526
      %v1528 = vpop.f32.mrf.mxu0
      %v1529 = vadd.f32 %v1497, %v1528
      %1530 = vmatmul.bf16.gmra.mxu0 %v1509
      %v1531 = vpop.f32.mrf.mxu0
      %v1532 = vadd.f32 %v1497, %v1531
      %v1533 = vpop.f32.mrf.mxu0
      %v1534 = vadd.f32 %v1497, %v1533
      %1535 = vmatmul.bf16.gmra.mxu0 %v1512
      %v1536 = vpop.f32.mrf.mxu0
      %v1537 = vadd.f32 %v1497, %v1536
      %v1538 = vpop.f32.mrf.mxu0
      %v1539 = vadd.f32 %v1497, %v1538
      %1540 = vmatmul.bf16.gmra.mxu0 %v1515
      %v1541 = vpop.f32.mrf.mxu0
      %v1542 = vadd.f32 %v1497, %v1541
      %v1543 = vpop.f32.mrf.mxu0
      %v1544 = vadd.f32 %v1497, %v1543
      %1545 = vdwg.mxu0
      %v1546 = vadd.f32 %v515, %v1527
      %v1547 = vadd.f32 %v516, %v1529
      %v1548 = vadd.f32 %v517, %v1532
      %v1549 = vadd.f32 %v518, %v1534
      %v1550 = vadd.f32 %v519, %v1537
      %v1551 = vadd.f32 %v520, %v1539
      %v1552 = vadd.f32 %v521, %v1542
      %v1553 = vadd.f32 %v522, %v1544
      %v1554 = vld [vmem:[%s8] sm:$0x1]
      %v1555 = vld [vmem:[%s9] sm:$0x1]
      %v1556 = vsel %vm525, %v1546, 0.0
      %1557 = vadd.xlane.f32.xlu0 %v1556
      %v1558 = vpop.xlane.xlu0 %1557
      %v1559 = vsel %vm525, %v1547, 0.0
      %1560 = vadd.xlane.f32.xlu0 %v1559
      %v1561 = vpop.xlane.xlu0 %1560
      %v1562 = vsel %vm525, %v1548, 0.0
      %1563 = vadd.xlane.f32.xlu0 %v1562
      %v1564 = vpop.xlane.xlu0 %1563
      %v1565 = vsel %vm525, %v1549, 0.0
      %1566 = vadd.xlane.f32.xlu0 %v1565
      %v1567 = vpop.xlane.xlu0 %1566
      %v1568 = vsel %vm525, %v1550, 0.0
      %1569 = vadd.xlane.f32.xlu0 %v1568
      %v1570 = vpop.xlane.xlu0 %1569
      %v1571 = vsel %vm525, %v1551, 0.0
      %1572 = vadd.xlane.f32.xlu0 %v1571
      %v1573 = vpop.xlane.xlu0 %1572
      %v1574 = vsel %vm525, %v1552, 0.0
      %1575 = vadd.xlane.f32.xlu0 %v1574
      %v1576 = vpop.xlane.xlu0 %1575
      %v1577 = vsel %vm525, %v1553, 0.0
      %1578 = vadd.xlane.f32.xlu0 %v1577
      %v1579 = vpop.xlane.xlu0 %1578
      %v1580 = vmul.f32 %v1558, %v556
      %v1581 = vmul.f32 %v1561, %v556
      %v1582 = vmul.f32 %v1564, %v556
      %v1583 = vmul.f32 %v1567, %v556
      %v1584 = vmul.f32 %v1570, %v556
      %v1585 = vmul.f32 %v1573, %v556
      %v1586 = vmul.f32 %v1576, %v556
      %v1587 = vmul.f32 %v1579, %v556
      %v1588 = vsub.f32 %v1546, %v1580
      %v1589 = vsub.f32 %v1547, %v1581
      %v1590 = vsub.f32 %v1548, %v1582
      %v1591 = vsub.f32 %v1549, %v1583
      %v1592 = vsub.f32 %v1550, %v1584
      %v1593 = vsub.f32 %v1551, %v1585
      %v1594 = vsub.f32 %v1552, %v1586
      %v1595 = vsub.f32 %v1553, %v1587
      %v1596 = vmul.f32 %v1588, %v1588
      %v1597 = vmul.f32 %v1589, %v1589
      %v1598 = vmul.f32 %v1590, %v1590
      %v1599 = vmul.f32 %v1591, %v1591
      %v1600 = vmul.f32 %v1592, %v1592
      %v1601 = vmul.f32 %v1593, %v1593
      %v1602 = vmul.f32 %v1594, %v1594
      %v1603 = vmul.f32 %v1595, %v1595
      %v1604 = vsel %vm525, %v1596, 0.0
      %1605 = vadd.xlane.f32.xlu0 %v1604
      %v1606 = vpop.xlane.xlu0 %1605
      %v1607 = vsel %vm525, %v1597, 0.0
      %1608 = vadd.xlane.f32.xlu0 %v1607
      %v1609 = vpop.xlane.xlu0 %1608
      %v1610 = vsel %vm525, %v1598, 0.0
      %1611 = vadd.xlane.f32.xlu0 %v1610
      %v1612 = vpop.xlane.xlu0 %1611
      %v1613 = vsel %vm525, %v1599, 0.0
      %1614 = vadd.xlane.f32.xlu0 %v1613
      %v1615 = vpop.xlane.xlu0 %1614
      %v1616 = vsel %vm525, %v1600, 0.0
      %1617 = vadd.xlane.f32.xlu0 %v1616
      %v1618 = vpop.xlane.xlu0 %1617
      %v1619 = vsel %vm525, %v1601, 0.0
      %1620 = vadd.xlane.f32.xlu0 %v1619
      %v1621 = vpop.xlane.xlu0 %1620
      %v1622 = vsel %vm525, %v1602, 0.0
      %1623 = vadd.xlane.f32.xlu0 %v1622
      %v1624 = vpop.xlane.xlu0 %1623
      %v1625 = vsel %vm525, %v1603, 0.0
      %1626 = vadd.xlane.f32.xlu0 %v1625
      %v1627 = vpop.xlane.xlu0 %1626
      %v1628 = vmul.f32 %v1606, %v556
      %v1629 = vmul.f32 %v1609, %v556
      %v1630 = vmul.f32 %v1612, %v556
      %v1631 = vmul.f32 %v1615, %v556
      %v1632 = vmul.f32 %v1618, %v556
      %v1633 = vmul.f32 %v1621, %v556
      %v1634 = vmul.f32 %v1624, %v556
      %v1635 = vmul.f32 %v1627, %v556
      %v1636 = vadd.f32 %v1628, 1e-05
      %v1637 = vadd.f32 %v1629, 1e-05
      %v1638 = vadd.f32 %v1630, 1e-05
      %v1639 = vadd.f32 %v1631, 1e-05
      %v1640 = vadd.f32 %v1632, 1e-05
      %v1641 = vadd.f32 %v1633, 1e-05
      %v1642 = vadd.f32 %v1634, 1e-05
      %v1643 = vadd.f32 %v1635, 1e-05
      %v1644 = vrsqrt.pop %v1636
      %v1645 = vmul.f32 %v1644, %v1636
      %v1646 = vmul.f32 %v1645, %v1644
      %v1647 = vmul.f32 0.5, %v1646
      %v1648 = vsub.f32 1.5, %v1647
      %v1649 = vmul.f32 %v1644, %v1648
      %vm1650 = vweird.f32 %v1636
      %vm1651 = vweird.f32 %v1644
      %vm1652 = vmor %vm1650, %vm1651
      %v1653 = vsel %vm1652, %v1644, %v1649
      %v1654 = vrsqrt.pop %v1637
      %v1655 = vmul.f32 %v1654, %v1637
      %v1656 = vmul.f32 %v1655, %v1654
      %v1657 = vmul.f32 0.5, %v1656
      %v1658 = vsub.f32 1.5, %v1657
      %v1659 = vmul.f32 %v1654, %v1658
      %vm1660 = vweird.f32 %v1637
      %vm1661 = vweird.f32 %v1654
      %vm1662 = vmor %vm1660, %vm1661
      %v1663 = vsel %vm1662, %v1654, %v1659
      %v1664 = vrsqrt.pop %v1638
      %v1665 = vmul.f32 %v1664, %v1638
      %v1666 = vmul.f32 %v1665, %v1664
      %v1667 = vmul.f32 0.5, %v1666
      %v1668 = vsub.f32 1.5, %v1667
      %v1669 = vmul.f32 %v1664, %v1668
      %vm1670 = vweird.f32 %v1638
      %vm1671 = vweird.f32 %v1664
      %vm1672 = vmor %vm1670, %vm1671
      %v1673 = vsel %vm1672, %v1664, %v1669
      %v1674 = vrsqrt.pop %v1639
      %v1675 = vmul.f32 %v1674, %v1639
      %v1676 = vmul.f32 %v1675, %v1674
      %v1677 = vmul.f32 0.5, %v1676
      %v1678 = vsub.f32 1.5, %v1677
      %v1679 = vmul.f32 %v1674, %v1678
      %vm1680 = vweird.f32 %v1639
      %vm1681 = vweird.f32 %v1674
      %vm1682 = vmor %vm1680, %vm1681
      %v1683 = vsel %vm1682, %v1674, %v1679
      %v1684 = vrsqrt.pop %v1640
      %v1685 = vmul.f32 %v1684, %v1640
      %v1686 = vmul.f32 %v1685, %v1684
      %v1687 = vmul.f32 0.5, %v1686
      %v1688 = vsub.f32 1.5, %v1687
      %v1689 = vmul.f32 %v1684, %v1688
      %vm1690 = vweird.f32 %v1640
      %vm1691 = vweird.f32 %v1684
      %vm1692 = vmor %vm1690, %vm1691
      %v1693 = vsel %vm1692, %v1684, %v1689
      %v1694 = vrsqrt.pop %v1641
      %v1695 = vmul.f32 %v1694, %v1641
      %v1696 = vmul.f32 %v1695, %v1694
      %v1697 = vmul.f32 0.5, %v1696
      %v1698 = vsub.f32 1.5, %v1697
      %v1699 = vmul.f32 %v1694, %v1698
      %vm1700 = vweird.f32 %v1641
      %vm1701 = vweird.f32 %v1694
      %vm1702 = vmor %vm1700, %vm1701
      %v1703 = vsel %vm1702, %v1694, %v1699
      %v1704 = vrsqrt.pop %v1642
      %v1705 = vmul.f32 %v1704, %v1642
      %v1706 = vmul.f32 %v1705, %v1704
      %v1707 = vmul.f32 0.5, %v1706
      %v1708 = vsub.f32 1.5, %v1707
      %v1709 = vmul.f32 %v1704, %v1708
      %vm1710 = vweird.f32 %v1642
      %vm1711 = vweird.f32 %v1704
      %vm1712 = vmor %vm1710, %vm1711
      %v1713 = vsel %vm1712, %v1704, %v1709
      %v1714 = vrsqrt.pop %v1643
      %v1715 = vmul.f32 %v1714, %v1643
      %v1716 = vmul.f32 %v1715, %v1714
      %v1717 = vmul.f32 0.5, %v1716
      %v1718 = vsub.f32 1.5, %v1717
      %v1719 = vmul.f32 %v1714, %v1718
      %vm1720 = vweird.f32 %v1643
      %vm1721 = vweird.f32 %v1714
      %vm1722 = vmor %vm1720, %vm1721
      %v1723 = vsel %vm1722, %v1714, %v1719
      %v1724 = vmul.f32 %v1588, %v1653
      %v1725 = vmul.f32 %v1589, %v1663
      %v1726 = vmul.f32 %v1590, %v1673
      %v1727 = vmul.f32 %v1591, %v1683
      %v1728 = vmul.f32 %v1592, %v1693
      %v1729 = vmul.f32 %v1593, %v1703
      %v1730 = vmul.f32 %v1594, %v1713
      %v1731 = vmul.f32 %v1595, %v1723
      %v1733 = vperm.slane %v1554, 0
      %v1735 = vmul.f32 %v1724, %v1733
      %v1736 = vmul.f32 %v1725, %v1733
      %v1737 = vmul.f32 %v1726, %v1733
      %v1738 = vmul.f32 %v1727, %v1733
      %v1739 = vmul.f32 %v1728, %v1733
      %v1740 = vmul.f32 %v1729, %v1733
      %v1741 = vmul.f32 %v1730, %v1733
      %v1742 = vmul.f32 %v1731, %v1733
      %v1744 = vperm.slane %v1555, 0
      %v1746 = vadd.f32 %v1735, %v1744
      %v1747 = vadd.f32 %v1736, %v1744
      %v1748 = vadd.f32 %v1737, %v1744
      %v1749 = vadd.f32 %v1738, %v1744
      %v1750 = vadd.f32 %v1739, %v1744
      %v1751 = vadd.f32 %v1740, %v1744
      %v1752 = vadd.f32 %v1741, %v1744
      %v1753 = vadd.f32 %v1742, %v1744
      %v1754 = vpack.c.bf16 %v1747, %v1746
      %v1755 = vpack.c.bf16 %v1749, %v1748
      %v1756 = vpack.c.bf16 %v1751, %v1750
      %v1757 = vpack.c.bf16 %v1753, %v1752
      %v1758 = vld [vmem:[%s10] sm:$0xf]
      %v1759 = vld [vmem:[%s10 + $0x4] sm:$0xf]
      %v1760 = vld [vmem:[%s11] sm:$0x1]
      %v1762 = vperm.slane %v1760, 0
      %v1766 = vunpack.c.l.b16 %v1758
      %v1767 = vunpack.c.l.b16 %v1759
      %v1768 = vpack.c.b16 %v1767, %v1766
      %v1771 = vsel %vm525, %v1754, 0
      %v1774 = vsel %vm525, %v1755, 0
      %v1777 = vsel %vm525, %v1756, 0
      %v1780 = vsel %vm525, %v1757, 0
      %1782 = vmatpush.bf16.msra.mxu0 0
      %1783 = vmatpush.bf16.msra.mxu0 0
      %1784 = vmatpush.bf16.msra.mxu0 0
      %1785 = vmatpush.bf16.msra.mxu0 0
      %1786 = vmatpush.bf16.msra.mxu0 0
      %1787 = vmatpush.bf16.msra.mxu0 0
      %1788 = vmatpush.bf16.msra.mxu0 0
      %1789 = vmatpush.bf16.msra.mxu0 %v1768
      %1790 = vmatmul.bf16.gmra.mxu0 %v1771
      %v1791 = vpop.f32.mrf.mxu0
      %v1792 = vadd.f32 %v1762, %v1791
      %v1793 = vpop.f32.mrf.mxu0
      %v1794 = vadd.f32 %v1762, %v1793
      %1795 = vmatmul.bf16.gmra.mxu0 %v1774
      %v1796 = vpop.f32.mrf.mxu0
      %v1797 = vadd.f32 %v1762, %v1796
      %v1798 = vpop.f32.mrf.mxu0
      %v1799 = vadd.f32 %v1762, %v1798
      %1800 = vmatmul.bf16.gmra.mxu0 %v1777
      %v1801 = vpop.f32.mrf.mxu0
      %v1802 = vadd.f32 %v1762, %v1801
      %v1803 = vpop.f32.mrf.mxu0
      %v1804 = vadd.f32 %v1762, %v1803
      %1805 = vmatmul.bf16.gmra.mxu0 %v1780
      %v1806 = vpop.f32.mrf.mxu0
      %v1807 = vadd.f32 %v1762, %v1806
      %v1808 = vpop.f32.mrf.mxu0
      %v1809 = vadd.f32 %v1762, %v1808
      %1810 = vdwg.mxu0
      %v1811 = vmul.f32 %v1792, %v1792
      %v1812 = vmul.f32 %v1794, %v1794
      %v1813 = vmul.f32 %v1797, %v1797
      %v1814 = vmul.f32 %v1799, %v1799
      %v1815 = vmul.f32 %v1802, %v1802
      %v1816 = vmul.f32 %v1804, %v1804
      %v1817 = vmul.f32 %v1807, %v1807
      %v1818 = vmul.f32 %v1809, %v1809
      %v1819 = vmul.f32 %v1792, %v1811
      %v1820 = vmul.f32 %v1794, %v1812
      %v1821 = vmul.f32 %v1797, %v1813
      %v1822 = vmul.f32 %v1799, %v1814
      %v1823 = vmul.f32 %v1802, %v1815
      %v1824 = vmul.f32 %v1804, %v1816
      %v1825 = vmul.f32 %v1807, %v1817
      %v1826 = vmul.f32 %v1809, %v1818
      %v1827 = vmul.f32 %v1819, 0.044715
      %v1828 = vmul.f32 %v1820, 0.044715
      %v1829 = vmul.f32 %v1821, 0.044715
      %v1830 = vmul.f32 %v1822, 0.044715
      %v1831 = vmul.f32 %v1823, 0.044715
      %v1832 = vmul.f32 %v1824, 0.044715
      %v1833 = vmul.f32 %v1825, 0.044715
      %v1834 = vmul.f32 %v1826, 0.044715
      %v1835 = vadd.f32 %v1792, %v1827
      %v1836 = vadd.f32 %v1794, %v1828
      %v1837 = vadd.f32 %v1797, %v1829
      %v1838 = vadd.f32 %v1799, %v1830
      %v1839 = vadd.f32 %v1802, %v1831
      %v1840 = vadd.f32 %v1804, %v1832
      %v1841 = vadd.f32 %v1807, %v1833
      %v1842 = vadd.f32 %v1809, %v1834
      %v1843 = vmul.f32 %v1835, 0.7978846
      %v1844 = vmul.f32 %v1836, 0.7978846
      %v1845 = vmul.f32 %v1837, 0.7978846
      %v1846 = vmul.f32 %v1838, 0.7978846
      %v1847 = vmul.f32 %v1839, 0.7978846
      %v1848 = vmul.f32 %v1840, 0.7978846
      %v1849 = vmul.f32 %v1841, 0.7978846
      %v1850 = vmul.f32 %v1842, 0.7978846
      %v1851 = vtanh.pop %v1843
      %v1852 = vtanh.pop %v1844
      %v1853 = vtanh.pop %v1845
      %v1854 = vtanh.pop %v1846
      %v1855 = vtanh.pop %v1847
      %v1856 = vtanh.pop %v1848
      %v1857 = vtanh.pop %v1849
      %v1858 = vtanh.pop %v1850
      %v1859 = vadd.f32 %v1851, 1.0
      %v1860 = vadd.f32 %v1852, 1.0
      %v1861 = vadd.f32 %v1853, 1.0
      %v1862 = vadd.f32 %v1854, 1.0
      %v1863 = vadd.f32 %v1855, 1.0
      %v1864 = vadd.f32 %v1856, 1.0
      %v1865 = vadd.f32 %v1857, 1.0
      %v1866 = vadd.f32 %v1858, 1.0
      %v1867 = vmul.f32 %v1859, 0.5
      %v1868 = vmul.f32 %v1860, 0.5
      %v1869 = vmul.f32 %v1861, 0.5
      %v1870 = vmul.f32 %v1862, 0.5
      %v1871 = vmul.f32 %v1863, 0.5
      %v1872 = vmul.f32 %v1864, 0.5
      %v1873 = vmul.f32 %v1865, 0.5
      %v1874 = vmul.f32 %v1866, 0.5
      %v1875 = vmul.f32 %v1792, %v1867
      %v1876 = vmul.f32 %v1794, %v1868
      %v1877 = vmul.f32 %v1797, %v1869
      %v1878 = vmul.f32 %v1799, %v1870
      %v1879 = vmul.f32 %v1802, %v1871
      %v1880 = vmul.f32 %v1804, %v1872
      %v1881 = vmul.f32 %v1807, %v1873
      %v1882 = vmul.f32 %v1809, %v1874
      %v1883 = vpack.c.bf16 %v1876, %v1875
      %v1884 = vpack.c.bf16 %v1878, %v1877
      %v1885 = vpack.c.bf16 %v1880, %v1879
      %v1886 = vpack.c.bf16 %v1882, %v1881
      %v1887 = vld [vmem:[%s12] sm:$0xf]
      %v1888 = vld [vmem:[%s12 + $0x4] sm:$0xf]
      %v1889 = vld [vmem:[%s12 + $0x8] sm:$0xf]
      %v1890 = vld [vmem:[%s12 + $0xc] sm:$0xf]
      %v1891 = vld [vmem:[%s12 + $0x10] sm:$0xf]
      %v1892 = vld [vmem:[%s12 + $0x14] sm:$0xf]
      %v1893 = vld [vmem:[%s12 + $0x18] sm:$0xf]
      %v1894 = vld [vmem:[%s12 + $0x1c] sm:$0xf]
      %v1895 = vld [vmem:[%s13] sm:$0x1]
      %v1897 = vperm.slane %v1895, 0
      %v1907 = vunpack.c.l.b16 %v1887
      %v1908 = vunpack.c.l.b16 %v1888
      %v1909 = vunpack.c.l.b16 %v1889
      %v1910 = vunpack.c.l.b16 %v1890
      %v1911 = vunpack.c.l.b16 %v1891
      %v1912 = vunpack.c.l.b16 %v1892
      %v1913 = vunpack.c.l.b16 %v1893
      %v1914 = vunpack.c.l.b16 %v1894
      %v1915 = vpack.c.b16 %v1908, %v1907
      %v1916 = vpack.c.b16 %v1910, %v1909
      %v1917 = vpack.c.b16 %v1912, %v1911
      %v1918 = vpack.c.b16 %v1914, %v1913
      %vm1923 = vcmask 523264
      %v1925 = vsel %vm1923, %v1883, 0
      %v1928 = vsel %vm1923, %v1884, 0
      %v1931 = vsel %vm1923, %v1885, 0
      %v1934 = vsel %vm1923, %v1886, 0
      %1936 = vmatpush.bf16.msra.mxu0 0
      %1937 = vmatpush.bf16.msra.mxu0 0
      %1938 = vmatpush.bf16.msra.mxu0 0
      %1939 = vmatpush.bf16.msra.mxu0 0
      %1940 = vmatpush.bf16.msra.mxu0 %v1918
      %1941 = vmatpush.bf16.msra.mxu0 %v1917
      %1942 = vmatpush.bf16.msra.mxu0 %v1916
      %1943 = vmatpush.bf16.msra.mxu0 %v1915
      %1944 = vmatmul.bf16.gmra.mxu0 %v1925
      %v1945 = vpop.f32.mrf.mxu0
      %v1946 = vadd.f32 %v1897, %v1945
      %v1947 = vpop.f32.mrf.mxu0
      %v1948 = vadd.f32 %v1897, %v1947
      %1949 = vmatmul.bf16.gmra.mxu0 %v1928
      %v1950 = vpop.f32.mrf.mxu0
      %v1951 = vadd.f32 %v1897, %v1950
      %v1952 = vpop.f32.mrf.mxu0
      %v1953 = vadd.f32 %v1897, %v1952
      %1954 = vmatmul.bf16.gmra.mxu0 %v1931
      %v1955 = vpop.f32.mrf.mxu0
      %v1956 = vadd.f32 %v1897, %v1955
      %v1957 = vpop.f32.mrf.mxu0
      %v1958 = vadd.f32 %v1897, %v1957
      %1959 = vmatmul.bf16.gmra.mxu0 %v1934
      %v1960 = vpop.f32.mrf.mxu0
      %v1961 = vadd.f32 %v1897, %v1960
      %v1962 = vpop.f32.mrf.mxu0
      %v1963 = vadd.f32 %v1897, %v1962
      %1964 = vdwg.mxu0
      %v1965 = vadd.f32 %v1546, %v1946
      %v1966 = vadd.f32 %v1547, %v1948
      %v1967 = vadd.f32 %v1548, %v1951
      %v1968 = vadd.f32 %v1549, %v1953
      %v1969 = vadd.f32 %v1550, %v1956
      %v1970 = vadd.f32 %v1551, %v1958
      %v1971 = vadd.f32 %v1552, %v1961
      %v1972 = vadd.f32 %v1553, %v1963
      %v1973 = vpack.c.bf16 %v1965, %v1965
      %v1974 = vpack.c.bf16 %v1966, %v1966
      %v1975 = vpack.c.bf16 %v1967, %v1967
      %v1976 = vpack.c.bf16 %v1968, %v1968
      %v1977 = vpack.c.bf16 %v1969, %v1969
      %v1978 = vpack.c.bf16 %v1970, %v1970
      %v1979 = vpack.c.bf16 %v1971, %v1971
      %v1980 = vpack.c.bf16 %v1972, %v1972
      %vm1981 = vcmask 125952
      %1982 = vst.msk [vmem:[%s496] sm:$0xf] %vm1981, %v1973
      %1983 = vst.msk [vmem:[%s496 + $0x4] sm:$0xf] %vm1981, %v1974
      %1984 = vst.msk [vmem:[%s496 + $0x8] sm:$0xf] %vm1981, %v1975
      %1985 = vst.msk [vmem:[%s496 + $0xc] sm:$0xf] %vm1981, %v1976
      %1986 = vst.msk [vmem:[%s496 + $0x10] sm:$0xf] %vm1981, %v1977
      %1987 = vst.msk [vmem:[%s496 + $0x14] sm:$0xf] %vm1981, %v1978
      %1988 = vst.msk [vmem:[%s496 + $0x18] sm:$0xf] %vm1981, %v1979
      %1989 = vst.msk [vmem:[%s496 + $0x1c] sm:$0xf] %vm1981, %v1980
      %s1990 = smul.u32 8, %s26
      %p1991 = scmp.lt.s32.totalorder %s1990, 15
      %s1992 = scalar_select %p1991, %s1990, 15
      %s1993 = smul.addr %s1992, 4
      %s1994 = scalar_lea.vmem %s15, %s1993
      // Predicated region
      $region81: #{basic_block_up_forward.4} parent=79 // pred_check
        %p1995 = pneg %p364
      $region82: #{basic_block_up_forward.4} parent=79 // pred_check_branch
        %1997 = sbr.rel (%p1995) target = $region84
      $region83: #{basic_block_up_forward.4} parent=79 // pred_region
        %s1998 = smul.u32 8, %s26
      $region84: #{basic_block_up_forward.4} parent=79 // pred_fallthru
        _
    $region80: #{basic_block_up_forward.4} parent=5 // pred_fallthru
      _
    %p1999 = scmp.le.s32.totalorder 2, %s21
    // Predicated region
    $region85: #{basic_block_up_forward.4} parent=5 // pred_check
      %p2000 = pneg %p1999
    $region86: #{basic_block_up_forward.4} parent=5 // pred_check_branch
      %2002 = sbr.rel (%p2000) target = $region88
    $region87: #{basic_block_up_forward.4} parent=5 // pred_region
      %s2003 = ssub.s32 %s21, 2
      // Predicated region
      $region89: #{basic_block_up_forward.4} parent=87 // pred_check
        %p2004 = pneg %p370
      $region90: #{basic_block_up_forward.4} parent=87 // pred_check_branch
        %2006 = sbr.rel (%p2004) target = $region92
      $region91: #{basic_block_up_forward.4} parent=87 // pred_region
        %s2007 = smul.u32 8, %s27
        %p2008 = scmp.lt.s32.totalorder %s2007, 15
        %s2009 = scalar_select %p2008, %s2007, 15
        %s2010 = smul.addr %s2009, 4
        %s2011 = scalar_lea.vmem %s15, %s2010
      $region92: #{basic_block_up_forward.4} parent=87 // pred_fallthru
        _
    $region88: #{basic_block_up_forward.4} parent=5 // pred_fallthru
      _
  $region6: #{basic_block_up_forward.4} parent=0 // loop_footer
    %s25 = sadd.s32 1, %s21
  $region7: #{basic_block_up_forward.4} parent=0 // loop_footer_branch
    %20 = sbr.rel target = $region3
  $region8: #{basic_block_up_forward.4} parent=0 // loop_exit
    _

</llo_original>
